<compile_context>
chip_gen: v6e
topology: v6e:2x2x1
jax: 0.10.0
libtpu: 0.0.40
codegen_flags: <defaults>
</compile_context>

<pallas_src>
import functools

import jax
import jax.numpy as jnp
from jax import lax
from jax.experimental import pallas as pl
from jax.experimental.pallas import tpu as pltpu


# -----------------------------------------------------------------------------
# Hardware / tiling helpers.
# -----------------------------------------------------------------------------
def _round_up(x, m):
    return ((x + m - 1) // m) * m


def _largest_divisor_leq(n, cap):
    for d in range(min(n, cap), 0, -1):
        if n % d == 0:
            return d
    return 1


def _pick_time_tile(T, cap):
    """Divisor of T for the vocab-projection time tile, preferring multiples of
    8 (sublane-aligned second-minor block dim); falls back to the full dim
    (always a legal block dim)."""
    cap = max(1, min(cap, T))
    for d in range(cap, 0, -1):
        if T % d == 0 and d % 8 == 0:
            return d
    # TODO(synk): a T with no 8-aligned divisor falls back to a full-T block.
    return T


def _pick_lane_tile(dim, cap):
    """Largest 128-aligned divisor of `dim` (pre-padded to 128) that is <= cap."""
    if dim <= cap:
        return dim
    for t in range(cap, 127, -1):
        if dim % t == 0 and t % 128 == 0:
            return t
    return dim


def _num_tensorcores():
    """1 for single-TC parts (v2..v6e), 2 for dual-TC (v7x-style) chips."""
    try:
        kind = jax.devices()[0].device_kind.lower()
    except Exception:
        return 1
    return 2 if ("v7" in kind or "7x" in kind) else 1


def _physical_vmem_bytes():
    try:
        return int(pltpu.get_tpu_info().vmem_capacity_bytes)
    except Exception:
        return 64 * 1024 * 1024          # conservative default (v7x per-core)


@functools.lru_cache(maxsize=None)
def _single_buffer_supported():
    """Probe (compile + run a tiny kernel) whether
    BlockSpec(pipeline_mode=pl.Buffered(1)) works on this jax/libtpu.  Used to
    single-buffer grid-constant weight blocks (double-buffering a constant
    block only doubles its VMEM footprint)."""
    try:
        spec = pl.BlockSpec((8, 128), lambda i: (0, 0),
                            pipeline_mode=pl.Buffered(1))

        def k(x_ref, o_ref):
            o_ref[...] = x_ref[...] + 1.0

        fn = pl.pallas_call(
            k,
            out_shape=jax.ShapeDtypeStruct((8, 128), jnp.float32),
            grid_spec=pltpu.PrefetchScalarGridSpec(
                num_scalar_prefetch=0,
                grid=(2,),
                in_specs=[spec],
                out_specs=pl.BlockSpec((8, 128), lambda i: (0, 0))),
        )
        out = jax.jit(fn)(jnp.zeros((8, 128), jnp.float32))
        return bool(jnp.all(out == 1.0))
    except Exception:
        return False


def _const_spec(shape, single_buffer):
    """BlockSpec for a grid-constant (loop-invariant) 2D input."""
    index_map = lambda b, t: (0,) * len(shape)
    if single_buffer:
        return pl.BlockSpec(shape, index_map, pipeline_mode=pl.Buffered(1))
    return pl.BlockSpec(shape, index_map)


def _recurrent_vmem_bytes(Tt, Bb, E, H, L, abytes, wbytes, w_buffers):
    """Explicit VMEM budget for one grid step of the recurrent kernel."""
    blocks = 2 * Tt * Bb * (E + H) * abytes                 # x in + hidden out (x2 buffers)
    weights = w_buffers * (E + (2 * L - 1) * H) * 4 * H * wbytes
    biases = w_buffers * L * 4 * H * 4
    hn_cn = 2 * 2 * L * Bb * H * 4                          # h_n / c_n out blocks
    scratch = 2 * L * Bb * H * 4 + Tt * Bb * 4 * H * 4      # h/c state + layer-0 gates
    return blocks + weights + biases + hn_cn + scratch


# -----------------------------------------------------------------------------
# Recurrent kernel: grid = (batch_blocks [parallel], time_blocks [arbitrary]).
# -----------------------------------------------------------------------------
def _make_recurrent_kernel(num_layers, hidden_dim, time_block, batch_block):
    L, H, Tt, Bb = num_layers, hidden_dim, time_block, batch_block

    def kernel(*refs):
        n_in = 4 + 3 * (L - 1)
        x_ref, w_ih0_ref, w_hh0_ref, b0_ref = refs[0:4]
        layer_refs = refs[4:n_in]
        hid_ref, hn_ref, cn_ref = refs[n_in:n_in + 3]
        h_s, c_s, g0_s = refs[n_in + 3:n_in + 6]

        t_blk = pl.program_id(1)

        @pl.when(t_blk == 0)
        def _():
            h_s[...] = jnp.zeros_like(h_s)
            c_s[...] = jnp.zeros_like(c_s)

        w_hh0 = w_hh0_ref[...]
        w_dt = w_hh0.dtype

        # Layer-0 input projection: fused into this kernel (no HBM round trip
        # for the (T, B, 4H) gates) but hoisted OUT of the serial loop as one
        # (Tt*Bb, E) @ (E, 4H) MXU matmul.  Staged gates stay f32 in VMEM, so
        # layer-0 keeps f32 accumulation even with bf16 activations/weights.
        E = x_ref.shape[-1]
        x_flat = x_ref[...].reshape(Tt * Bb, E).astype(w_dt)
        g0 = jnp.dot(x_flat, w_ih0_ref[...], preferred_element_type=jnp.float32)
        g0_s[...] = (g0 + b0_ref[...].astype(jnp.float32)).reshape(Tt, Bb, 4 * H)

        # Loop-invariant weights: load once per grid step.  Biases are
        # pre-broadcast ONCE here (JAX does not CSE broadcast_in_dim -- a
        # broadcast inside the unrolled loop would repeat Tt*L times).
        w_ih = [layer_refs[3 * i][...] for i in range(L - 1)]
        w_hh = [layer_refs[3 * i + 1][...] for i in range(L - 1)]
        b_bc = [jnp.broadcast_to(layer_refs[3 * i + 2][...].astype(jnp.float32),
                                 (Bb, 4 * H)) for i in range(L - 1)]

        def gate_math(gates, c_prev):
            # Gate columns pre-ordered [i, f, o | g]: one contiguous sigmoid
            # slice + one tanh slice; all elementwise math and c-state in f32.
            sig = jax.nn.sigmoid(gates[:, :3 * H])
            i_g = sig[:, :H]
            f_g = sig[:, H:2 * H]
            o_g = sig[:, 2 * H:3 * H]
            g_g = jnp.tanh(gates[:, 3 * H:])
            c_new = f_g * c_prev + i_g * g_g
            h_new = o_g * jnp.tanh(c_new)
            return h_new, c_new

        def step(tt, carry):
            # Layer 0: only the recurrent matmul is on the serial path.
            gates = g0_s[tt] + jnp.dot(h_s[0].astype(w_dt), w_hh0,
                                       preferred_element_type=jnp.float32)
            h_new, c_new = gate_math(gates, c_s[0])
            h_s[0] = h_new
            c_s[0] = c_new
            x = h_new
            # Layers >= 1: two dots accumulated into the same f32 gates -- no
            # per-step concatenate copy.
            for l in range(1, L):
                gates = (jnp.dot(x.astype(w_dt), w_ih[l - 1],
                                 preferred_element_type=jnp.float32)
                         + jnp.dot(h_s[l].astype(w_dt), w_hh[l - 1],
                                   preferred_element_type=jnp.float32)
                         + b_bc[l - 1])
                h_new, c_new = gate_math(gates, c_s[l])
                h_s[l] = h_new
                c_s[l] = c_new
                x = h_new
            hid_ref[tt] = x.astype(hid_ref.dtype)
            return carry

        lax.fori_loop(0, Tt, step, 0, unroll=True)

        @pl.when(t_blk == pl.num_programs(1) - 1)
        def _():
            hn_ref[...] = h_s[...]
            cn_ref[...] = c_s[...]

    return kernel


# -----------------------------------------------------------------------------
# Vocab projection kernel: (T, B, H) hidden -> (B, T, V) logits, with the
# time-major -> batch-major re-layout folded into the (MXU-bound) kernel.
# -----------------------------------------------------------------------------
def _vocab_kernel(h_ref, w_ref, b_ref, o_ref):
    tt, Bb, H = h_ref.shape
    w = w_ref[...]
    h = h_ref[...].reshape(tt * Bb, H).astype(w.dtype)      # rows ordered (t, b)
    acc = jnp.dot(h, w, preferred_element_type=jnp.float32)
    acc = (acc + b_ref[...].astype(jnp.float32)).astype(o_ref.dtype)
    # Re-layout (t, b) rows -> (b, t) output block with static strided stores;
    # vst slots are idle under the matmul, so the transpose is effectively free
    # and the logits never take an extra HBM round trip through XLA.
    for t in range(tt):
        o_ref[:, t, :] = acc[t * Bb:(t + 1) * Bb, :]


def _pallas_vocab_projection(hidden_tbh, fc_w_T, fc_b, *, vmem_cap):
    T, Bp, H = hidden_tbh.shape
    Vp = fc_w_T.shape[1]
    abytes = jnp.dtype(hidden_tbh.dtype).itemsize
    wbytes = jnp.dtype(fc_w_T.dtype).itemsize

    # Large tiles: ~1024 matmul rows (tt * Bp) and up to 1024 vocab columns to
    # minimize fc_w re-streaming (the model's dominant HBM read).
    tt = _pick_time_tile(T, min(max(8, 1024 // Bp), 64))
    tn = _pick_lane_tile(Vp, 1024)

    def need(tn_):
        return (2 * tt * Bp * H * abytes          # hidden block (x2 buffers)
                + 2 * H * tn_ * wbytes            # fc_w tile (x2)
                + 2 * tn_ * 4                     # fc_b tile (x2)
                + 2 * Bp * tt * tn_ * 4)          # logits block (x2)

    while tn > 128 and need(tn) > int(0.5 * vmem_cap):
        tn = _pick_lane_tile(Vp, tn - 128)

    vmem_limit = int(min(max(need(tn) * 1.5, 24 * 2**20), 0.9 * vmem_cap))
    grid = (T // tt, Vp // tn)

    return pl.pallas_call(
        _vocab_kernel,
        out_shape=jax.ShapeDtypeStruct((Bp, T, Vp), jnp.float32),
        grid_spec=pltpu.PrefetchScalarGridSpec(
            num_scalar_prefetch=0,
            grid=grid,
            in_specs=[
                pl.BlockSpec((tt, Bp, H), lambda i, j: (i, 0, 0)),
                pl.BlockSpec((H, tn), lambda i, j: (0, j)),
                pl.BlockSpec((1, tn), lambda i, j: (0, j)),
            ],
            out_specs=pl.BlockSpec((Bp, tt, tn), lambda i, j: (0, i, j)),
        ),
        compiler_params=pltpu.CompilerParams(
            dimension_semantics=("parallel", "parallel"),
            vmem_limit_bytes=vmem_limit),
    )(hidden_tbh, fc_w_T, fc_b)


# -----------------------------------------------------------------------------
# Forward wrappers.
# -----------------------------------------------------------------------------
@functools.partial(
    jax.jit,
    static_argnames=("num_layers", "time_block", "batch_block", "batch_pad",
                     "single_buffer", "vmem_limit", "vmem_cap"))
def _lstm_lm_forward_impl(tokens, prep, *, num_layers, time_block, batch_block,
                          batch_pad, single_buffer, vmem_limit, vmem_cap):
    B, T = tokens.shape
    L = num_layers
    V, E = prep["emb"].shape
    H = prep["w_hh0_T"].shape[0]
    cdt = prep["emb"].dtype
    Tt, Bb, B_pad = time_block, batch_block, batch_pad

    tokens_p = jnp.pad(tokens, ((0, B_pad - B), (0, 0)))

    # Embedding gather directly in time-major order: transpose the tiny int32
    # token matrix, not the (B, T, E) activations.
    x_tbe = jnp.take(prep["emb"], tokens_p.T, axis=0)          # (T, B_pad, E)

    flat_layer_args = []
    layer_in_specs = []
    for l in range(1, L):
        flat_layer_args += [prep[f"w_ih{l}_T"], prep[f"w_hh{l}_T"], prep[f"b_{l}"]]
        layer_in_specs += [_const_spec((H, 4 * H), single_buffer),
                           _const_spec((H, 4 * H), single_buffer),
                           _const_spec((1, 4 * H), single_buffer)]

    nb, nt = B_pad // Bb, T // Tt
    grid_spec = pltpu.PrefetchScalarGridSpec(
        num_scalar_prefetch=0,
        grid=(nb, nt),
        in_specs=[
            pl.BlockSpec((Tt, Bb, E), lambda b, t: (t, b, 0)),   # embeddings
            _const_spec((E, 4 * H), single_buffer),              # W_ih0^T
            _const_spec((H, 4 * H), single_buffer),              # W_hh0^T
            _const_spec((1, 4 * H), single_buffer),              # b0
        ] + layer_in_specs,
        out_specs=[
            pl.BlockSpec((Tt, Bb, H), lambda b, t: (t, b, 0)),   # hidden (time-major)
            pl.BlockSpec((L, Bb, H), lambda b, t: (0, b, 0)),    # h_n
            pl.BlockSpec((L, Bb, H), lambda b, t: (0, b, 0)),    # c_n
        ],
        scratch_shapes=[
            pltpu.VMEM((L, Bb, H), jnp.float32),                 # h state (f32)
            pltpu.VMEM((L, Bb, H), jnp.float32),                 # c state (f32)
            pltpu.VMEM((Tt, Bb, 4 * H), jnp.float32),            # layer-0 gates (f32)
        ],
    )

    hidden_tbh, h_n, c_n = pl.pallas_call(
        _make_recurrent_kernel(L, H, Tt, Bb),
        out_shape=(
            jax.ShapeDtypeStruct((T, B_pad, H), cdt),
            jax.ShapeDtypeStruct((L, B_pad, H), jnp.float32),
            jax.ShapeDtypeStruct((L, B_pad, H), jnp.float32),
        ),
        grid_spec=grid_spec,
        compiler_params=pltpu.CompilerParams(
            # batch-block axis is independent -> split across v7x TensorCores.
            dimension_semantics=("parallel", "arbitrary"),
            vmem_limit_bytes=vmem_limit),
    )(x_tbe, prep["w_ih0_T"], prep["w_hh0_T"], prep["b0"], *flat_layer_args)

    # Vocab projection with the (T,B)->(B,T) re-layout folded into the kernel.
    logits_full = _pallas_vocab_projection(hidden_tbh, prep["fc_w_T"],
                                           prep["fc_b"], vmem_cap=vmem_cap)
    logits = logits_full[:B, :, :V]                              # strip padding
    return logits, (h_n[:, :B], c_n[:, :B])


def lstm_lm_forward(tokens, prep, *, num_layers, time_block=None, batch_block=None):
    """LSTMLM forward: returns (logits (B,T,V), (h_n, c_n) each (L,B,H))."""
    B, T = tokens.shape
    L = num_layers
    V, E = prep["emb"].shape
    H = prep["w_hh0_T"].shape[0]
    abytes = jnp.dtype(prep["emb"].dtype).itemsize
    wbytes = jnp.dtype(prep["w_hh0_T"].dtype).itemsize

    ncores = _num_tensorcores()
    vmem_cap = _physical_vmem_bytes()
    single_buf = _single_buffer_supported()

    # Batch padding: 16 rows for packed (sub-32-bit) activations, 8 for f32.
    pad_mult = 8 if abytes >= 4 else 16
    B_pad = _round_up(B, pad_mult)

    # Batch block: one block per TensorCore on dual-TC (v7x) chips; the whole
    # padded batch on single-TC chips (splitting there only shrinks matmul rows
    # and multiplies grid overhead).
    if batch_block is None:
        if ncores > 1 and B_pad % (ncores * pad_mult) == 0:
            Bb = B_pad // ncores
        else:
            Bb = B_pad
    else:
        Bb = batch_block
    assert B_pad % Bb == 0 and Bb % 8 == 0

    # Time block: 8 (64 MiB dual-TC parts) .. 16 timesteps per grid step is
    # enough to amortize the ~0.35us/step overhead while keeping the unrolled
    # body and the x/hidden VMEM blocks small; shrink further if the explicit
    # VMEM budget for this config does not fit.
    wbuf = 1 if single_buf else 2
    tt_cap = 8 if ncores > 1 else 16
    if time_block is None:
        Tt = _largest_divisor_leq(T, tt_cap)
        while Tt > 1 and _recurrent_vmem_bytes(
                Tt, Bb, E, H, L, abytes, wbytes, wbuf) > int(0.55 * vmem_cap):
            Tt = _largest_divisor_leq(T, Tt - 1)
    else:
        Tt = time_block
    assert T % Tt == 0, "time_block must divide the sequence length"

    need = _recurrent_vmem_bytes(Tt, Bb, E, H, L, abytes, wbytes, wbuf)
    vmem_limit = int(min(max(need * 1.5, 32 * 2**20), 0.9 * vmem_cap))

    return _lstm_lm_forward_impl(
        tokens, prep, num_layers=L, time_block=Tt, batch_block=Bb,
        batch_pad=B_pad, single_buffer=single_buf,
        vmem_limit=vmem_limit, vmem_cap=vmem_cap)


# -----------------------------------------------------------------------------
# Parameters: raw PyTorch-convention tensors + kernel-layout preparation.
# -----------------------------------------------------------------------------
def init_params(key, vocab_size, embed_dim, hidden_dim, num_layers):
    """PyTorch-convention parameters (gate row order i, f, g, o)."""
    keys = iter(jax.random.split(key, 1 + 4 * num_layers + 2))
    p = {"emb": 0.1 * jax.random.normal(next(keys), (vocab_size, embed_dim), jnp.float32)}
    in_dim = embed_dim
    for l in range(num_layers):
        p[f"w_ih_{l}"] = 0.1 * jax.random.normal(next(keys), (4 * hidden_dim, in_dim), jnp.float32)
        p[f"w_hh_{l}"] = 0.1 * jax.random.normal(next(keys), (4 * hidden_dim, hidden_dim), jnp.float32)
        p[f"b_ih_{l}"] = 0.1 * jax.random.normal(next(keys), (4 * hidden_dim,), jnp.float32)
        p[f"b_hh_{l}"] = 0.1 * jax.random.normal(next(keys), (4 * hidden_dim,), jnp.float32)
        in_dim = hidden_dim
    p["fc_w"] = 0.1 * jax.random.normal(next(keys), (vocab_size, hidden_dim), jnp.float32)
    p["fc_b"] = 0.1 * jax.random.normal(next(keys), (vocab_size,), jnp.float32)
    return p


def prepare_params(params, num_layers, compute_dtype=jnp.float32,
                   weight_dtype=jnp.bfloat16):
    """Transpose / gate-reorder / pad weights into the kernel layout.

    weight_dtype defaults to bf16 (MXU-rate matmuls, half the weight VMEM/HBM
    bytes); matmul accumulation, biases, gate math and the c/h state stay f32.
    """
    H = params["w_hh_0"].shape[1]
    V = params["fc_w"].shape[0]

    def reorder(w):  # PyTorch gate rows (i, f, g, o) -> [i, f, o | g]
        i, f, g, o = jnp.split(w, 4, axis=0)
        return jnp.concatenate([i, f, o, g], axis=0)

    prep = {"emb": params["emb"].astype(compute_dtype)}

    prep["w_ih0_T"] = reorder(params["w_ih_0"]).T.astype(weight_dtype)    # (E, 4H)
    prep["w_hh0_T"] = reorder(params["w_hh_0"]).T.astype(weight_dtype)    # (H, 4H)
    prep["b0"] = reorder(params["b_ih_0"] + params["b_hh_0"]
                         ).reshape(1, 4 * H).astype(jnp.float32)

    for l in range(1, num_layers):
        prep[f"w_ih{l}_T"] = reorder(params[f"w_ih_{l}"]).T.astype(weight_dtype)
        prep[f"w_hh{l}_T"] = reorder(params[f"w_hh_{l}"]).T.astype(weight_dtype)
        prep[f"b_{l}"] = reorder(params[f"b_ih_{l}"] + params[f"b_hh_{l}"]
                                 ).reshape(1, 4 * H).astype(jnp.float32)

    # fc: pad the vocab axis to a lane multiple so vocab tiles are 128-aligned;
    # padded columns are sliced off after the projection.
    V_pad = _round_up(V, 128)
    fc_w_T = params["fc_w"].T.astype(weight_dtype)                        # (H, V)
    fc_b = params["fc_b"].reshape(1, V).astype(jnp.float32)
    if V_pad != V:
        fc_w_T = jnp.pad(fc_w_T, ((0, 0), (0, V_pad - V)))
        fc_b = jnp.pad(fc_b, ((0, 0), (0, V_pad - V)))
    prep["fc_w_T"] = fc_w_T
    prep["fc_b"] = fc_b
    return prep


# -----------------------------------------------------------------------------
# Pure-JAX reference (PyTorch LSTM semantics) for correctness checking only.
# -----------------------------------------------------------------------------
def lstm_lm_reference(tokens, params, num_layers):
    B, T = tokens.shape
    H = params["w_hh_0"].shape[1]
    x = jnp.take(params["emb"], tokens, axis=0)                  # (B, T, E)
    h = [jnp.zeros((B, H), jnp.float32) for _ in range(num_layers)]
    c = [jnp.zeros((B, H), jnp.float32) for _ in range(num_layers)]
    outs = []
    for t in range(T):
        inp = x[:, t]
        for l in range(num_layers):
            gates = (inp @ params[f"w_ih_{l}"].T + params[f"b_ih_{l}"]
                     + h[l] @ params[f"w_hh_{l}"].T + params[f"b_hh_{l}"])
            i_g = jax.nn.sigmoid(gates[:, 0 * H:1 * H])
            f_g = jax.nn.sigmoid(gates[:, 1 * H:2 * H])
            g_g = jnp.tanh(gates[:, 2 * H:3 * H])
            o_g = jax.nn.sigmoid(gates[:, 3 * H:4 * H])
            c[l] = f_g * c[l] + i_g * g_g
            h[l] = o_g * jnp.tanh(c[l])
            inp = h[l]
        outs.append(inp @ params["fc_w"].T + params["fc_b"])
    logits = jnp.stack(outs, axis=1)                             # (B, T, V)
    return logits, (jnp.stack(h, 0), jnp.stack(c, 0))


# -----------------------------------------------------------------------------
# Deterministic test harness.
# -----------------------------------------------------------------------------
if __name__ == "__main__":
    def run_case(case_id, *, batch, seq, vocab, embed, hidden, layers,
                 compute_dtype, weight_dtype, time_block, batch_block,
                 atol, rtol):
        k = jax.random.fold_in(jax.random.PRNGKey(0), case_id)
        pkey, tkey = jax.random.split(k)
        params = init_params(pkey, vocab, embed, hidden, layers)
        tokens = jax.random.randint(tkey, (batch, seq), 0, vocab, dtype=jnp.int32)

        prep = prepare_params(params, layers, compute_dtype, weight_dtype)
        logits, (h_n, c_n) = lstm_lm_forward(
            tokens, prep, num_layers=layers,
            time_block=time_block, batch_block=batch_block)
        jax.block_until_ready((logits, h_n, c_n))

        ref_logits, (ref_h, ref_c) = lstm_lm_reference(tokens, params, layers)
        assert logits.shape == (batch, seq, vocab)
        assert h_n.shape == (layers, batch, hidden)
        assert c_n.shape == (layers, batch, hidden)
        err = float(jnp.max(jnp.abs(logits - ref_logits)))
        assert jnp.allclose(logits, ref_logits, atol=atol, rtol=rtol), \
            f"case {case_id}: logits mismatch (max abs err {err})"
        assert jnp.allclose(h_n, ref_h, atol=atol, rtol=rtol), \
            f"case {case_id}: h_n mismatch"
        assert jnp.allclose(c_n, ref_c, atol=atol, rtol=rtol), \
            f"case {case_id}: c_n mismatch"

    # f32 activations + f32 weights: tight reference check, 2 time blocks.
    run_case(0, batch=2, seq=8, vocab=64, embed=32, hidden=32, layers=2,
             compute_dtype=jnp.float32, weight_dtype=jnp.float32,
             time_block=4, batch_block=None, atol=1e-3, rtol=1e-3)
    # f32 activations + (default) bf16 weights, ragged batch 10 -> padded 16:
    # 2 batch blocks ("parallel" axis) x 4 time blocks.
    run_case(1, batch=10, seq=16, vocab=64, embed=32, hidden=32, layers=2,
             compute_dtype=jnp.float32, weight_dtype=jnp.bfloat16,
             time_block=4, batch_block=8, atol=5e-2, rtol=5e-2)
    # bf16 activations + bf16 weights (f32 accumulation / gate math / state).
    run_case(2, batch=2, seq=8, vocab=64, embed=32, hidden=32, layers=2,
             compute_dtype=jnp.bfloat16, weight_dtype=jnp.bfloat16,
             time_block=None, batch_block=None, atol=1e-1, rtol=1e-1)

    print("KERNEL_OK")
</pallas_src>

<mosaic_0001>
module attributes {stable_mosaic.version = 11 : i64} {
  func.func @k(%arg0: i32, %arg1: memref<8x128xf32, #tpu.memory_space<vmem>>, %arg2: memref<8x128xf32, #tpu.memory_space<vmem>>) attributes {dimension_semantics = [#tpu.dimension_semantics<arbitrary>], iteration_bounds = array<i64: 2>, scalar_prefetch = 0 : i64, scratch_operands = 0 : i64, tpu.core_type = #tpu.core_type<tc>, window_params = [{pipeline_mode = #tpu.pipeline_mode<synchronous>, transform_indices = @transform_0, window_bounds = array<i64: 8, 128>}, {pipeline_mode = #tpu.pipeline_mode<synchronous>, transform_indices = @transform_1, window_bounds = array<i64: 8, 128>}]} {
    %c0 = arith.constant 0 : index
    %c0_0 = arith.constant 0 : index
    %0 = vector.load %arg1[%c0, %c0_0] : memref<8x128xf32, #tpu.memory_space<vmem>>, vector<8x128xf32>
    %cst = arith.constant 1.000000e+00 : f32
    %1 = vector.broadcast %cst : f32 to vector<8x128xf32>
    %2 = arith.addf %0, %1 : vector<8x128xf32>
    %c0_1 = arith.constant 0 : index
    %c0_2 = arith.constant 0 : index
    %3 = vector.load %arg2[%c0_1, %c0_2] : memref<8x128xf32, #tpu.memory_space<vmem>>, vector<8x128xf32>
    tpu.vector_store %arg2[%c0_1, %c0_2], %2 {strides = array<i32>} : memref<8x128xf32, #tpu.memory_space<vmem>>, vector<8x128xf32>,
    return
  }
  func.func @transform_0(%arg0: i32) -> (i32, i32) {
    %c0_i32 = arith.constant 0 : i32
    %c0_i32_0 = arith.constant 0 : i32
    %c0_i32_1 = arith.constant 0 : i32
    return %c0_i32, %c0_i32_0 : i32, i32
  }
  func.func @transform_1(%arg0: i32) -> (i32, i32) {
    %c0_i32 = arith.constant 0 : i32
    %c0_i32_0 = arith.constant 0 : i32
    %c0_i32_1 = arith.constant 0 : i32
    return %c0_i32, %c0_i32_0 : i32, i32
  }
}

module attributes {stable_mosaic.version = 11 : i64} {
  func.func @_vocab_kernel(%arg0: i32, %arg1: i32, %arg2: memref<8x8x32xf32, #tpu.memory_space<vmem>>, %arg3: memref<32x128xf32, #tpu.memory_space<vmem>>, %arg4: memref<1x128xf32, #tpu.memory_space<vmem>>, %arg5: memref<8x8x128xf32, #tpu.memory_space<vmem>>) attributes {dimension_semantics = [#tpu.dimension_semantics<parallel>, #tpu.dimension_semantics<parallel>], iteration_bounds = array<i64: 1, 1>, scalar_prefetch = 0 : i64, scratch_operands = 0 : i64, tpu.core_type = #tpu.core_type<tc>, window_params = [{transform_indices = @transform_0, window_bounds = array<i64: 8, 8, 32>}, {transform_indices = @transform_1, window_bounds = array<i64: 32, 128>}, {transform_indices = @transform_2, window_bounds = array<i64: 1, 128>}, {transform_indices = @transform_3, window_bounds = array<i64: 8, 8, 128>}]} {
    %c0 = arith.constant 0 : index
    %c0_0 = arith.constant 0 : index
    %0 = vector.load %arg3[%c0, %c0_0] : memref<32x128xf32, #tpu.memory_space<vmem>>, vector<32x128xf32>
    %c0_1 = arith.constant 0 : index
    %c0_2 = arith.constant 0 : index
    %c0_3 = arith.constant 0 : index
    %1 = vector.load %arg2[%c0_1, %c0_2, %c0_3] : memref<8x8x32xf32, #tpu.memory_space<vmem>>, vector<8x8x32xf32>
    %2 = vector.shape_cast %1 : vector<8x8x32xf32> to vector<64x32xf32>
    %cst = arith.constant dense<0.000000e+00> : vector<64x128xf32>
    %3 = tpu.matmul %2, %0, %cst {dimension_numbers = #tpu.dot_dimension_numbers<[1], [0], [0], [1], [0, 0, 1, 1], [], []>} : vector<64x32xf32>, vector<32x128xf32>, vector<64x128xf32> -> vector<64x128xf32>
    %c0_4 = arith.constant 0 : index
    %c0_5 = arith.constant 0 : index
    %4 = vector.load %arg4[%c0_4, %c0_5] : memref<1x128xf32, #tpu.memory_space<vmem>>, vector<1x128xf32>
    %5 = vector.broadcast %4 : vector<1x128xf32> to vector<64x128xf32>
    %6 = arith.addf %3, %5 : vector<64x128xf32>
    %7 = vector.extract_strided_slice %6 {offsets = [0, 0], sizes = [8, 128], strides = [1, 1]} : vector<64x128xf32> to vector<8x128xf32>
    %c0_6 = arith.constant 0 : index
    %c0_7 = arith.constant 0 : index
    %c0_8 = arith.constant 0 : index
    %8 = vector.load %arg5[%c0_6, %c0_7, %c0_8] : memref<8x8x128xf32, #tpu.memory_space<vmem>>, vector<8x1x128xf32>
    %9 = vector.shape_cast %8 : vector<8x1x128xf32> to vector<8x128xf32>
    %10 = vector.shape_cast %7 : vector<8x128xf32> to vector<8x1x128xf32>
    tpu.vector_store %arg5[%c0_6, %c0_7, %c0_8], %10 {strides = array<i32>} : memref<8x8x128xf32, #tpu.memory_space<vmem>>, vector<8x1x128xf32>,
    %11 = vector.extract_strided_slice %6 {offsets = [8, 0], sizes = [8, 128], strides = [1, 1]} : vector<64x128xf32> to vector<8x128xf32>
    %c0_9 = arith.constant 0 : index
    %c1 = arith.constant 1 : index
    %c0_10 = arith.constant 0 : index
    %12 = vector.load %arg5[%c0_9, %c1, %c0_10] : memref<8x8x128xf32, #tpu.memory_space<vmem>>, vector<8x1x128xf32>
    %13 = vector.shape_cast %12 : vector<8x1x128xf32> to vector<8x128xf32>
    %14 = vector.shape_cast %11 : vector<8x128xf32> to vector<8x1x128xf32>
    tpu.vector_store %arg5[%c0_9, %c1, %c0_10], %14 {strides = array<i32>} : memref<8x8x128xf32, #tpu.memory_space<vmem>>, vector<8x1x128xf32>,
    %15 = vector.extract_strided_slice %6 {offsets = [16, 0], sizes = [8, 128], strides = [1, 1]} : vector<64x128xf32> to vector<8x128xf32>
    %c0_11 = arith.constant 0 : index
    %c2 = arith.constant 2 : index
    %c0_12 = arith.constant 0 : index
    %16 = vector.load %arg5[%c0_11, %c2, %c0_12] : memref<8x8x128xf32, #tpu.memory_space<vmem>>, vector<8x1x128xf32>
    %17 = vector.shape_cast %16 : vector<8x1x128xf32> to vector<8x128xf32>
    %18 = vector.shape_cast %15 : vector<8x128xf32> to vector<8x1x128xf32>
    tpu.vector_store %arg5[%c0_11, %c2, %c0_12], %18 {strides = array<i32>} : memref<8x8x128xf32, #tpu.memory_space<vmem>>, vector<8x1x128xf32>,
    %19 = vector.extract_strided_slice %6 {offsets = [24, 0], sizes = [8, 128], strides = [1, 1]} : vector<64x128xf32> to vector<8x128xf32>
    %c0_13 = arith.constant 0 : index
    %c3 = arith.constant 3 : index
    %c0_14 = arith.constant 0 : index
    %20 = vector.load %arg5[%c0_13, %c3, %c0_14] : memref<8x8x128xf32, #tpu.memory_space<vmem>>, vector<8x1x128xf32>
    %21 = vector.shape_cast %20 : vector<8x1x128xf32> to vector<8x128xf32>
    %22 = vector.shape_cast %19 : vector<8x128xf32> to vector<8x1x128xf32>
    tpu.vector_store %arg5[%c0_13, %c3, %c0_14], %22 {strides = array<i32>} : memref<8x8x128xf32, #tpu.memory_space<vmem>>, vector<8x1x128xf32>,
    %23 = vector.extract_strided_slice %6 {offsets = [32, 0], sizes = [8, 128], strides = [1, 1]} : vector<64x128xf32> to vector<8x128xf32>
    %c0_15 = arith.constant 0 : index
    %c4 = arith.constant 4 : index
    %c0_16 = arith.constant 0 : index
    %24 = vector.load %arg5[%c0_15, %c4, %c0_16] : memref<8x8x128xf32, #tpu.memory_space<vmem>>, vector<8x1x128xf32>
    %25 = vector.shape_cast %24 : vector<8x1x128xf32> to vector<8x128xf32>
    %26 = vector.shape_cast %23 : vector<8x128xf32> to vector<8x1x128xf32>
    tpu.vector_store %arg5[%c0_15, %c4, %c0_16], %26 {strides = array<i32>} : memref<8x8x128xf32, #tpu.memory_space<vmem>>, vector<8x1x128xf32>,
    %27 = vector.extract_strided_slice %6 {offsets = [40, 0], sizes = [8, 128], strides = [1, 1]} : vector<64x128xf32> to vector<8x128xf32>
    %c0_17 = arith.constant 0 : index
    %c5 = arith.constant 5 : index
    %c0_18 = arith.constant 0 : index
    %28 = vector.load %arg5[%c0_17, %c5, %c0_18] : memref<8x8x128xf32, #tpu.memory_space<vmem>>, vector<8x1x128xf32>
    %29 = vector.shape_cast %28 : vector<8x1x128xf32> to vector<8x128xf32>
    %30 = vector.shape_cast %27 : vector<8x128xf32> to vector<8x1x128xf32>
    tpu.vector_store %arg5[%c0_17, %c5, %c0_18], %30 {strides = array<i32>} : memref<8x8x128xf32, #tpu.memory_space<vmem>>, vector<8x1x128xf32>,
    %31 = vector.extract_strided_slice %6 {offsets = [48, 0], sizes = [8, 128], strides = [1, 1]} : vector<64x128xf32> to vector<8x128xf32>
    %c0_19 = arith.constant 0 : index
    %c6 = arith.constant 6 : index
    %c0_20 = arith.constant 0 : index
    %32 = vector.load %arg5[%c0_19, %c6, %c0_20] : memref<8x8x128xf32, #tpu.memory_space<vmem>>, vector<8x1x128xf32>
    %33 = vector.shape_cast %32 : vector<8x1x128xf32> to vector<8x128xf32>
    %34 = vector.shape_cast %31 : vector<8x128xf32> to vector<8x1x128xf32>
    tpu.vector_store %arg5[%c0_19, %c6, %c0_20], %34 {strides = array<i32>} : memref<8x8x128xf32, #tpu.memory_space<vmem>>, vector<8x1x128xf32>,
    %35 = vector.extract_strided_slice %6 {offsets = [56, 0], sizes = [8, 128], strides = [1, 1]} : vector<64x128xf32> to vector<8x128xf32>
    %c0_21 = arith.constant 0 : index
    %c7 = arith.constant 7 : index
    %c0_22 = arith.constant 0 : index
    %36 = vector.load %arg5[%c0_21, %c7, %c0_22] : memref<8x8x128xf32, #tpu.memory_space<vmem>>, vector<8x1x128xf32>
    %37 = vector.shape_cast %36 : vector<8x1x128xf32> to vector<8x128xf32>
    %38 = vector.shape_cast %35 : vector<8x128xf32> to vector<8x1x128xf32>
    tpu.vector_store %arg5[%c0_21, %c7, %c0_22], %38 {strides = array<i32>} : memref<8x8x128xf32, #tpu.memory_space<vmem>>, vector<8x1x128xf32>,
    return
  }
  func.func @transform_0(%arg0: i32, %arg1: i32) -> (i32, i32, i32) {
    %c0_i32 = arith.constant 0 : i32
    %c0_i32_0 = arith.constant 0 : i32
    %c0_i32_1 = arith.constant 0 : i32
    return %arg0, %c0_i32, %c0_i32_0 : i32, i32, i32
  }
  func.func @transform_1(%arg0: i32, %arg1: i32) -> (i32, i32) {
    %c0_i32 = arith.constant 0 : i32
    %c0_i32_0 = arith.constant 0 : i32
    return %c0_i32, %arg1 : i32, i32
  }
  func.func @transform_2(%arg0: i32, %arg1: i32) -> (i32, i32) {
    %c0_i32 = arith.constant 0 : i32
    %c0_i32_0 = arith.constant 0 : i32
    return %c0_i32, %arg1 : i32, i32
  }
  func.func @transform_3(%arg0: i32, %arg1: i32) -> (i32, i32, i32) {
    %c0_i32 = arith.constant 0 : i32
    %c0_i32_0 = arith.constant 0 : i32
    return %c0_i32, %arg0, %arg1 : i32, i32, i32
  }
}

module attributes {stable_mosaic.version = 11 : i64} {
  func.func @kernel(%arg0: i32, %arg1: i32, %arg2: memref<4x8x32xf32, #tpu.memory_space<vmem>>, %arg3: memref<32x128xf32, #tpu.memory_space<vmem>>, %arg4: memref<32x128xf32, #tpu.memory_space<vmem>>, %arg5: memref<1x128xf32, #tpu.memory_space<vmem>>, %arg6: memref<32x128xf32, #tpu.memory_space<vmem>>, %arg7: memref<32x128xf32, #tpu.memory_space<vmem>>, %arg8: memref<1x128xf32, #tpu.memory_space<vmem>>, %arg9: memref<4x8x32xf32, #tpu.memory_space<vmem>>, %arg10: memref<2x8x32xf32, #tpu.memory_space<vmem>>, %arg11: memref<2x8x32xf32, #tpu.memory_space<vmem>>, %arg12: memref<2x8x32xf32, #tpu.memory_space<vmem>>, %arg13: memref<2x8x32xf32, #tpu.memory_space<vmem>>, %arg14: memref<4x8x128xf32, #tpu.memory_space<vmem>>) attributes {dimension_semantics = [#tpu.dimension_semantics<parallel>, #tpu.dimension_semantics<arbitrary>], iteration_bounds = array<i64: 1, 2>, scalar_prefetch = 0 : i64, scratch_operands = 3 : i64, tpu.core_type = #tpu.core_type<tc>, window_params = [{transform_indices = @transform_0, window_bounds = array<i64: 4, 8, 32>}, {pipeline_mode = #tpu.pipeline_mode<synchronous>, transform_indices = @transform_1, window_bounds = array<i64: 32, 128>}, {pipeline_mode = #tpu.pipeline_mode<synchronous>, transform_indices = @transform_2, window_bounds = array<i64: 32, 128>}, {pipeline_mode = #tpu.pipeline_mode<synchronous>, transform_indices = @transform_3, window_bounds = array<i64: 1, 128>}, {pipeline_mode = #tpu.pipeline_mode<synchronous>, transform_indices = @transform_4, window_bounds = array<i64: 32, 128>}, {pipeline_mode = #tpu.pipeline_mode<synchronous>, transform_indices = @transform_5, window_bounds = array<i64: 32, 128>}, {pipeline_mode = #tpu.pipeline_mode<synchronous>, transform_indices = @transform_6, window_bounds = array<i64: 1, 128>}, {transform_indices = @transform_7, window_bounds = array<i64: 4, 8, 32>}, {transform_indices = @transform_8, window_bounds = array<i64: 2, 8, 32>}, {transform_indices = @transform_9, window_bounds = array<i64: 2, 8, 32>}]} {
    %c0_i32 = arith.constant 0 : i32
    %0 = arith.cmpi eq, %arg1, %c0_i32 : i32
    %1 = arith.extui %0 : i1 to i32
    %c0_i32_0 = arith.constant 0 : i32
    %2 = arith.cmpi ne, %1, %c0_i32_0 : i32
    scf.if %2 {
      %cst_152 = arith.constant 0.000000e+00 : f32
      %281 = vector.broadcast %cst_152 : f32 to vector<2x8x32xf32>
      %c0_153 = arith.constant 0 : index
      %c0_154 = arith.constant 0 : index
      %c0_155 = arith.constant 0 : index
      %282 = vector.load %arg12[%c0_153, %c0_154, %c0_155] : memref<2x8x32xf32, #tpu.memory_space<vmem>>, vector<2x8x32xf32>
      tpu.vector_store %arg12[%c0_153, %c0_154, %c0_155], %281 {strides = array<i32>} : memref<2x8x32xf32, #tpu.memory_space<vmem>>, vector<2x8x32xf32>,
      %cst_156 = arith.constant 0.000000e+00 : f32
      %283 = vector.broadcast %cst_156 : f32 to vector<2x8x32xf32>
      %c0_157 = arith.constant 0 : index
      %c0_158 = arith.constant 0 : index
      %c0_159 = arith.constant 0 : index
      %284 = vector.load %arg13[%c0_157, %c0_158, %c0_159] : memref<2x8x32xf32, #tpu.memory_space<vmem>>, vector<2x8x32xf32>
      tpu.vector_store %arg13[%c0_157, %c0_158, %c0_159], %283 {strides = array<i32>} : memref<2x8x32xf32, #tpu.memory_space<vmem>>, vector<2x8x32xf32>,
    } else {
    }
    %c0 = arith.constant 0 : index
    %c0_1 = arith.constant 0 : index
    %3 = vector.load %arg4[%c0, %c0_1] : memref<32x128xf32, #tpu.memory_space<vmem>>, vector<32x128xf32>
    %c0_2 = arith.constant 0 : index
    %c0_3 = arith.constant 0 : index
    %c0_4 = arith.constant 0 : index
    %4 = vector.load %arg2[%c0_2, %c0_3, %c0_4] : memref<4x8x32xf32, #tpu.memory_space<vmem>>, vector<4x8x32xf32>
    %5 = vector.shape_cast %4 : vector<4x8x32xf32> to vector<32x32xf32>
    %c0_5 = arith.constant 0 : index
    %c0_6 = arith.constant 0 : index
    %6 = vector.load %arg3[%c0_5, %c0_6] : memref<32x128xf32, #tpu.memory_space<vmem>>, vector<32x128xf32>
    %cst = arith.constant dense<0.000000e+00> : vector<32x128xf32>
    %7 = tpu.matmul %5, %6, %cst {dimension_numbers = #tpu.dot_dimension_numbers<[1], [0], [0], [1], [0, 0, 1, 1], [], []>} : vector<32x32xf32>, vector<32x128xf32>, vector<32x128xf32> -> vector<32x128xf32>
    %c0_7 = arith.constant 0 : index
    %c0_8 = arith.constant 0 : index
    %8 = vector.load %arg5[%c0_7, %c0_8] : memref<1x128xf32, #tpu.memory_space<vmem>>, vector<1x128xf32>
    %9 = vector.broadcast %8 : vector<1x128xf32> to vector<32x128xf32>
    %10 = arith.addf %7, %9 : vector<32x128xf32>
    %11 = vector.shape_cast %10 : vector<32x128xf32> to vector<4x8x128xf32>
    %c0_9 = arith.constant 0 : index
    %c0_10 = arith.constant 0 : index
    %c0_11 = arith.constant 0 : index
    %12 = vector.load %arg14[%c0_9, %c0_10, %c0_11] : memref<4x8x128xf32, #tpu.memory_space<vmem>>, vector<4x8x128xf32>
    tpu.vector_store %arg14[%c0_9, %c0_10, %c0_11], %11 {strides = array<i32>} : memref<4x8x128xf32, #tpu.memory_space<vmem>>, vector<4x8x128xf32>,
    %c0_12 = arith.constant 0 : index
    %c0_13 = arith.constant 0 : index
    %13 = vector.load %arg6[%c0_12, %c0_13] : memref<32x128xf32, #tpu.memory_space<vmem>>, vector<32x128xf32>
    %c0_14 = arith.constant 0 : index
    %c0_15 = arith.constant 0 : index
    %14 = vector.load %arg7[%c0_14, %c0_15] : memref<32x128xf32, #tpu.memory_space<vmem>>, vector<32x128xf32>
    %c0_16 = arith.constant 0 : index
    %c0_17 = arith.constant 0 : index
    %15 = vector.load %arg8[%c0_16, %c0_17] : memref<1x128xf32, #tpu.memory_space<vmem>>, vector<1x128xf32>
    %16 = vector.shape_cast %15 : vector<1x128xf32> to vector<1x128xf32>
    %17 = vector.broadcast %16 : vector<1x128xf32> to vector<8x128xf32>
    %c0_i32_18 = arith.constant 0 : i32
    %18 = arith.index_cast %c0_i32_18 : i32 to index
    %c0_19 = arith.constant 0 : index
    %c0_20 = arith.constant 0 : index
    %19 = vector.load %arg14[%18, %c0_19, %c0_20] : memref<4x8x128xf32, #tpu.memory_space<vmem>>, vector<1x8x128xf32>
    %20 = vector.shape_cast %19 : vector<1x8x128xf32> to vector<8x128xf32>
    %c0_21 = arith.constant 0 : index
    %c0_22 = arith.constant 0 : index
    %c0_23 = arith.constant 0 : index
    %21 = vector.load %arg12[%c0_21, %c0_22, %c0_23] : memref<2x8x32xf32, #tpu.memory_space<vmem>>, vector<1x8x32xf32>
    %22 = vector.shape_cast %21 : vector<1x8x32xf32> to vector<8x32xf32>
    %cst_24 = arith.constant dense<0.000000e+00> : vector<8x128xf32>
    %23 = tpu.matmul %22, %3, %cst_24 {dimension_numbers = #tpu.dot_dimension_numbers<[1], [0], [0], [1], [0, 0, 1, 1], [], []>} : vector<8x32xf32>, vector<32x128xf32>, vector<8x128xf32> -> vector<8x128xf32>
    %24 = arith.addf %20, %23 : vector<8x128xf32>
    %c0_25 = arith.constant 0 : index
    %c0_26 = arith.constant 0 : index
    %c0_27 = arith.constant 0 : index
    %25 = vector.load %arg13[%c0_25, %c0_26, %c0_27] : memref<2x8x32xf32, #tpu.memory_space<vmem>>, vector<1x8x32xf32>
    %26 = vector.shape_cast %25 : vector<1x8x32xf32> to vector<8x32xf32>
    %27 = vector.extract_strided_slice %24 {offsets = [0, 0], sizes = [8, 96], strides = [1, 1]} : vector<8x128xf32> to vector<8x96xf32>
    %28 = arith.negf %27 : vector<8x96xf32>
    %29 = math.exp %28 : vector<8x96xf32>
    %cst_28 = arith.constant 1.000000e+00 : f32
    %30 = vector.broadcast %cst_28 : f32 to vector<8x96xf32>
    %31 = arith.addf %30, %29 : vector<8x96xf32>
    %32 = arith.divf %30, %31 : vector<8x96xf32>
    %33 = vector.extract_strided_slice %32 {offsets = [0, 0], sizes = [8, 32], strides = [1, 1]} : vector<8x96xf32> to vector<8x32xf32>
    %34 = vector.extract_strided_slice %32 {offsets = [0, 32], sizes = [8, 32], strides = [1, 1]} : vector<8x96xf32> to vector<8x32xf32>
    %35 = vector.extract_strided_slice %32 {offsets = [0, 64], sizes = [8, 32], strides = [1, 1]} : vector<8x96xf32> to vector<8x32xf32>
    %36 = vector.extract_strided_slice %24 {offsets = [0, 96], sizes = [8, 32], strides = [1, 1]} : vector<8x128xf32> to vector<8x32xf32>
    %37 = math.tanh %36 : vector<8x32xf32>
    %38 = arith.mulf %34, %26 : vector<8x32xf32>
    %39 = arith.mulf %33, %37 : vector<8x32xf32>
    %40 = arith.addf %38, %39 : vector<8x32xf32>
    %41 = math.tanh %40 : vector<8x32xf32>
    %42 = arith.mulf %35, %41 : vector<8x32xf32>
    %c0_29 = arith.constant 0 : index
    %c0_30 = arith.constant 0 : index
    %c0_31 = arith.constant 0 : index
    %43 = vector.load %arg12[%c0_29, %c0_30, %c0_31] : memref<2x8x32xf32, #tpu.memory_space<vmem>>, vector<1x8x32xf32>
    %44 = vector.shape_cast %43 : vector<1x8x32xf32> to vector<8x32xf32>
    %45 = vector.shape_cast %42 : vector<8x32xf32> to vector<1x8x32xf32>
    tpu.vector_store %arg12[%c0_29, %c0_30, %c0_31], %45 {strides = array<i32>} : memref<2x8x32xf32, #tpu.memory_space<vmem>>, vector<1x8x32xf32>,
    %c0_32 = arith.constant 0 : index
    %c0_33 = arith.constant 0 : index
    %c0_34 = arith.constant 0 : index
    %46 = vector.load %arg13[%c0_32, %c0_33, %c0_34] : memref<2x8x32xf32, #tpu.memory_space<vmem>>, vector<1x8x32xf32>
    %47 = vector.shape_cast %46 : vector<1x8x32xf32> to vector<8x32xf32>
    %48 = vector.shape_cast %40 : vector<8x32xf32> to vector<1x8x32xf32>
    tpu.vector_store %arg13[%c0_32, %c0_33, %c0_34], %48 {strides = array<i32>} : memref<2x8x32xf32, #tpu.memory_space<vmem>>, vector<1x8x32xf32>,
    %cst_35 = arith.constant dense<0.000000e+00> : vector<8x128xf32>
    %49 = tpu.matmul %42, %13, %cst_35 {dimension_numbers = #tpu.dot_dimension_numbers<[1], [0], [0], [1], [0, 0, 1, 1], [], []>} : vector<8x32xf32>, vector<32x128xf32>, vector<8x128xf32> -> vector<8x128xf32>
    %c1 = arith.constant 1 : index
    %c0_36 = arith.constant 0 : index
    %c0_37 = arith.constant 0 : index
    %50 = vector.load %arg12[%c1, %c0_36, %c0_37] : memref<2x8x32xf32, #tpu.memory_space<vmem>>, vector<1x8x32xf32>
    %51 = vector.shape_cast %50 : vector<1x8x32xf32> to vector<8x32xf32>
    %cst_38 = arith.constant dense<0.000000e+00> : vector<8x128xf32>
    %52 = tpu.matmul %51, %14, %cst_38 {dimension_numbers = #tpu.dot_dimension_numbers<[1], [0], [0], [1], [0, 0, 1, 1], [], []>} : vector<8x32xf32>, vector<32x128xf32>, vector<8x128xf32> -> vector<8x128xf32>
    %53 = arith.addf %49, %52 : vector<8x128xf32>
    %54 = arith.addf %53, %17 : vector<8x128xf32>
    %c1_39 = arith.constant 1 : index
    %c0_40 = arith.constant 0 : index
    %c0_41 = arith.constant 0 : index
    %55 = vector.load %arg13[%c1_39, %c0_40, %c0_41] : memref<2x8x32xf32, #tpu.memory_space<vmem>>, vector<1x8x32xf32>
    %56 = vector.shape_cast %55 : vector<1x8x32xf32> to vector<8x32xf32>
    %57 = vector.extract_strided_slice %54 {offsets = [0, 0], sizes = [8, 96], strides = [1, 1]} : vector<8x128xf32> to vector<8x96xf32>
    %58 = arith.negf %57 : vector<8x96xf32>
    %59 = math.exp %58 : vector<8x96xf32>
    %cst_42 = arith.constant 1.000000e+00 : f32
    %60 = vector.broadcast %cst_42 : f32 to vector<8x96xf32>
    %61 = arith.addf %60, %59 : vector<8x96xf32>
    %62 = arith.divf %60, %61 : vector<8x96xf32>
    %63 = vector.extract_strided_slice %62 {offsets = [0, 0], sizes = [8, 32], strides = [1, 1]} : vector<8x96xf32> to vector<8x32xf32>
    %64 = vector.extract_strided_slice %62 {offsets = [0, 32], sizes = [8, 32], strides = [1, 1]} : vector<8x96xf32> to vector<8x32xf32>
    %65 = vector.extract_strided_slice %62 {offsets = [0, 64], sizes = [8, 32], strides = [1, 1]} : vector<8x96xf32> to vector<8x32xf32>
    %66 = vector.extract_strided_slice %54 {offsets = [0, 96], sizes = [8, 32], strides = [1, 1]} : vector<8x128xf32> to vector<8x32xf32>
    %67 = math.tanh %66 : vector<8x32xf32>
    %68 = arith.mulf %64, %56 : vector<8x32xf32>
    %69 = arith.mulf %63, %67 : vector<8x32xf32>
    %70 = arith.addf %68, %69 : vector<8x32xf32>
    %71 = math.tanh %70 : vector<8x32xf32>
    %72 = arith.mulf %65, %71 : vector<8x32xf32>
    %c1_43 = arith.constant 1 : index
    %c0_44 = arith.constant 0 : index
    %c0_45 = arith.constant 0 : index
    %73 = vector.load %arg12[%c1_43, %c0_44, %c0_45] : memref<2x8x32xf32, #tpu.memory_space<vmem>>, vector<1x8x32xf32>
    %74 = vector.shape_cast %73 : vector<1x8x32xf32> to vector<8x32xf32>
    %75 = vector.shape_cast %72 : vector<8x32xf32> to vector<1x8x32xf32>
    tpu.vector_store %arg12[%c1_43, %c0_44, %c0_45], %75 {strides = array<i32>} : memref<2x8x32xf32, #tpu.memory_space<vmem>>, vector<1x8x32xf32>,
    %c1_46 = arith.constant 1 : index
    %c0_47 = arith.constant 0 : index
    %c0_48 = arith.constant 0 : index
    %76 = vector.load %arg13[%c1_46, %c0_47, %c0_48] : memref<2x8x32xf32, #tpu.memory_space<vmem>>, vector<1x8x32xf32>
    %77 = vector.shape_cast %76 : vector<1x8x32xf32> to vector<8x32xf32>
    %78 = vector.shape_cast %70 : vector<8x32xf32> to vector<1x8x32xf32>
    tpu.vector_store %arg13[%c1_46, %c0_47, %c0_48], %78 {strides = array<i32>} : memref<2x8x32xf32, #tpu.memory_space<vmem>>, vector<1x8x32xf32>,
    %79 = arith.index_cast %c0_i32_18 : i32 to index
    %c0_49 = arith.constant 0 : index
    %c0_50 = arith.constant 0 : index
    %80 = vector.load %arg9[%79, %c0_49, %c0_50] : memref<4x8x32xf32, #tpu.memory_space<vmem>>, vector<1x8x32xf32>
    %81 = vector.shape_cast %80 : vector<1x8x32xf32> to vector<8x32xf32>
    %82 = vector.shape_cast %72 : vector<8x32xf32> to vector<1x8x32xf32>
    tpu.vector_store %arg9[%79, %c0_49, %c0_50], %82 {strides = array<i32>} : memref<4x8x32xf32, #tpu.memory_space<vmem>>, vector<1x8x32xf32>,
    %c1_i32 = arith.constant 1 : i32
    %83 = arith.index_cast %c1_i32 : i32 to index
    %c0_51 = arith.constant 0 : index
    %c0_52 = arith.constant 0 : index
    %84 = vector.load %arg14[%83, %c0_51, %c0_52] : memref<4x8x128xf32, #tpu.memory_space<vmem>>, vector<1x8x128xf32>
    %85 = vector.shape_cast %84 : vector<1x8x128xf32> to vector<8x128xf32>
    %c0_53 = arith.constant 0 : index
    %c0_54 = arith.constant 0 : index
    %c0_55 = arith.constant 0 : index
    %86 = vector.load %arg12[%c0_53, %c0_54, %c0_55] : memref<2x8x32xf32, #tpu.memory_space<vmem>>, vector<1x8x32xf32>
    %87 = vector.shape_cast %86 : vector<1x8x32xf32> to vector<8x32xf32>
    %cst_56 = arith.constant dense<0.000000e+00> : vector<8x128xf32>
    %88 = tpu.matmul %87, %3, %cst_56 {dimension_numbers = #tpu.dot_dimension_numbers<[1], [0], [0], [1], [0, 0, 1, 1], [], []>} : vector<8x32xf32>, vector<32x128xf32>, vector<8x128xf32> -> vector<8x128xf32>
    %89 = arith.addf %85, %88 : vector<8x128xf32>
    %c0_57 = arith.constant 0 : index
    %c0_58 = arith.constant 0 : index
    %c0_59 = arith.constant 0 : index
    %90 = vector.load %arg13[%c0_57, %c0_58, %c0_59] : memref<2x8x32xf32, #tpu.memory_space<vmem>>, vector<1x8x32xf32>
    %91 = vector.shape_cast %90 : vector<1x8x32xf32> to vector<8x32xf32>
    %92 = vector.extract_strided_slice %89 {offsets = [0, 0], sizes = [8, 96], strides = [1, 1]} : vector<8x128xf32> to vector<8x96xf32>
    %93 = arith.negf %92 : vector<8x96xf32>
    %94 = math.exp %93 : vector<8x96xf32>
    %cst_60 = arith.constant 1.000000e+00 : f32
    %95 = vector.broadcast %cst_60 : f32 to vector<8x96xf32>
    %96 = arith.addf %95, %94 : vector<8x96xf32>
    %97 = arith.divf %95, %96 : vector<8x96xf32>
    %98 = vector.extract_strided_slice %97 {offsets = [0, 0], sizes = [8, 32], strides = [1, 1]} : vector<8x96xf32> to vector<8x32xf32>
    %99 = vector.extract_strided_slice %97 {offsets = [0, 32], sizes = [8, 32], strides = [1, 1]} : vector<8x96xf32> to vector<8x32xf32>
    %100 = vector.extract_strided_slice %97 {offsets = [0, 64], sizes = [8, 32], strides = [1, 1]} : vector<8x96xf32> to vector<8x32xf32>
    %101 = vector.extract_strided_slice %89 {offsets = [0, 96], sizes = [8, 32], strides = [1, 1]} : vector<8x128xf32> to vector<8x32xf32>
    %102 = math.tanh %101 : vector<8x32xf32>
    %103 = arith.mulf %99, %91 : vector<8x32xf32>
    %104 = arith.mulf %98, %102 : vector<8x32xf32>
    %105 = arith.addf %103, %104 : vector<8x32xf32>
    %106 = math.tanh %105 : vector<8x32xf32>
    %107 = arith.mulf %100, %106 : vector<8x32xf32>
    %c0_61 = arith.constant 0 : index
    %c0_62 = arith.constant 0 : index
    %c0_63 = arith.constant 0 : index
    %108 = vector.load %arg12[%c0_61, %c0_62, %c0_63] : memref<2x8x32xf32, #tpu.memory_space<vmem>>, vector<1x8x32xf32>
    %109 = vector.shape_cast %108 : vector<1x8x32xf32> to vector<8x32xf32>
    %110 = vector.shape_cast %107 : vector<8x32xf32> to vector<1x8x32xf32>
    tpu.vector_store %arg12[%c0_61, %c0_62, %c0_63], %110 {strides = array<i32>} : memref<2x8x32xf32, #tpu.memory_space<vmem>>, vector<1x8x32xf32>,
    %c0_64 = arith.constant 0 : index
    %c0_65 = arith.constant 0 : index
    %c0_66 = arith.constant 0 : index
    %111 = vector.load %arg13[%c0_64, %c0_65, %c0_66] : memref<2x8x32xf32, #tpu.memory_space<vmem>>, vector<1x8x32xf32>
    %112 = vector.shape_cast %111 : vector<1x8x32xf32> to vector<8x32xf32>
    %113 = vector.shape_cast %105 : vector<8x32xf32> to vector<1x8x32xf32>
    tpu.vector_store %arg13[%c0_64, %c0_65, %c0_66], %113 {strides = array<i32>} : memref<2x8x32xf32, #tpu.memory_space<vmem>>, vector<1x8x32xf32>,
    %cst_67 = arith.constant dense<0.000000e+00> : vector<8x128xf32>
    %114 = tpu.matmul %107, %13, %cst_67 {dimension_numbers = #tpu.dot_dimension_numbers<[1], [0], [0], [1], [0, 0, 1, 1], [], []>} : vector<8x32xf32>, vector<32x128xf32>, vector<8x128xf32> -> vector<8x128xf32>
    %c1_68 = arith.constant 1 : index
    %c0_69 = arith.constant 0 : index
    %c0_70 = arith.constant 0 : index
    %115 = vector.load %arg12[%c1_68, %c0_69, %c0_70] : memref<2x8x32xf32, #tpu.memory_space<vmem>>, vector<1x8x32xf32>
    %116 = vector.shape_cast %115 : vector<1x8x32xf32> to vector<8x32xf32>
    %cst_71 = arith.constant dense<0.000000e+00> : vector<8x128xf32>
    %117 = tpu.matmul %116, %14, %cst_71 {dimension_numbers = #tpu.dot_dimension_numbers<[1], [0], [0], [1], [0, 0, 1, 1], [], []>} : vector<8x32xf32>, vector<32x128xf32>, vector<8x128xf32> -> vector<8x128xf32>
    %118 = arith.addf %114, %117 : vector<8x128xf32>
    %119 = arith.addf %118, %17 : vector<8x128xf32>
    %c1_72 = arith.constant 1 : index
    %c0_73 = arith.constant 0 : index
    %c0_74 = arith.constant 0 : index
    %120 = vector.load %arg13[%c1_72, %c0_73, %c0_74] : memref<2x8x32xf32, #tpu.memory_space<vmem>>, vector<1x8x32xf32>
    %121 = vector.shape_cast %120 : vector<1x8x32xf32> to vector<8x32xf32>
    %122 = vector.extract_strided_slice %119 {offsets = [0, 0], sizes = [8, 96], strides = [1, 1]} : vector<8x128xf32> to vector<8x96xf32>
    %123 = arith.negf %122 : vector<8x96xf32>
    %124 = math.exp %123 : vector<8x96xf32>
    %cst_75 = arith.constant 1.000000e+00 : f32
    %125 = vector.broadcast %cst_75 : f32 to vector<8x96xf32>
    %126 = arith.addf %125, %124 : vector<8x96xf32>
    %127 = arith.divf %125, %126 : vector<8x96xf32>
    %128 = vector.extract_strided_slice %127 {offsets = [0, 0], sizes = [8, 32], strides = [1, 1]} : vector<8x96xf32> to vector<8x32xf32>
    %129 = vector.extract_strided_slice %127 {offsets = [0, 32], sizes = [8, 32], strides = [1, 1]} : vector<8x96xf32> to vector<8x32xf32>
    %130 = vector.extract_strided_slice %127 {offsets = [0, 64], sizes = [8, 32], strides = [1, 1]} : vector<8x96xf32> to vector<8x32xf32>
    %131 = vector.extract_strided_slice %119 {offsets = [0, 96], sizes = [8, 32], strides = [1, 1]} : vector<8x128xf32> to vector<8x32xf32>
    %132 = math.tanh %131 : vector<8x32xf32>
    %133 = arith.mulf %129, %121 : vector<8x32xf32>
    %134 = arith.mulf %128, %132 : vector<8x32xf32>
    %135 = arith.addf %133, %134 : vector<8x32xf32>
    %136 = math.tanh %135 : vector<8x32xf32>
    %137 = arith.mulf %130, %136 : vector<8x32xf32>
    %c1_76 = arith.constant 1 : index
    %c0_77 = arith.constant 0 : index
    %c0_78 = arith.constant 0 : index
    %138 = vector.load %arg12[%c1_76, %c0_77, %c0_78] : memref<2x8x32xf32, #tpu.memory_space<vmem>>, vector<1x8x32xf32>
    %139 = vector.shape_cast %138 : vector<1x8x32xf32> to vector<8x32xf32>
    %140 = vector.shape_cast %137 : vector<8x32xf32> to vector<1x8x32xf32>
    tpu.vector_store %arg12[%c1_76, %c0_77, %c0_78], %140 {strides = array<i32>} : memref<2x8x32xf32, #tpu.memory_space<vmem>>, vector<1x8x32xf32>,
    %c1_79 = arith.constant 1 : index
    %c0_80 = arith.constant 0 : index
    %c0_81 = arith.constant 0 : index
    %141 = vector.load %arg13[%c1_79, %c0_80, %c0_81] : memref<2x8x32xf32, #tpu.memory_space<vmem>>, vector<1x8x32xf32>
    %142 = vector.shape_cast %141 : vector<1x8x32xf32> to vector<8x32xf32>
    %143 = vector.shape_cast %135 : vector<8x32xf32> to vector<1x8x32xf32>
    tpu.vector_store %arg13[%c1_79, %c0_80, %c0_81], %143 {strides = array<i32>} : memref<2x8x32xf32, #tpu.memory_space<vmem>>, vector<1x8x32xf32>,
    %144 = arith.index_cast %c1_i32 : i32 to index
    %c0_82 = arith.constant 0 : index
    %c0_83 = arith.constant 0 : index
    %145 = vector.load %arg9[%144, %c0_82, %c0_83] : memref<4x8x32xf32, #tpu.memory_space<vmem>>, vector<1x8x32xf32>
    %146 = vector.shape_cast %145 : vector<1x8x32xf32> to vector<8x32xf32>
    %147 = vector.shape_cast %137 : vector<8x32xf32> to vector<1x8x32xf32>
    tpu.vector_store %arg9[%144, %c0_82, %c0_83], %147 {strides = array<i32>} : memref<4x8x32xf32, #tpu.memory_space<vmem>>, vector<1x8x32xf32>,
    %c2_i32 = arith.constant 2 : i32
    %148 = arith.index_cast %c2_i32 : i32 to index
    %c0_84 = arith.constant 0 : index
    %c0_85 = arith.constant 0 : index
    %149 = vector.load %arg14[%148, %c0_84, %c0_85] : memref<4x8x128xf32, #tpu.memory_space<vmem>>, vector<1x8x128xf32>
    %150 = vector.shape_cast %149 : vector<1x8x128xf32> to vector<8x128xf32>
    %c0_86 = arith.constant 0 : index
    %c0_87 = arith.constant 0 : index
    %c0_88 = arith.constant 0 : index
    %151 = vector.load %arg12[%c0_86, %c0_87, %c0_88] : memref<2x8x32xf32, #tpu.memory_space<vmem>>, vector<1x8x32xf32>
    %152 = vector.shape_cast %151 : vector<1x8x32xf32> to vector<8x32xf32>
    %cst_89 = arith.constant dense<0.000000e+00> : vector<8x128xf32>
    %153 = tpu.matmul %152, %3, %cst_89 {dimension_numbers = #tpu.dot_dimension_numbers<[1], [0], [0], [1], [0, 0, 1, 1], [], []>} : vector<8x32xf32>, vector<32x128xf32>, vector<8x128xf32> -> vector<8x128xf32>
    %154 = arith.addf %150, %153 : vector<8x128xf32>
    %c0_90 = arith.constant 0 : index
    %c0_91 = arith.constant 0 : index
    %c0_92 = arith.constant 0 : index
    %155 = vector.load %arg13[%c0_90, %c0_91, %c0_92] : memref<2x8x32xf32, #tpu.memory_space<vmem>>, vector<1x8x32xf32>
    %156 = vector.shape_cast %155 : vector<1x8x32xf32> to vector<8x32xf32>
    %157 = vector.extract_strided_slice %154 {offsets = [0, 0], sizes = [8, 96], strides = [1, 1]} : vector<8x128xf32> to vector<8x96xf32>
    %158 = arith.negf %157 : vector<8x96xf32>
    %159 = math.exp %158 : vector<8x96xf32>
    %cst_93 = arith.constant 1.000000e+00 : f32
    %160 = vector.broadcast %cst_93 : f32 to vector<8x96xf32>
    %161 = arith.addf %160, %159 : vector<8x96xf32>
    %162 = arith.divf %160, %161 : vector<8x96xf32>
    %163 = vector.extract_strided_slice %162 {offsets = [0, 0], sizes = [8, 32], strides = [1, 1]} : vector<8x96xf32> to vector<8x32xf32>
    %164 = vector.extract_strided_slice %162 {offsets = [0, 32], sizes = [8, 32], strides = [1, 1]} : vector<8x96xf32> to vector<8x32xf32>
    %165 = vector.extract_strided_slice %162 {offsets = [0, 64], sizes = [8, 32], strides = [1, 1]} : vector<8x96xf32> to vector<8x32xf32>
    %166 = vector.extract_strided_slice %154 {offsets = [0, 96], sizes = [8, 32], strides = [1, 1]} : vector<8x128xf32> to vector<8x32xf32>
    %167 = math.tanh %166 : vector<8x32xf32>
    %168 = arith.mulf %164, %156 : vector<8x32xf32>
    %169 = arith.mulf %163, %167 : vector<8x32xf32>
    %170 = arith.addf %168, %169 : vector<8x32xf32>
    %171 = math.tanh %170 : vector<8x32xf32>
    %172 = arith.mulf %165, %171 : vector<8x32xf32>
    %c0_94 = arith.constant 0 : index
    %c0_95 = arith.constant 0 : index
    %c0_96 = arith.constant 0 : index
    %173 = vector.load %arg12[%c0_94, %c0_95, %c0_96] : memref<2x8x32xf32, #tpu.memory_space<vmem>>, vector<1x8x32xf32>
    %174 = vector.shape_cast %173 : vector<1x8x32xf32> to vector<8x32xf32>
    %175 = vector.shape_cast %172 : vector<8x32xf32> to vector<1x8x32xf32>
    tpu.vector_store %arg12[%c0_94, %c0_95, %c0_96], %175 {strides = array<i32>} : memref<2x8x32xf32, #tpu.memory_space<vmem>>, vector<1x8x32xf32>,
    %c0_97 = arith.constant 0 : index
    %c0_98 = arith.constant 0 : index
    %c0_99 = arith.constant 0 : index
    %176 = vector.load %arg13[%c0_97, %c0_98, %c0_99] : memref<2x8x32xf32, #tpu.memory_space<vmem>>, vector<1x8x32xf32>
    %177 = vector.shape_cast %176 : vector<1x8x32xf32> to vector<8x32xf32>
    %178 = vector.shape_cast %170 : vector<8x32xf32> to vector<1x8x32xf32>
    tpu.vector_store %arg13[%c0_97, %c0_98, %c0_99], %178 {strides = array<i32>} : memref<2x8x32xf32, #tpu.memory_space<vmem>>, vector<1x8x32xf32>,
    %cst_100 = arith.constant dense<0.000000e+00> : vector<8x128xf32>
    %179 = tpu.matmul %172, %13, %cst_100 {dimension_numbers = #tpu.dot_dimension_numbers<[1], [0], [0], [1], [0, 0, 1, 1], [], []>} : vector<8x32xf32>, vector<32x128xf32>, vector<8x128xf32> -> vector<8x128xf32>
    %c1_101 = arith.constant 1 : index
    %c0_102 = arith.constant 0 : index
    %c0_103 = arith.constant 0 : index
    %180 = vector.load %arg12[%c1_101, %c0_102, %c0_103] : memref<2x8x32xf32, #tpu.memory_space<vmem>>, vector<1x8x32xf32>
    %181 = vector.shape_cast %180 : vector<1x8x32xf32> to vector<8x32xf32>
    %cst_104 = arith.constant dense<0.000000e+00> : vector<8x128xf32>
    %182 = tpu.matmul %181, %14, %cst_104 {dimension_numbers = #tpu.dot_dimension_numbers<[1], [0], [0], [1], [0, 0, 1, 1], [], []>} : vector<8x32xf32>, vector<32x128xf32>, vector<8x128xf32> -> vector<8x128xf32>
    %183 = arith.addf %179, %182 : vector<8x128xf32>
    %184 = arith.addf %183, %17 : vector<8x128xf32>
    %c1_105 = arith.constant 1 : index
    %c0_106 = arith.constant 0 : index
    %c0_107 = arith.constant 0 : index
    %185 = vector.load %arg13[%c1_105, %c0_106, %c0_107] : memref<2x8x32xf32, #tpu.memory_space<vmem>>, vector<1x8x32xf32>
    %186 = vector.shape_cast %185 : vector<1x8x32xf32> to vector<8x32xf32>
    %187 = vector.extract_strided_slice %184 {offsets = [0, 0], sizes = [8, 96], strides = [1, 1]} : vector<8x128xf32> to vector<8x96xf32>
    %188 = arith.negf %187 : vector<8x96xf32>
    %189 = math.exp %188 : vector<8x96xf32>
    %cst_108 = arith.constant 1.000000e+00 : f32
    %190 = vector.broadcast %cst_108 : f32 to vector<8x96xf32>
    %191 = arith.addf %190, %189 : vector<8x96xf32>
    %192 = arith.divf %190, %191 : vector<8x96xf32>
    %193 = vector.extract_strided_slice %192 {offsets = [0, 0], sizes = [8, 32], strides = [1, 1]} : vector<8x96xf32> to vector<8x32xf32>
    %194 = vector.extract_strided_slice %192 {offsets = [0, 32], sizes = [8, 32], strides = [1, 1]} : vector<8x96xf32> to vector<8x32xf32>
    %195 = vector.extract_strided_slice %192 {offsets = [0, 64], sizes = [8, 32], strides = [1, 1]} : vector<8x96xf32> to vector<8x32xf32>
    %196 = vector.extract_strided_slice %184 {offsets = [0, 96], sizes = [8, 32], strides = [1, 1]} : vector<8x128xf32> to vector<8x32xf32>
    %197 = math.tanh %196 : vector<8x32xf32>
    %198 = arith.mulf %194, %186 : vector<8x32xf32>
    %199 = arith.mulf %193, %197 : vector<8x32xf32>
    %200 = arith.addf %198, %199 : vector<8x32xf32>
    %201 = math.tanh %200 : vector<8x32xf32>
    %202 = arith.mulf %195, %201 : vector<8x32xf32>
    %c1_109 = arith.constant 1 : index
    %c0_110 = arith.constant 0 : index
    %c0_111 = arith.constant 0 : index
    %203 = vector.load %arg12[%c1_109, %c0_110, %c0_111] : memref<2x8x32xf32, #tpu.memory_space<vmem>>, vector<1x8x32xf32>
    %204 = vector.shape_cast %203 : vector<1x8x32xf32> to vector<8x32xf32>
    %205 = vector.shape_cast %202 : vector<8x32xf32> to vector<1x8x32xf32>
    tpu.vector_store %arg12[%c1_109, %c0_110, %c0_111], %205 {strides = array<i32>} : memref<2x8x32xf32, #tpu.memory_space<vmem>>, vector<1x8x32xf32>,
    %c1_112 = arith.constant 1 : index
    %c0_113 = arith.constant 0 : index
    %c0_114 = arith.constant 0 : index
    %206 = vector.load %arg13[%c1_112, %c0_113, %c0_114] : memref<2x8x32xf32, #tpu.memory_space<vmem>>, vector<1x8x32xf32>
    %207 = vector.shape_cast %206 : vector<1x8x32xf32> to vector<8x32xf32>
    %208 = vector.shape_cast %200 : vector<8x32xf32> to vector<1x8x32xf32>
    tpu.vector_store %arg13[%c1_112, %c0_113, %c0_114], %208 {strides = array<i32>} : memref<2x8x32xf32, #tpu.memory_space<vmem>>, vector<1x8x32xf32>,
    %209 = arith.index_cast %c2_i32 : i32 to index
    %c0_115 = arith.constant 0 : index
    %c0_116 = arith.constant 0 : index
    %210 = vector.load %arg9[%209, %c0_115, %c0_116] : memref<4x8x32xf32, #tpu.memory_space<vmem>>, vector<1x8x32xf32>
    %211 = vector.shape_cast %210 : vector<1x8x32xf32> to vector<8x32xf32>
    %212 = vector.shape_cast %202 : vector<8x32xf32> to vector<1x8x32xf32>
    tpu.vector_store %arg9[%209, %c0_115, %c0_116], %212 {strides = array<i32>} : memref<4x8x32xf32, #tpu.memory_space<vmem>>, vector<1x8x32xf32>,
    %c3_i32 = arith.constant 3 : i32
    %213 = arith.index_cast %c3_i32 : i32 to index
    %c0_117 = arith.constant 0 : index
    %c0_118 = arith.constant 0 : index
    %214 = vector.load %arg14[%213, %c0_117, %c0_118] : memref<4x8x128xf32, #tpu.memory_space<vmem>>, vector<1x8x128xf32>
    %215 = vector.shape_cast %214 : vector<1x8x128xf32> to vector<8x128xf32>
    %c0_119 = arith.constant 0 : index
    %c0_120 = arith.constant 0 : index
    %c0_121 = arith.constant 0 : index
    %216 = vector.load %arg12[%c0_119, %c0_120, %c0_121] : memref<2x8x32xf32, #tpu.memory_space<vmem>>, vector<1x8x32xf32>
    %217 = vector.shape_cast %216 : vector<1x8x32xf32> to vector<8x32xf32>
    %cst_122 = arith.constant dense<0.000000e+00> : vector<8x128xf32>
    %218 = tpu.matmul %217, %3, %cst_122 {dimension_numbers = #tpu.dot_dimension_numbers<[1], [0], [0], [1], [0, 0, 1, 1], [], []>} : vector<8x32xf32>, vector<32x128xf32>, vector<8x128xf32> -> vector<8x128xf32>
    %219 = arith.addf %215, %218 : vector<8x128xf32>
    %c0_123 = arith.constant 0 : index
    %c0_124 = arith.constant 0 : index
    %c0_125 = arith.constant 0 : index
    %220 = vector.load %arg13[%c0_123, %c0_124, %c0_125] : memref<2x8x32xf32, #tpu.memory_space<vmem>>, vector<1x8x32xf32>
    %221 = vector.shape_cast %220 : vector<1x8x32xf32> to vector<8x32xf32>
    %222 = vector.extract_strided_slice %219 {offsets = [0, 0], sizes = [8, 96], strides = [1, 1]} : vector<8x128xf32> to vector<8x96xf32>
    %223 = arith.negf %222 : vector<8x96xf32>
    %224 = math.exp %223 : vector<8x96xf32>
    %cst_126 = arith.constant 1.000000e+00 : f32
    %225 = vector.broadcast %cst_126 : f32 to vector<8x96xf32>
    %226 = arith.addf %225, %224 : vector<8x96xf32>
    %227 = arith.divf %225, %226 : vector<8x96xf32>
    %228 = vector.extract_strided_slice %227 {offsets = [0, 0], sizes = [8, 32], strides = [1, 1]} : vector<8x96xf32> to vector<8x32xf32>
    %229 = vector.extract_strided_slice %227 {offsets = [0, 32], sizes = [8, 32], strides = [1, 1]} : vector<8x96xf32> to vector<8x32xf32>
    %230 = vector.extract_strided_slice %227 {offsets = [0, 64], sizes = [8, 32], strides = [1, 1]} : vector<8x96xf32> to vector<8x32xf32>
    %231 = vector.extract_strided_slice %219 {offsets = [0, 96], sizes = [8, 32], strides = [1, 1]} : vector<8x128xf32> to vector<8x32xf32>
    %232 = math.tanh %231 : vector<8x32xf32>
    %233 = arith.mulf %229, %221 : vector<8x32xf32>
    %234 = arith.mulf %228, %232 : vector<8x32xf32>
    %235 = arith.addf %233, %234 : vector<8x32xf32>
    %236 = math.tanh %235 : vector<8x32xf32>
    %237 = arith.mulf %230, %236 : vector<8x32xf32>
    %c0_127 = arith.constant 0 : index
    %c0_128 = arith.constant 0 : index
    %c0_129 = arith.constant 0 : index
    %238 = vector.load %arg12[%c0_127, %c0_128, %c0_129] : memref<2x8x32xf32, #tpu.memory_space<vmem>>, vector<1x8x32xf32>
    %239 = vector.shape_cast %238 : vector<1x8x32xf32> to vector<8x32xf32>
    %240 = vector.shape_cast %237 : vector<8x32xf32> to vector<1x8x32xf32>
    tpu.vector_store %arg12[%c0_127, %c0_128, %c0_129], %240 {strides = array<i32>} : memref<2x8x32xf32, #tpu.memory_space<vmem>>, vector<1x8x32xf32>,
    %c0_130 = arith.constant 0 : index
    %c0_131 = arith.constant 0 : index
    %c0_132 = arith.constant 0 : index
    %241 = vector.load %arg13[%c0_130, %c0_131, %c0_132] : memref<2x8x32xf32, #tpu.memory_space<vmem>>, vector<1x8x32xf32>
    %242 = vector.shape_cast %241 : vector<1x8x32xf32> to vector<8x32xf32>
    %243 = vector.shape_cast %235 : vector<8x32xf32> to vector<1x8x32xf32>
    tpu.vector_store %arg13[%c0_130, %c0_131, %c0_132], %243 {strides = array<i32>} : memref<2x8x32xf32, #tpu.memory_space<vmem>>, vector<1x8x32xf32>,
    %cst_133 = arith.constant dense<0.000000e+00> : vector<8x128xf32>
    %244 = tpu.matmul %237, %13, %cst_133 {dimension_numbers = #tpu.dot_dimension_numbers<[1], [0], [0], [1], [0, 0, 1, 1], [], []>} : vector<8x32xf32>, vector<32x128xf32>, vector<8x128xf32> -> vector<8x128xf32>
    %c1_134 = arith.constant 1 : index
    %c0_135 = arith.constant 0 : index
    %c0_136 = arith.constant 0 : index
    %245 = vector.load %arg12[%c1_134, %c0_135, %c0_136] : memref<2x8x32xf32, #tpu.memory_space<vmem>>, vector<1x8x32xf32>
    %246 = vector.shape_cast %245 : vector<1x8x32xf32> to vector<8x32xf32>
    %cst_137 = arith.constant dense<0.000000e+00> : vector<8x128xf32>
    %247 = tpu.matmul %246, %14, %cst_137 {dimension_numbers = #tpu.dot_dimension_numbers<[1], [0], [0], [1], [0, 0, 1, 1], [], []>} : vector<8x32xf32>, vector<32x128xf32>, vector<8x128xf32> -> vector<8x128xf32>
    %248 = arith.addf %244, %247 : vector<8x128xf32>
    %249 = arith.addf %248, %17 : vector<8x128xf32>
    %c1_138 = arith.constant 1 : index
    %c0_139 = arith.constant 0 : index
    %c0_140 = arith.constant 0 : index
    %250 = vector.load %arg13[%c1_138, %c0_139, %c0_140] : memref<2x8x32xf32, #tpu.memory_space<vmem>>, vector<1x8x32xf32>
    %251 = vector.shape_cast %250 : vector<1x8x32xf32> to vector<8x32xf32>
    %252 = vector.extract_strided_slice %249 {offsets = [0, 0], sizes = [8, 96], strides = [1, 1]} : vector<8x128xf32> to vector<8x96xf32>
    %253 = arith.negf %252 : vector<8x96xf32>
    %254 = math.exp %253 : vector<8x96xf32>
    %cst_141 = arith.constant 1.000000e+00 : f32
    %255 = vector.broadcast %cst_141 : f32 to vector<8x96xf32>
    %256 = arith.addf %255, %254 : vector<8x96xf32>
    %257 = arith.divf %255, %256 : vector<8x96xf32>
    %258 = vector.extract_strided_slice %257 {offsets = [0, 0], sizes = [8, 32], strides = [1, 1]} : vector<8x96xf32> to vector<8x32xf32>
    %259 = vector.extract_strided_slice %257 {offsets = [0, 32], sizes = [8, 32], strides = [1, 1]} : vector<8x96xf32> to vector<8x32xf32>
    %260 = vector.extract_strided_slice %257 {offsets = [0, 64], sizes = [8, 32], strides = [1, 1]} : vector<8x96xf32> to vector<8x32xf32>
    %261 = vector.extract_strided_slice %249 {offsets = [0, 96], sizes = [8, 32], strides = [1, 1]} : vector<8x128xf32> to vector<8x32xf32>
    %262 = math.tanh %261 : vector<8x32xf32>
    %263 = arith.mulf %259, %251 : vector<8x32xf32>
    %264 = arith.mulf %258, %262 : vector<8x32xf32>
    %265 = arith.addf %263, %264 : vector<8x32xf32>
    %266 = math.tanh %265 : vector<8x32xf32>
    %267 = arith.mulf %260, %266 : vector<8x32xf32>
    %c1_142 = arith.constant 1 : index
    %c0_143 = arith.constant 0 : index
    %c0_144 = arith.constant 0 : index
    %268 = vector.load %arg12[%c1_142, %c0_143, %c0_144] : memref<2x8x32xf32, #tpu.memory_space<vmem>>, vector<1x8x32xf32>
    %269 = vector.shape_cast %268 : vector<1x8x32xf32> to vector<8x32xf32>
    %270 = vector.shape_cast %267 : vector<8x32xf32> to vector<1x8x32xf32>
    tpu.vector_store %arg12[%c1_142, %c0_143, %c0_144], %270 {strides = array<i32>} : memref<2x8x32xf32, #tpu.memory_space<vmem>>, vector<1x8x32xf32>,
    %c1_145 = arith.constant 1 : index
    %c0_146 = arith.constant 0 : index
    %c0_147 = arith.constant 0 : index
    %271 = vector.load %arg13[%c1_145, %c0_146, %c0_147] : memref<2x8x32xf32, #tpu.memory_space<vmem>>, vector<1x8x32xf32>
    %272 = vector.shape_cast %271 : vector<1x8x32xf32> to vector<8x32xf32>
    %273 = vector.shape_cast %265 : vector<8x32xf32> to vector<1x8x32xf32>
    tpu.vector_store %arg13[%c1_145, %c0_146, %c0_147], %273 {strides = array<i32>} : memref<2x8x32xf32, #tpu.memory_space<vmem>>, vector<1x8x32xf32>,
    %274 = arith.index_cast %c3_i32 : i32 to index
    %c0_148 = arith.constant 0 : index
    %c0_149 = arith.constant 0 : index
    %275 = vector.load %arg9[%274, %c0_148, %c0_149] : memref<4x8x32xf32, #tpu.memory_space<vmem>>, vector<1x8x32xf32>
    %276 = vector.shape_cast %275 : vector<1x8x32xf32> to vector<8x32xf32>
    %277 = vector.shape_cast %267 : vector<8x32xf32> to vector<1x8x32xf32>
    tpu.vector_store %arg9[%274, %c0_148, %c0_149], %277 {strides = array<i32>} : memref<4x8x32xf32, #tpu.memory_space<vmem>>, vector<1x8x32xf32>,
    %c4_i32 = arith.constant 4 : i32
    %c1_i32_150 = arith.constant 1 : i32
    %278 = arith.cmpi eq, %arg1, %c1_i32_150 : i32
    %279 = arith.extui %278 : i1 to i32
    %c0_i32_151 = arith.constant 0 : i32
    %280 = arith.cmpi ne, %279, %c0_i32_151 : i32
    scf.if %280 {
      %c0_152 = arith.constant 0 : index
      %c0_153 = arith.constant 0 : index
      %c0_154 = arith.constant 0 : index
      %281 = vector.load %arg12[%c0_152, %c0_153, %c0_154] : memref<2x8x32xf32, #tpu.memory_space<vmem>>, vector<2x8x32xf32>
      %c0_155 = arith.constant 0 : index
      %c0_156 = arith.constant 0 : index
      %c0_157 = arith.constant 0 : index
      %282 = vector.load %arg10[%c0_155, %c0_156, %c0_157] : memref<2x8x32xf32, #tpu.memory_space<vmem>>, vector<2x8x32xf32>
      tpu.vector_store %arg10[%c0_155, %c0_156, %c0_157], %281 {strides = array<i32>} : memref<2x8x32xf32, #tpu.memory_space<vmem>>, vector<2x8x32xf32>,
      %c0_158 = arith.constant 0 : index
      %c0_159 = arith.constant 0 : index
      %c0_160 = arith.constant 0 : index
      %283 = vector.load %arg13[%c0_158, %c0_159, %c0_160] : memref<2x8x32xf32, #tpu.memory_space<vmem>>, vector<2x8x32xf32>
      %c0_161 = arith.constant 0 : index
      %c0_162 = arith.constant 0 : index
      %c0_163 = arith.constant 0 : index
      %284 = vector.load %arg11[%c0_161, %c0_162, %c0_163] : memref<2x8x32xf32, #tpu.memory_space<vmem>>, vector<2x8x32xf32>
      tpu.vector_store %arg11[%c0_161, %c0_162, %c0_163], %283 {strides = array<i32>} : memref<2x8x32xf32, #tpu.memory_space<vmem>>, vector<2x8x32xf32>,
    } else {
    }
    return
  }
  func.func @transform_0(%arg0: i32, %arg1: i32) -> (i32, i32, i32) {
    %c0_i32 = arith.constant 0 : i32
    %c0_i32_0 = arith.constant 0 : i32
    return %arg1, %arg0, %c0_i32 : i32, i32, i32
  }
  func.func @transform_1(%arg0: i32, %arg1: i32) -> (i32, i32) {
    %c0_i32 = arith.constant 0 : i32
    %c0_i32_0 = arith.constant 0 : i32
    %c0_i32_1 = arith.constant 0 : i32
    return %c0_i32, %c0_i32_0 : i32, i32
  }
  func.func @transform_2(%arg0: i32, %arg1: i32) -> (i32, i32) {
    %c0_i32 = arith.constant 0 : i32
    %c0_i32_0 = arith.constant 0 : i32
    %c0_i32_1 = arith.constant 0 : i32
    return %c0_i32, %c0_i32_0 : i32, i32
  }
  func.func @transform_3(%arg0: i32, %arg1: i32) -> (i32, i32) {
    %c0_i32 = arith.constant 0 : i32
    %c0_i32_0 = arith.constant 0 : i32
    %c0_i32_1 = arith.constant 0 : i32
    return %c0_i32, %c0_i32_0 : i32, i32
  }
  func.func @transform_4(%arg0: i32, %arg1: i32) -> (i32, i32) {
    %c0_i32 = arith.constant 0 : i32
    %c0_i32_0 = arith.constant 0 : i32
    %c0_i32_1 = arith.constant 0 : i32
    return %c0_i32, %c0_i32_0 : i32, i32
  }
  func.func @transform_5(%arg0: i32, %arg1: i32) -> (i32, i32) {
    %c0_i32 = arith.constant 0 : i32
    %c0_i32_0 = arith.constant 0 : i32
    %c0_i32_1 = arith.constant 0 : i32
    return %c0_i32, %c0_i32_0 : i32, i32
  }
  func.func @transform_6(%arg0: i32, %arg1: i32) -> (i32, i32) {
    %c0_i32 = arith.constant 0 : i32
    %c0_i32_0 = arith.constant 0 : i32
    %c0_i32_1 = arith.constant 0 : i32
    return %c0_i32, %c0_i32_0 : i32, i32
  }
  func.func @transform_7(%arg0: i32, %arg1: i32) -> (i32, i32, i32) {
    %c0_i32 = arith.constant 0 : i32
    %c0_i32_0 = arith.constant 0 : i32
    return %arg1, %arg0, %c0_i32 : i32, i32, i32
  }
  func.func @transform_8(%arg0: i32, %arg1: i32) -> (i32, i32, i32) {
    %c0_i32 = arith.constant 0 : i32
    %c0_i32_0 = arith.constant 0 : i32
    %c0_i32_1 = arith.constant 0 : i32
    return %c0_i32, %arg0, %c0_i32_0 : i32, i32, i32
  }
  func.func @transform_9(%arg0: i32, %arg1: i32) -> (i32, i32, i32) {
    %c0_i32 = arith.constant 0 : i32
    %c0_i32_0 = arith.constant 0 : i32
    %c0_i32_1 = arith.constant 0 : i32
    return %c0_i32, %arg0, %c0_i32_0 : i32, i32, i32
  }
}

</mosaic_0001>

<llo_original>
// kernel: tpu_custom_call.1
$region0: #{tpu_custom_call.1}
  #allocation0 [shape = 'u32[]', space=smem, size = 0x4, offset = 0x4, fixed_abs, tag = 'smem constant byte address 0x4 - core index']
  #allocation1 [shape = 'u32[144,128]{1,0:T(1,128)}', space=vmem, size = 0x12000, scoped, tag = 'internal scratch']
  %s0 = inlined_call_operand.hbm [shape: f32[8,128], index: 0, kind: input, shape index: {}]
  %s1 = inlined_call_operand.hbm [shape: f32[8,128], index: 1, kind: output, shape index: {}]
  %s2 = sld [smem:[#allocation0]]
  $region41: #{tpu_custom_call.1} parent=0
    _
  %s4 = ssub.s32 1, %s2
  %s5 = scalar_select 0, %s4, %s2
  $region1: #{tpu_custom_call.1} parent=0
    #allocation2 [shape = 'u8[4096]{0}', space=vmem, size = 0x1000, scoped, tag = 'input window, operand 0, single buffered']
    #allocation3 [shape = 's32[2]{0}', space=sflag, size = 0x8, scoped, tag = 'scoped memory for tpu_custom_call.1']
    #allocation4 [shape = 's32[2]{0}', space=sflag, size = 0x8, scoped, tag = 'scoped memory for tpu_custom_call.1']
    #allocation5 [shape = 'u8[4096]{0}', space=vmem, size = 0x1000, scoped, tag = 'output window, operand 0, single buffered']
    %6 = vsyncpa [#allocation3], 0
    %7 = vsyncpa [#allocation4], 0
    loop: start=0, step=1, limit=4
    $region2: #{tpu_custom_call.1} parent=1 // loop_pre_header
      _
    $region3: #{tpu_custom_call.1} parent=1 // loop_header
      %s9 = sphi 0, %s13
      %p10 = scmp.ge.s32.totalorder %s9, 4
      %s17 = sphi 0, %s17
      %s19 = sphi 0, %s17
      %s20 = sphi 0, %s19
      %s34 = sphi 0, %s20
      %s38 = sphi 0, %s38
      %s40 = sphi 0, %s38
      %s41 = sphi 0, %s40
      %s55 = sphi 0, %s41
    $region4: #{tpu_custom_call.1} parent=1 // loop_header_branch
      %12 = sbr.rel (%p10) target = $region8
    $region5: #{tpu_custom_call.1} parent=1 // loop_body
      %s14 = ssub.s32 %s9, 1
      %s15 = ssub.s32 %s9, 2
      %s16 = sadd.s32 %s9, 1
      %s18 = sadd.s32 %s17, 1
      %p21 = scmp.eq.s32.totalorder %s9, 1
      %p22 = scmp.ne.s32.totalorder %s17, %s19
      %p23 = scmp.eq.s32.totalorder %s9, 0
      %p24 = por %p22, %p23
      %p25 = scmp.ne.s32.totalorder %s17, %s19
      %p26 = scmp.eq.s32.totalorder %s14, 1
      %p27 = por %p25, %p26
      %p28 = scmp.ne.s32.totalorder %s19, %s20
      %p29 = scmp.eq.s32.totalorder %s14, 0
      %p30 = por %p28, %p29
      %p31 = scmp.ne.s32.totalorder %s19, %s20
      %p32 = scmp.eq.s32.totalorder %s15, 1
      %p33 = por %p31, %p32
      %p35 = scmp.ne.s32.totalorder %s20, %s34
      %p36 = scmp.eq.s32.totalorder %s15, 0
      %p37 = por %p35, %p36
      %s39 = sadd.s32 %s38, 1
      %p42 = scmp.eq.s32.totalorder %s9, 1
      %p43 = scmp.ne.s32.totalorder %s38, %s40
      %p44 = scmp.eq.s32.totalorder %s9, 0
      %p45 = por %p43, %p44
      %p46 = scmp.ne.s32.totalorder %s38, %s40
      %p47 = scmp.eq.s32.totalorder %s14, 1
      %p48 = por %p46, %p47
      %p49 = scmp.ne.s32.totalorder %s40, %s41
      %p50 = scmp.eq.s32.totalorder %s14, 0
      %p51 = por %p49, %p50
      %p52 = scmp.ne.s32.totalorder %s40, %s41
      %p53 = scmp.eq.s32.totalorder %s15, 1
      %p54 = por %p52, %p53
      %p56 = scmp.ne.s32.totalorder %s41, %s55
      %p57 = scmp.eq.s32.totalorder %s15, 0
      %p58 = por %p56, %p57
      %p59 = scmp.le.s32.totalorder 1, %s9
      %p60 = scmp.lt.s32.totalorder %s9, 3
      %p61 = pnand %p59, %p60
      %p62 = pneg %p61
      // Predicated region
      $region9: #{tpu_custom_call.1} parent=5 // pred_check
        _
      $region10: #{tpu_custom_call.1} parent=5 // pred_check_branch
        %64 = sbr.rel (%p61) target = $region12
      $region11: #{tpu_custom_call.1} parent=5 // pred_region
        %s65 = ssub.s32 %s9, 1
        // Predicated region
        $region13: #{tpu_custom_call.1} parent=11 // pred_check
          %p66 = pneg %p30
        $region14: #{tpu_custom_call.1} parent=11 // pred_check_branch
          %68 = sbr.rel (%p66) target = $region16
        $region15: #{tpu_custom_call.1} parent=11 // pred_region
          %s70 = ssub.s32 128, 128
          %71 = vsyncadd [#allocation3], %s70
          %s73 = sshll.u32 [#allocation2], 4
          %s74 = int_to_ptr.vmem [resolvable:$true] %s73
          %76 = dma.hbm_to_vmem [thread:$0]  %s0, 128, %s74, [#allocation3]
        $region16: #{tpu_custom_call.1} parent=11 // pred_fallthru
          _
      $region12: #{tpu_custom_call.1} parent=5 // pred_fallthru
        _
      %p77 = scmp.lt.s32.totalorder %s9, 2
      // Predicated region
      $region17: #{tpu_custom_call.1} parent=5 // pred_check
        %p78 = pneg %p77
      $region18: #{tpu_custom_call.1} parent=5 // pred_check_branch
        %80 = sbr.rel (%p78) target = $region20
      $region19: #{tpu_custom_call.1} parent=5 // pred_region
        _
      $region20: #{tpu_custom_call.1} parent=5 // pred_fallthru
        _
      %p81 = scmp.le.s32.totalorder 1, %s9
      %p82 = scmp.lt.s32.totalorder %s9, 3
      %p83 = pnand %p81, %p82
      %p84 = pneg %p83
      // Predicated region
      $region21: #{tpu_custom_call.1} parent=5 // pred_check
        _
      $region22: #{tpu_custom_call.1} parent=5 // pred_check_branch
        %86 = sbr.rel (%p83) target = $region24
      $region23: #{tpu_custom_call.1} parent=5 // pred_region
        %s87 = ssub.s32 %s9, 1
        // Predicated region
        $region25: #{tpu_custom_call.1} parent=23 // pred_check
          %p88 = pneg %p30
        $region26: #{tpu_custom_call.1} parent=23 // pred_check_branch
          %90 = sbr.rel (%p88) target = $region28
        $region27: #{tpu_custom_call.1} parent=23 // pred_region
          %91 = dma.done [#allocation3], 128
        $region28: #{tpu_custom_call.1} parent=23 // pred_fallthru
          _
        %p92 = pneg %p30
        %p93 = pneg %p27
        %p94 = pneg %p51
        %p95 = pneg %p48
        %v96 = vld [vmem:[#allocation2] sm:$0xff]
        %v97 = vadd.f32 %v96, 1.0
        %98 = vst [vmem:[#allocation5] sm:$0xff] %v97
        // Predicated region
        $region29: #{tpu_custom_call.1} parent=23 // pred_check
          %p99 = pneg %p48
        $region30: #{tpu_custom_call.1} parent=23 // pred_check_branch
          %101 = sbr.rel (%p99) target = $region32
        $region31: #{tpu_custom_call.1} parent=23 // pred_region
          %s103 = ssub.s32 128, 128
          %104 = vsyncadd [#allocation4], %s103
          %s106 = sshll.u32 [#allocation5], 4
          %s107 = int_to_ptr.vmem [resolvable:$true] %s106
          %109 = dma.vmem_to_hbm [thread:$0]  %s107, 128, %s1, [#allocation4]
        $region32: #{tpu_custom_call.1} parent=23 // pred_fallthru
          _
        // Predicated region
        $region33: #{tpu_custom_call.1} parent=23 // pred_check
          %p110 = pneg %p48
        $region34: #{tpu_custom_call.1} parent=23 // pred_check_branch
          %112 = sbr.rel (%p110) target = $region36
        $region35: #{tpu_custom_call.1} parent=23 // pred_region
          %113 = dma.done [#allocation4], 128
        $region36: #{tpu_custom_call.1} parent=23 // pred_fallthru
          _
      $region24: #{tpu_custom_call.1} parent=5 // pred_fallthru
        _
      %p114 = scmp.le.s32.totalorder 2, %s9
      // Predicated region
      $region37: #{tpu_custom_call.1} parent=5 // pred_check
        %p115 = pneg %p114
      $region38: #{tpu_custom_call.1} parent=5 // pred_check_branch
        %117 = sbr.rel (%p115) target = $region40
      $region39: #{tpu_custom_call.1} parent=5 // pred_region
        %s118 = ssub.s32 %s9, 2
      $region40: #{tpu_custom_call.1} parent=5 // pred_fallthru
        _
    $region6: #{tpu_custom_call.1} parent=1 // loop_footer
      %s13 = sadd.s32 1, %s9
    $region7: #{tpu_custom_call.1} parent=1 // loop_footer_branch
      %8 = sbr.rel target = $region3
    $region8: #{tpu_custom_call.1} parent=1 // loop_exit
      _
    %119 = vsyncpa [#allocation3], 1
    %s120 = scalar_lea.sflag [#allocation3], 1
    %121 = vsyncpa %s120, 1
    %122 = vsyncpa [#allocation4], 1
    %s123 = scalar_lea.sflag [#allocation4], 1
    %124 = vsyncpa %s123, 1

// kernel: _lstm_lm_forward_impl.3
$region0: #{_lstm_lm_forward_impl.3}
  #allocation0 [shape = 'u32[]', space=smem, size = 0x4, offset = 0x4, fixed_abs, tag = 'smem constant byte address 0x4 - core index']
  #allocation1 [shape = 'u32[144,128]{1,0:T(1,128)}', space=vmem, size = 0x12000, scoped, tag = 'internal scratch']
  %s0 = inlined_call_operand.vmem [shape: f32[8,8,32], index: 0, kind: input, shape index: {}]
  %s1 = inlined_call_operand.vmem [shape: f32[32,128], index: 1, kind: input, shape index: {}]
  %s2 = inlined_call_operand.vmem [shape: f32[1,128], index: 2, kind: input, shape index: {}]
  %s3 = inlined_call_operand.vmem [shape: f32[8,8,128], index: 3, kind: output, shape index: {}]
  %s4 = sld [smem:[#allocation0]]
  $region22: #{_lstm_lm_forward_impl.3} parent=0
    _
  %s6 = ssub.s32 1, %s4
  %s7 = scalar_select 0, %s6, %s4
  // Predicated region
  $region2: #{_lstm_lm_forward_impl.3} parent=0 // pred_check
    _
  $region3: #{_lstm_lm_forward_impl.3} parent=0 // pred_check_branch
    %9 = sbr.rel (0) target = $region5
  $region4: #{_lstm_lm_forward_impl.3} parent=0 // pred_region
    _
  $region5: #{_lstm_lm_forward_impl.3} parent=0 // pred_fallthru
    _
  // Predicated region
  $region6: #{_lstm_lm_forward_impl.3} parent=0 // pred_check
    _
  $region7: #{_lstm_lm_forward_impl.3} parent=0 // pred_check_branch
    %11 = sbr.rel (0) target = $region9
  $region8: #{_lstm_lm_forward_impl.3} parent=0 // pred_region
    _
  $region9: #{_lstm_lm_forward_impl.3} parent=0 // pred_fallthru
    _
  // Predicated region
  $region10: #{_lstm_lm_forward_impl.3} parent=0 // pred_check
    _
  $region11: #{_lstm_lm_forward_impl.3} parent=0 // pred_check_branch
    %13 = sbr.rel (0) target = $region13
  $region12: #{_lstm_lm_forward_impl.3} parent=0 // pred_region
    _
  $region13: #{_lstm_lm_forward_impl.3} parent=0 // pred_fallthru
    _
  %v14 = vld [vmem:[%s1] sm:$0xff]
  %v15 = vld [vmem:[%s1 + $0x8] sm:$0xff]
  %v16 = vld [vmem:[%s1 + $0x10] sm:$0xff]
  %v17 = vld [vmem:[%s1 + $0x18] sm:$0xff]
  %v18 = vld [vmem:[%s0] sm:$0xff]
  %v19 = vld [vmem:[%s0 + $0x8] sm:$0xff]
  %v20 = vld [vmem:[%s0 + $0x10] sm:$0xff]
  %v21 = vld [vmem:[%s0 + $0x18] sm:$0xff]
  %v22 = vld [vmem:[%s0 + $0x20] sm:$0xff]
  %v23 = vld [vmem:[%s0 + $0x28] sm:$0xff]
  %v24 = vld [vmem:[%s0 + $0x30] sm:$0xff]
  %v25 = vld [vmem:[%s0 + $0x38] sm:$0xff]
  %v26 = vld [vmem:[%s2] sm:$0x1]
  %v28 = vlaneseq
  %v29 = vshrl.u32 %v28, 7
  %v30 = vsub.s32 0, %v29
  %v31 = vrot.slane %v26, %v30
  %vm33 = vcmask 261120
  %v35 = vsel %vm33, %v18, 0
  %v38 = vsel %vm33, %v19, 0
  %v41 = vsel %vm33, %v20, 0
  %v44 = vsel %vm33, %v21, 0
  %v47 = vsel %vm33, %v22, 0
  %v50 = vsel %vm33, %v23, 0
  %v53 = vsel %vm33, %v24, 0
  %v56 = vsel %vm33, %v25, 0
  %58 = vmatprep.subr.mxu0 0.0
  %59 = vmatpush1.msra.mxu0 0.0
  %60 = vmatprep.subr.mxu0 0.0
  %61 = vmatpush1.msra.mxu0 0.0
  %62 = vmatprep.subr.mxu0 0.0
  %63 = vmatpush1.msra.mxu0 0.0
  %64 = vmatprep.subr.mxu0 0.0
  %65 = vmatpush1.msra.mxu0 0.0
  %66 = vmatprep.subr.mxu0 0.0
  %67 = vmatpush1.msra.mxu0 0.0
  %68 = vmatprep.subr.mxu0 0.0
  %69 = vmatpush1.msra.mxu0 0.0
  %70 = vmatprep.subr.mxu0 0.0
  %71 = vmatpush1.msra.mxu0 0.0
  %72 = vmatprep.subr.mxu0 0.0
  %73 = vmatpush1.msra.mxu0 0.0
  %74 = vmatprep.subr.mxu0 0.0
  %75 = vmatpush1.msra.mxu0 0.0
  %76 = vmatprep.subr.mxu0 0.0
  %77 = vmatpush1.msra.mxu0 0.0
  %78 = vmatprep.subr.mxu0 0.0
  %79 = vmatpush1.msra.mxu0 0.0
  %80 = vmatprep.subr.mxu0 0.0
  %81 = vmatpush1.msra.mxu0 0.0
  %82 = vmatprep.subr.mxu0 0.0
  %83 = vmatpush1.msra.mxu0 %v17
  %84 = vmatprep.subr.mxu0 0.0
  %85 = vmatpush1.msra.mxu0 %v16
  %86 = vmatprep.subr.mxu0 0.0
  %87 = vmatpush1.msra.mxu0 %v15
  %88 = vmatprep.subr.mxu0 0.0
  %89 = vmatpush1.msra.mxu0 %v14
  %90 = vmatprep.subr.mxu0 0.0
  %91 = vmatpush2.msra.mxu0 0.0
  %92 = vmatprep.subr.mxu0 0.0
  %93 = vmatpush2.msra.mxu0 0.0
  %94 = vmatprep.subr.mxu0 0.0
  %95 = vmatpush2.msra.mxu0 0.0
  %96 = vmatprep.subr.mxu0 0.0
  %97 = vmatpush2.msra.mxu0 0.0
  %98 = vmatprep.subr.mxu0 0.0
  %99 = vmatpush2.msra.mxu0 0.0
  %100 = vmatprep.subr.mxu0 0.0
  %101 = vmatpush2.msra.mxu0 0.0
  %102 = vmatprep.subr.mxu0 0.0
  %103 = vmatpush2.msra.mxu0 0.0
  %104 = vmatprep.subr.mxu0 0.0
  %105 = vmatpush2.msra.mxu0 0.0
  %106 = vmatprep.subr.mxu0 0.0
  %107 = vmatpush2.msra.mxu0 0.0
  %108 = vmatprep.subr.mxu0 0.0
  %109 = vmatpush2.msra.mxu0 0.0
  %110 = vmatprep.subr.mxu0 0.0
  %111 = vmatpush2.msra.mxu0 0.0
  %112 = vmatprep.subr.mxu0 0.0
  %113 = vmatpush2.msra.mxu0 0.0
  %114 = vmatprep.subr.mxu0 0.0
  %115 = vmatpush2.msra.mxu0 0.0
  %116 = vmatprep.subr.mxu0 0.0
  %117 = vmatpush2.msra.mxu0 0.0
  %118 = vmatprep.subr.mxu0 0.0
  %119 = vmatpush2.msra.mxu0 0.0
  %120 = vmatprep.subr.mxu0 0.0
  %121 = vmatpush2.msra.mxu0 0.0
  %122 = vmatprep.mubr.f32.mxu0 0.0
  %123 = vmatmul.mubr.f32.gmra.mxu0 %v35
  %v124 = vpop.f32.mrf.mxu0
  %v125 = vadd.f32 %v31, %v124
  %v126 = vpop.f32.mrf.mxu0
  %127 = vmatprep.mubr.f32.mxu0 0.0
  %128 = vmatmul.mubr.f32.gmra.mxu0 %v38
  %v129 = vpop.f32.mrf.mxu0
  %v130 = vadd.f32 %v31, %v129
  %v131 = vpop.f32.mrf.mxu0
  %132 = vmatprep.mubr.f32.mxu0 0.0
  %133 = vmatmul.mubr.f32.gmra.mxu0 %v41
  %v134 = vpop.f32.mrf.mxu0
  %v135 = vadd.f32 %v31, %v134
  %v136 = vpop.f32.mrf.mxu0
  %137 = vmatprep.mubr.f32.mxu0 0.0
  %138 = vmatmul.mubr.f32.gmra.mxu0 %v44
  %v139 = vpop.f32.mrf.mxu0
  %v140 = vadd.f32 %v31, %v139
  %v141 = vpop.f32.mrf.mxu0
  %142 = vmatprep.mubr.f32.mxu0 0.0
  %143 = vmatmul.mubr.f32.gmra.mxu0 %v47
  %v144 = vpop.f32.mrf.mxu0
  %v145 = vadd.f32 %v31, %v144
  %v146 = vpop.f32.mrf.mxu0
  %147 = vmatprep.mubr.f32.mxu0 0.0
  %148 = vmatmul.mubr.f32.gmra.mxu0 %v50
  %v149 = vpop.f32.mrf.mxu0
  %v150 = vadd.f32 %v31, %v149
  %v151 = vpop.f32.mrf.mxu0
  %152 = vmatprep.mubr.f32.mxu0 0.0
  %153 = vmatmul.mubr.f32.gmra.mxu0 %v53
  %v154 = vpop.f32.mrf.mxu0
  %v155 = vadd.f32 %v31, %v154
  %v156 = vpop.f32.mrf.mxu0
  %157 = vmatprep.mubr.f32.mxu0 0.0
  %158 = vmatmul.mubr.f32.gmra.mxu0 %v56
  %v159 = vpop.f32.mrf.mxu0
  %v160 = vadd.f32 %v31, %v159
  %v161 = vpop.f32.mrf.mxu0
  %162 = vdwg.mxu0
  %v164 = vcombine.high %v125, %v125
  %v166 = vunpack.c.l.s4 1966171168
  %v167 = vunpack.c.0.s8 %v166
  %v168 = vlaneseq
  %v169 = vshrl.u32 %v168, 7
  %v170 = vsub.s32 %v167, %v169
  %v171 = vrot.slane %v125, %v170
  %v173 = vunpack.c.l.s4 1966171168
  %v174 = vunpack.c.0.s8 %v173
  %v175 = vlaneseq
  %v176 = vshrl.u32 %v175, 7
  %v177 = vsub.s32 %v174, %v176
  %v178 = vrot.slane %v164, %v177
  %v179 = vcombine.high %v171, %v171
  %v180 = vcombine.high %v178, %v178
  %v182 = vunpack.c.l.s4 1966171168
  %v183 = vunpack.c.0.s8 %v182
  %v184 = vlaneseq
  %v185 = vshrl.u32 %v184, 7
  %v186 = vsub.s32 %v183, %v185
  %v187 = vrot.slane %v171, %v186
  %v189 = vunpack.c.l.s4 1966171168
  %v190 = vunpack.c.0.s8 %v189
  %v191 = vlaneseq
  %v192 = vshrl.u32 %v191, 7
  %v193 = vsub.s32 %v190, %v192
  %v194 = vrot.slane %v178, %v193
  %v196 = vunpack.c.l.s4 1966171168
  %v197 = vunpack.c.0.s8 %v196
  %v198 = vlaneseq
  %v199 = vshrl.u32 %v198, 7
  %v200 = vsub.s32 %v197, %v199
  %v201 = vrot.slane %v179, %v200
  %v203 = vunpack.c.l.s4 1966171168
  %v204 = vunpack.c.0.s8 %v203
  %v205 = vlaneseq
  %v206 = vshrl.u32 %v205, 7
  %v207 = vsub.s32 %v204, %v206
  %v208 = vrot.slane %v180, %v207
  %v209 = vcombine.high %v187, %v187
  %v210 = vcombine.high %v194, %v194
  %v211 = vcombine.high %v201, %v201
  %v212 = vcombine.high %v208, %v208
  %221 = vst [vmem:[%s3] sm:$0x1] %v187
  %222 = vst [vmem:[%s3 + $0x8] sm:$0x1] %v201
  %223 = vst [vmem:[%s3 + $0x10] sm:$0x1] %v209
  %224 = vst [vmem:[%s3 + $0x18] sm:$0x1] %v211
  %225 = vst [vmem:[%s3 + $0x20] sm:$0x1] %v194
  %226 = vst [vmem:[%s3 + $0x28] sm:$0x1] %v208
  %227 = vst [vmem:[%s3 + $0x30] sm:$0x1] %v210
  %228 = vst [vmem:[%s3 + $0x38] sm:$0x1] %v212
  %v230 = vcombine.high %v130, %v130
  %v232 = vunpack.c.l.s4 1966171168
  %v233 = vunpack.c.0.s8 %v232
  %v234 = vlaneseq
  %v235 = vshrl.u32 %v234, 7
  %v236 = vsub.s32 %v233, %v235
  %v237 = vrot.slane %v130, %v236
  %v239 = vunpack.c.l.s4 1966171168
  %v240 = vunpack.c.0.s8 %v239
  %v241 = vlaneseq
  %v242 = vshrl.u32 %v241, 7
  %v243 = vsub.s32 %v240, %v242
  %v244 = vrot.slane %v230, %v243
  %v245 = vcombine.high %v237, %v237
  %v246 = vcombine.high %v244, %v244
  %v248 = vunpack.c.l.s4 1966171168
  %v249 = vunpack.c.0.s8 %v248
  %v250 = vlaneseq
  %v251 = vshrl.u32 %v250, 7
  %v252 = vsub.s32 %v249, %v251
  %v253 = vrot.slane %v237, %v252
  %v255 = vunpack.c.l.s4 1966171168
  %v256 = vunpack.c.0.s8 %v255
  %v257 = vlaneseq
  %v258 = vshrl.u32 %v257, 7
  %v259 = vsub.s32 %v256, %v258
  %v260 = vrot.slane %v244, %v259
  %v262 = vunpack.c.l.s4 1966171168
  %v263 = vunpack.c.0.s8 %v262
  %v264 = vlaneseq
  %v265 = vshrl.u32 %v264, 7
  %v266 = vsub.s32 %v263, %v265
  %v267 = vrot.slane %v245, %v266
  %v269 = vunpack.c.l.s4 1966171168
  %v270 = vunpack.c.0.s8 %v269
  %v271 = vlaneseq
  %v272 = vshrl.u32 %v271, 7
  %v273 = vsub.s32 %v270, %v272
  %v274 = vrot.slane %v246, %v273
  %v275 = vcombine.high %v253, %v253
  %v276 = vcombine.high %v260, %v260
  %v277 = vcombine.high %v267, %v267
  %v278 = vcombine.high %v274, %v274
  %287 = vst [vmem:[%s3 + $0x1] sm:$0x1] %v253
  %288 = vst [vmem:[%s3 + $0x9] sm:$0x1] %v267
  %289 = vst [vmem:[%s3 + $0x11] sm:$0x1] %v275
  %290 = vst [vmem:[%s3 + $0x19] sm:$0x1] %v277
  %291 = vst [vmem:[%s3 + $0x21] sm:$0x1] %v260
  %292 = vst [vmem:[%s3 + $0x29] sm:$0x1] %v274
  %293 = vst [vmem:[%s3 + $0x31] sm:$0x1] %v276
  %294 = vst [vmem:[%s3 + $0x39] sm:$0x1] %v278
  %v296 = vcombine.high %v135, %v135
  %v298 = vunpack.c.l.s4 1966171168
  %v299 = vunpack.c.0.s8 %v298
  %v300 = vlaneseq
  %v301 = vshrl.u32 %v300, 7
  %v302 = vsub.s32 %v299, %v301
  %v303 = vrot.slane %v135, %v302
  %v305 = vunpack.c.l.s4 1966171168
  %v306 = vunpack.c.0.s8 %v305
  %v307 = vlaneseq
  %v308 = vshrl.u32 %v307, 7
  %v309 = vsub.s32 %v306, %v308
  %v310 = vrot.slane %v296, %v309
  %v311 = vcombine.high %v303, %v303
  %v312 = vcombine.high %v310, %v310
  %v314 = vunpack.c.l.s4 1966171168
  %v315 = vunpack.c.0.s8 %v314
  %v316 = vlaneseq
  %v317 = vshrl.u32 %v316, 7
  %v318 = vsub.s32 %v315, %v317
  %v319 = vrot.slane %v303, %v318
  %v321 = vunpack.c.l.s4 1966171168
  %v322 = vunpack.c.0.s8 %v321
  %v323 = vlaneseq
  %v324 = vshrl.u32 %v323, 7
  %v325 = vsub.s32 %v322, %v324
  %v326 = vrot.slane %v310, %v325
  %v328 = vunpack.c.l.s4 1966171168
  %v329 = vunpack.c.0.s8 %v328
  %v330 = vlaneseq
  %v331 = vshrl.u32 %v330, 7
  %v332 = vsub.s32 %v329, %v331
  %v333 = vrot.slane %v311, %v332
  %v335 = vunpack.c.l.s4 1966171168
  %v336 = vunpack.c.0.s8 %v335
  %v337 = vlaneseq
  %v338 = vshrl.u32 %v337, 7
  %v339 = vsub.s32 %v336, %v338
  %v340 = vrot.slane %v312, %v339
  %v341 = vcombine.high %v319, %v319
  %v342 = vcombine.high %v326, %v326
  %v343 = vcombine.high %v333, %v333
  %v344 = vcombine.high %v340, %v340
  %353 = vst [vmem:[%s3 + $0x2] sm:$0x1] %v319
  %354 = vst [vmem:[%s3 + $0xa] sm:$0x1] %v333
  %355 = vst [vmem:[%s3 + $0x12] sm:$0x1] %v341
  %356 = vst [vmem:[%s3 + $0x1a] sm:$0x1] %v343
  %357 = vst [vmem:[%s3 + $0x22] sm:$0x1] %v326
  %358 = vst [vmem:[%s3 + $0x2a] sm:$0x1] %v340
  %359 = vst [vmem:[%s3 + $0x32] sm:$0x1] %v342
  %360 = vst [vmem:[%s3 + $0x3a] sm:$0x1] %v344
  %v362 = vcombine.high %v140, %v140
  %v364 = vunpack.c.l.s4 1966171168
  %v365 = vunpack.c.0.s8 %v364
  %v366 = vlaneseq
  %v367 = vshrl.u32 %v366, 7
  %v368 = vsub.s32 %v365, %v367
  %v369 = vrot.slane %v140, %v368
  %v371 = vunpack.c.l.s4 1966171168
  %v372 = vunpack.c.0.s8 %v371
  %v373 = vlaneseq
  %v374 = vshrl.u32 %v373, 7
  %v375 = vsub.s32 %v372, %v374
  %v376 = vrot.slane %v362, %v375
  %v377 = vcombine.high %v369, %v369
  %v378 = vcombine.high %v376, %v376
  %v380 = vunpack.c.l.s4 1966171168
  %v381 = vunpack.c.0.s8 %v380
  %v382 = vlaneseq
  %v383 = vshrl.u32 %v382, 7
  %v384 = vsub.s32 %v381, %v383
  %v385 = vrot.slane %v369, %v384
  %v387 = vunpack.c.l.s4 1966171168
  %v388 = vunpack.c.0.s8 %v387
  %v389 = vlaneseq
  %v390 = vshrl.u32 %v389, 7
  %v391 = vsub.s32 %v388, %v390
  %v392 = vrot.slane %v376, %v391
  %v394 = vunpack.c.l.s4 1966171168
  %v395 = vunpack.c.0.s8 %v394
  %v396 = vlaneseq
  %v397 = vshrl.u32 %v396, 7
  %v398 = vsub.s32 %v395, %v397
  %v399 = vrot.slane %v377, %v398
  %v401 = vunpack.c.l.s4 1966171168
  %v402 = vunpack.c.0.s8 %v401
  %v403 = vlaneseq
  %v404 = vshrl.u32 %v403, 7
  %v405 = vsub.s32 %v402, %v404
  %v406 = vrot.slane %v378, %v405
  %v407 = vcombine.high %v385, %v385
  %v408 = vcombine.high %v392, %v392
  %v409 = vcombine.high %v399, %v399
  %v410 = vcombine.high %v406, %v406
  %419 = vst [vmem:[%s3 + $0x3] sm:$0x1] %v385
  %420 = vst [vmem:[%s3 + $0xb] sm:$0x1] %v399
  %421 = vst [vmem:[%s3 + $0x13] sm:$0x1] %v407
  %422 = vst [vmem:[%s3 + $0x1b] sm:$0x1] %v409
  %423 = vst [vmem:[%s3 + $0x23] sm:$0x1] %v392
  %424 = vst [vmem:[%s3 + $0x2b] sm:$0x1] %v406
  %425 = vst [vmem:[%s3 + $0x33] sm:$0x1] %v408
  %426 = vst [vmem:[%s3 + $0x3b] sm:$0x1] %v410
  %v428 = vcombine.high %v145, %v145
  %v430 = vunpack.c.l.s4 1966171168
  %v431 = vunpack.c.0.s8 %v430
  %v432 = vlaneseq
  %v433 = vshrl.u32 %v432, 7
  %v434 = vsub.s32 %v431, %v433
  %v435 = vrot.slane %v145, %v434
  %v437 = vunpack.c.l.s4 1966171168
  %v438 = vunpack.c.0.s8 %v437
  %v439 = vlaneseq
  %v440 = vshrl.u32 %v439, 7
  %v441 = vsub.s32 %v438, %v440
  %v442 = vrot.slane %v428, %v441
  %v443 = vcombine.high %v435, %v435
  %v444 = vcombine.high %v442, %v442
  %v446 = vunpack.c.l.s4 1966171168
  %v447 = vunpack.c.0.s8 %v446
  %v448 = vlaneseq
  %v449 = vshrl.u32 %v448, 7
  %v450 = vsub.s32 %v447, %v449
  %v451 = vrot.slane %v435, %v450
  %v453 = vunpack.c.l.s4 1966171168
  %v454 = vunpack.c.0.s8 %v453
  %v455 = vlaneseq
  %v456 = vshrl.u32 %v455, 7
  %v457 = vsub.s32 %v454, %v456
  %v458 = vrot.slane %v442, %v457
  %v460 = vunpack.c.l.s4 1966171168
  %v461 = vunpack.c.0.s8 %v460
  %v462 = vlaneseq
  %v463 = vshrl.u32 %v462, 7
  %v464 = vsub.s32 %v461, %v463
  %v465 = vrot.slane %v443, %v464
  %v467 = vunpack.c.l.s4 1966171168
  %v468 = vunpack.c.0.s8 %v467
  %v469 = vlaneseq
  %v470 = vshrl.u32 %v469, 7
  %v471 = vsub.s32 %v468, %v470
  %v472 = vrot.slane %v444, %v471
  %v473 = vcombine.high %v451, %v451
  %v474 = vcombine.high %v458, %v458
  %v475 = vcombine.high %v465, %v465
  %v476 = vcombine.high %v472, %v472
  %485 = vst [vmem:[%s3 + $0x4] sm:$0x1] %v451
  %486 = vst [vmem:[%s3 + $0xc] sm:$0x1] %v465
  %487 = vst [vmem:[%s3 + $0x14] sm:$0x1] %v473
  %488 = vst [vmem:[%s3 + $0x1c] sm:$0x1] %v475
  %489 = vst [vmem:[%s3 + $0x24] sm:$0x1] %v458
  %490 = vst [vmem:[%s3 + $0x2c] sm:$0x1] %v472
  %491 = vst [vmem:[%s3 + $0x34] sm:$0x1] %v474
  %492 = vst [vmem:[%s3 + $0x3c] sm:$0x1] %v476
  %v494 = vcombine.high %v150, %v150
  %v496 = vunpack.c.l.s4 1966171168
  %v497 = vunpack.c.0.s8 %v496
  %v498 = vlaneseq
  %v499 = vshrl.u32 %v498, 7
  %v500 = vsub.s32 %v497, %v499
  %v501 = vrot.slane %v150, %v500
  %v503 = vunpack.c.l.s4 1966171168
  %v504 = vunpack.c.0.s8 %v503
  %v505 = vlaneseq
  %v506 = vshrl.u32 %v505, 7
  %v507 = vsub.s32 %v504, %v506
  %v508 = vrot.slane %v494, %v507
  %v509 = vcombine.high %v501, %v501
  %v510 = vcombine.high %v508, %v508
  %v512 = vunpack.c.l.s4 1966171168
  %v513 = vunpack.c.0.s8 %v512
  %v514 = vlaneseq
  %v515 = vshrl.u32 %v514, 7
  %v516 = vsub.s32 %v513, %v515
  %v517 = vrot.slane %v501, %v516
  %v519 = vunpack.c.l.s4 1966171168
  %v520 = vunpack.c.0.s8 %v519
  %v521 = vlaneseq
  %v522 = vshrl.u32 %v521, 7
  %v523 = vsub.s32 %v520, %v522
  %v524 = vrot.slane %v508, %v523
  %v526 = vunpack.c.l.s4 1966171168
  %v527 = vunpack.c.0.s8 %v526
  %v528 = vlaneseq
  %v529 = vshrl.u32 %v528, 7
  %v530 = vsub.s32 %v527, %v529
  %v531 = vrot.slane %v509, %v530
  %v533 = vunpack.c.l.s4 1966171168
  %v534 = vunpack.c.0.s8 %v533
  %v535 = vlaneseq
  %v536 = vshrl.u32 %v535, 7
  %v537 = vsub.s32 %v534, %v536
  %v538 = vrot.slane %v510, %v537
  %v539 = vcombine.high %v517, %v517
  %v540 = vcombine.high %v524, %v524
  %v541 = vcombine.high %v531, %v531
  %v542 = vcombine.high %v538, %v538
  %551 = vst [vmem:[%s3 + $0x5] sm:$0x1] %v517
  %552 = vst [vmem:[%s3 + $0xd] sm:$0x1] %v531
  %553 = vst [vmem:[%s3 + $0x15] sm:$0x1] %v539
  %554 = vst [vmem:[%s3 + $0x1d] sm:$0x1] %v541
  %555 = vst [vmem:[%s3 + $0x25] sm:$0x1] %v524
  %556 = vst [vmem:[%s3 + $0x2d] sm:$0x1] %v538
  %557 = vst [vmem:[%s3 + $0x35] sm:$0x1] %v540
  %558 = vst [vmem:[%s3 + $0x3d] sm:$0x1] %v542
  %v560 = vcombine.high %v155, %v155
  %v562 = vunpack.c.l.s4 1966171168
  %v563 = vunpack.c.0.s8 %v562
  %v564 = vlaneseq
  %v565 = vshrl.u32 %v564, 7
  %v566 = vsub.s32 %v563, %v565
  %v567 = vrot.slane %v155, %v566
  %v569 = vunpack.c.l.s4 1966171168
  %v570 = vunpack.c.0.s8 %v569
  %v571 = vlaneseq
  %v572 = vshrl.u32 %v571, 7
  %v573 = vsub.s32 %v570, %v572
  %v574 = vrot.slane %v560, %v573
  %v575 = vcombine.high %v567, %v567
  %v576 = vcombine.high %v574, %v574
  %v578 = vunpack.c.l.s4 1966171168
  %v579 = vunpack.c.0.s8 %v578
  %v580 = vlaneseq
  %v581 = vshrl.u32 %v580, 7
  %v582 = vsub.s32 %v579, %v581
  %v583 = vrot.slane %v567, %v582
  %v585 = vunpack.c.l.s4 1966171168
  %v586 = vunpack.c.0.s8 %v585
  %v587 = vlaneseq
  %v588 = vshrl.u32 %v587, 7
  %v589 = vsub.s32 %v586, %v588
  %v590 = vrot.slane %v574, %v589
  %v592 = vunpack.c.l.s4 1966171168
  %v593 = vunpack.c.0.s8 %v592
  %v594 = vlaneseq
  %v595 = vshrl.u32 %v594, 7
  %v596 = vsub.s32 %v593, %v595
  %v597 = vrot.slane %v575, %v596
  %v599 = vunpack.c.l.s4 1966171168
  %v600 = vunpack.c.0.s8 %v599
  %v601 = vlaneseq
  %v602 = vshrl.u32 %v601, 7
  %v603 = vsub.s32 %v600, %v602
  %v604 = vrot.slane %v576, %v603
  %v605 = vcombine.high %v583, %v583
  %v606 = vcombine.high %v590, %v590
  %v607 = vcombine.high %v597, %v597
  %v608 = vcombine.high %v604, %v604
  %617 = vst [vmem:[%s3 + $0x6] sm:$0x1] %v583
  %618 = vst [vmem:[%s3 + $0xe] sm:$0x1] %v597
  %619 = vst [vmem:[%s3 + $0x16] sm:$0x1] %v605
  %620 = vst [vmem:[%s3 + $0x1e] sm:$0x1] %v607
  %621 = vst [vmem:[%s3 + $0x26] sm:$0x1] %v590
  %622 = vst [vmem:[%s3 + $0x2e] sm:$0x1] %v604
  %623 = vst [vmem:[%s3 + $0x36] sm:$0x1] %v606
  %624 = vst [vmem:[%s3 + $0x3e] sm:$0x1] %v608
  %v626 = vcombine.high %v160, %v160
  %v628 = vunpack.c.l.s4 1966171168
  %v629 = vunpack.c.0.s8 %v628
  %v630 = vlaneseq
  %v631 = vshrl.u32 %v630, 7
  %v632 = vsub.s32 %v629, %v631
  %v633 = vrot.slane %v160, %v632
  %v635 = vunpack.c.l.s4 1966171168
  %v636 = vunpack.c.0.s8 %v635
  %v637 = vlaneseq
  %v638 = vshrl.u32 %v637, 7
  %v639 = vsub.s32 %v636, %v638
  %v640 = vrot.slane %v626, %v639
  %v641 = vcombine.high %v633, %v633
  %v642 = vcombine.high %v640, %v640
  %v644 = vunpack.c.l.s4 1966171168
  %v645 = vunpack.c.0.s8 %v644
  %v646 = vlaneseq
  %v647 = vshrl.u32 %v646, 7
  %v648 = vsub.s32 %v645, %v647
  %v649 = vrot.slane %v633, %v648
  %v651 = vunpack.c.l.s4 1966171168
  %v652 = vunpack.c.0.s8 %v651
  %v653 = vlaneseq
  %v654 = vshrl.u32 %v653, 7
  %v655 = vsub.s32 %v652, %v654
  %v656 = vrot.slane %v640, %v655
  %v658 = vunpack.c.l.s4 1966171168
  %v659 = vunpack.c.0.s8 %v658
  %v660 = vlaneseq
  %v661 = vshrl.u32 %v660, 7
  %v662 = vsub.s32 %v659, %v661
  %v663 = vrot.slane %v641, %v662
  %v665 = vunpack.c.l.s4 1966171168
  %v666 = vunpack.c.0.s8 %v665
  %v667 = vlaneseq
  %v668 = vshrl.u32 %v667, 7
  %v669 = vsub.s32 %v666, %v668
  %v670 = vrot.slane %v642, %v669
  %v671 = vcombine.high %v649, %v649
  %v672 = vcombine.high %v656, %v656
  %v673 = vcombine.high %v663, %v663
  %v674 = vcombine.high %v670, %v670
  %683 = vst [vmem:[%s3 + $0x7] sm:$0x1] %v649
  %684 = vst [vmem:[%s3 + $0xf] sm:$0x1] %v663
  %685 = vst [vmem:[%s3 + $0x17] sm:$0x1] %v671
  %686 = vst [vmem:[%s3 + $0x1f] sm:$0x1] %v673
  %687 = vst [vmem:[%s3 + $0x27] sm:$0x1] %v656
  %688 = vst [vmem:[%s3 + $0x2f] sm:$0x1] %v670
  %689 = vst [vmem:[%s3 + $0x37] sm:$0x1] %v672
  %690 = vst [vmem:[%s3 + $0x3f] sm:$0x1] %v674
  // Predicated region
  $region14: #{_lstm_lm_forward_impl.3} parent=0 // pred_check
    _
  $region15: #{_lstm_lm_forward_impl.3} parent=0 // pred_check_branch
    %692 = sbr.rel (0) target = $region17
  $region16: #{_lstm_lm_forward_impl.3} parent=0 // pred_region
    _
  $region17: #{_lstm_lm_forward_impl.3} parent=0 // pred_fallthru
    _
  // Predicated region
  $region18: #{_lstm_lm_forward_impl.3} parent=0 // pred_check
    _
  $region19: #{_lstm_lm_forward_impl.3} parent=0 // pred_check_branch
    %694 = sbr.rel (0) target = $region21
  $region20: #{_lstm_lm_forward_impl.3} parent=0 // pred_region
    _
  $region21: #{_lstm_lm_forward_impl.3} parent=0 // pred_fallthru
    _

// kernel: _lstm_lm_forward_impl.2
$region0: #{_lstm_lm_forward_impl.2}
  #allocation0 [shape = 'u32[]', space=smem, size = 0x4, offset = 0x4, fixed_abs, tag = 'smem constant byte address 0x4 - core index']
  #allocation1 [shape = 'u32[144,128]{1,0:T(1,128)}', space=vmem, size = 0x12000, scoped, tag = 'internal scratch']
  #allocation2 [shape = 'f32[2,8,32]{2,1,0:T(8,128)}', space=vmem, size = 0x2000, scoped, tag = 'scratch operand']
  #allocation3 [shape = 'f32[2,8,32]{2,1,0:T(8,128)}', space=vmem, size = 0x2000, scoped, tag = 'scratch operand']
  #allocation4 [shape = 'f32[4,8,128]{2,1,0:T(8,128)}', space=vmem, size = 0x4000, scoped, tag = 'scratch operand']
  %s0 = inlined_call_operand.vmem [shape: f32[8,8,32], index: 0, kind: input, shape index: {}]
  %s1 = inlined_call_operand.vmem [shape: f32[32,128], index: 1, kind: input, shape index: {}]
  %s2 = inlined_call_operand.vmem [shape: f32[32,128], index: 2, kind: input, shape index: {}]
  %s3 = inlined_call_operand.vmem [shape: f32[1,128], index: 3, kind: input, shape index: {}]
  %s4 = inlined_call_operand.vmem [shape: f32[32,128], index: 4, kind: input, shape index: {}]
  %s5 = inlined_call_operand.vmem [shape: f32[32,128], index: 5, kind: input, shape index: {}]
  %s6 = inlined_call_operand.vmem [shape: f32[1,128], index: 6, kind: input, shape index: {}]
  %s7 = inlined_call_operand.vmem [shape: f32[8,8,32], index: 7, kind: output, shape index: {0}]
  %s8 = inlined_call_operand.vmem [shape: f32[2,8,32], index: 8, kind: output, shape index: {1}]
  %s9 = inlined_call_operand.vmem [shape: f32[2,8,32], index: 9, kind: output, shape index: {2}]
  %10 = xla_tuple %s7, %s8, %s9
  %s11 = sld [smem:[#allocation0]]
  $region85: #{_lstm_lm_forward_impl.2} parent=0
    _
  %s13 = ssub.s32 1, %s11
  %s14 = scalar_select 0, %s13, %s11
  loop: start=0, step=1, limit=4
  $region2: #{_lstm_lm_forward_impl.2} parent=0 // loop_pre_header
    _
  $region3: #{_lstm_lm_forward_impl.2} parent=0 // loop_header
    %s16 = sphi 0, %s20
    %p17 = scmp.ge.s32.totalorder %s16, 4
    %s23 = sphi 0, %s35
    %s24 = sphi 0, %s31
    %s25 = sphi 0, %s23
    %s26 = sphi 0, %s24
    %s27 = sphi 0, %s25
    %s28 = sphi 0, %s26
    %s40 = sphi 0, %s42
    %s43 = sphi 0, %s40
    %s44 = sphi 0, %s43
    %s60 = sphi 0, %s44
    %s64 = sphi 0, %s64
    %s66 = sphi 0, %s64
    %s67 = sphi 0, %s66
    %s81 = sphi 0, %s67
    %s85 = sphi 0, %s85
    %s87 = sphi 0, %s85
    %s88 = sphi 0, %s87
    %s102 = sphi 0, %s88
    %s106 = sphi 0, %s106
    %s108 = sphi 0, %s106
    %s109 = sphi 0, %s108
    %s123 = sphi 0, %s109
    %s127 = sphi 0, %s127
    %s129 = sphi 0, %s127
    %s130 = sphi 0, %s129
    %s144 = sphi 0, %s130
    %s148 = sphi 0, %s148
    %s150 = sphi 0, %s148
    %s151 = sphi 0, %s150
    %s165 = sphi 0, %s151
    %s169 = sphi 0, %s169
    %s171 = sphi 0, %s169
    %s172 = sphi 0, %s171
    %s186 = sphi 0, %s172
    %s194 = sphi 0, %s196
    %s197 = sphi 0, %s194
    %s198 = sphi 0, %s197
    %s214 = sphi 0, %s198
    %s220 = sphi 0, %s222
    %s223 = sphi 0, %s220
    %s224 = sphi 0, %s223
    %s240 = sphi 0, %s224
    %s246 = sphi 0, %s248
    %s249 = sphi 0, %s246
    %s250 = sphi 0, %s249
    %s266 = sphi 0, %s250
  $region4: #{_lstm_lm_forward_impl.2} parent=0 // loop_header_branch
    %19 = sbr.rel (%p17) target = $region8
  $region5: #{_lstm_lm_forward_impl.2} parent=0 // loop_body
    %s21 = ssub.s32 %s16, 1
    %s22 = ssub.s32 %s16, 2
    %s29 = sadd.s32 1, %s24
    %p30 = scmp.ge.s32.totalorder %s29, 2
    %s31 = scalar_select %p30, 0, %s29
    %s32 = sadd.s32 1, %s23
    %s33 = scalar_select %p30, %s32, %s23
    %p34 = scmp.ge.s32.totalorder %s33, 1
    %s35 = scalar_select %p34, 0, %s33
    %s36 = ssub.s32 %s24, %s31
    %s37 = ssub.s32 %s23, %s35
    %s38 = sor.u32 %s36, %s37
    %p39 = scmp.eq.s32.totalorder %s38, 0
    %s41 = sadd.s32 %s40, 1
    %s42 = scalar_select %p39, %s40, %s41
    %p45 = pneg %p39
    %p46 = scmp.eq.s32.totalorder %s16, 1
    %p47 = por %p45, %p46
    %p48 = scmp.ne.s32.totalorder %s40, %s43
    %p49 = scmp.eq.s32.totalorder %s16, 0
    %p50 = por %p48, %p49
    %p51 = scmp.ne.s32.totalorder %s40, %s43
    %p52 = scmp.eq.s32.totalorder %s21, 1
    %p53 = por %p51, %p52
    %p54 = scmp.ne.s32.totalorder %s43, %s44
    %p55 = scmp.eq.s32.totalorder %s21, 0
    %p56 = por %p54, %p55
    %p57 = scmp.ne.s32.totalorder %s43, %s44
    %p58 = scmp.eq.s32.totalorder %s22, 1
    %p59 = por %p57, %p58
    %p61 = scmp.ne.s32.totalorder %s44, %s60
    %p62 = scmp.eq.s32.totalorder %s22, 0
    %p63 = por %p61, %p62
    %s65 = sadd.s32 %s64, 1
    %p68 = scmp.eq.s32.totalorder %s16, 1
    %p69 = scmp.ne.s32.totalorder %s64, %s66
    %p70 = scmp.eq.s32.totalorder %s16, 0
    %p71 = por %p69, %p70
    %p72 = scmp.ne.s32.totalorder %s64, %s66
    %p73 = scmp.eq.s32.totalorder %s21, 1
    %p74 = por %p72, %p73
    %p75 = scmp.ne.s32.totalorder %s66, %s67
    %p76 = scmp.eq.s32.totalorder %s21, 0
    %p77 = por %p75, %p76
    %p78 = scmp.ne.s32.totalorder %s66, %s67
    %p79 = scmp.eq.s32.totalorder %s22, 1
    %p80 = por %p78, %p79
    %p82 = scmp.ne.s32.totalorder %s67, %s81
    %p83 = scmp.eq.s32.totalorder %s22, 0
    %p84 = por %p82, %p83
    %s86 = sadd.s32 %s85, 1
    %p89 = scmp.eq.s32.totalorder %s16, 1
    %p90 = scmp.ne.s32.totalorder %s85, %s87
    %p91 = scmp.eq.s32.totalorder %s16, 0
    %p92 = por %p90, %p91
    %p93 = scmp.ne.s32.totalorder %s85, %s87
    %p94 = scmp.eq.s32.totalorder %s21, 1
    %p95 = por %p93, %p94
    %p96 = scmp.ne.s32.totalorder %s87, %s88
    %p97 = scmp.eq.s32.totalorder %s21, 0
    %p98 = por %p96, %p97
    %p99 = scmp.ne.s32.totalorder %s87, %s88
    %p100 = scmp.eq.s32.totalorder %s22, 1
    %p101 = por %p99, %p100
    %p103 = scmp.ne.s32.totalorder %s88, %s102
    %p104 = scmp.eq.s32.totalorder %s22, 0
    %p105 = por %p103, %p104
    %s107 = sadd.s32 %s106, 1
    %p110 = scmp.eq.s32.totalorder %s16, 1
    %p111 = scmp.ne.s32.totalorder %s106, %s108
    %p112 = scmp.eq.s32.totalorder %s16, 0
    %p113 = por %p111, %p112
    %p114 = scmp.ne.s32.totalorder %s106, %s108
    %p115 = scmp.eq.s32.totalorder %s21, 1
    %p116 = por %p114, %p115
    %p117 = scmp.ne.s32.totalorder %s108, %s109
    %p118 = scmp.eq.s32.totalorder %s21, 0
    %p119 = por %p117, %p118
    %p120 = scmp.ne.s32.totalorder %s108, %s109
    %p121 = scmp.eq.s32.totalorder %s22, 1
    %p122 = por %p120, %p121
    %p124 = scmp.ne.s32.totalorder %s109, %s123
    %p125 = scmp.eq.s32.totalorder %s22, 0
    %p126 = por %p124, %p125
    %s128 = sadd.s32 %s127, 1
    %p131 = scmp.eq.s32.totalorder %s16, 1
    %p132 = scmp.ne.s32.totalorder %s127, %s129
    %p133 = scmp.eq.s32.totalorder %s16, 0
    %p134 = por %p132, %p133
    %p135 = scmp.ne.s32.totalorder %s127, %s129
    %p136 = scmp.eq.s32.totalorder %s21, 1
    %p137 = por %p135, %p136
    %p138 = scmp.ne.s32.totalorder %s129, %s130
    %p139 = scmp.eq.s32.totalorder %s21, 0
    %p140 = por %p138, %p139
    %p141 = scmp.ne.s32.totalorder %s129, %s130
    %p142 = scmp.eq.s32.totalorder %s22, 1
    %p143 = por %p141, %p142
    %p145 = scmp.ne.s32.totalorder %s130, %s144
    %p146 = scmp.eq.s32.totalorder %s22, 0
    %p147 = por %p145, %p146
    %s149 = sadd.s32 %s148, 1
    %p152 = scmp.eq.s32.totalorder %s16, 1
    %p153 = scmp.ne.s32.totalorder %s148, %s150
    %p154 = scmp.eq.s32.totalorder %s16, 0
    %p155 = por %p153, %p154
    %p156 = scmp.ne.s32.totalorder %s148, %s150
    %p157 = scmp.eq.s32.totalorder %s21, 1
    %p158 = por %p156, %p157
    %p159 = scmp.ne.s32.totalorder %s150, %s151
    %p160 = scmp.eq.s32.totalorder %s21, 0
    %p161 = por %p159, %p160
    %p162 = scmp.ne.s32.totalorder %s150, %s151
    %p163 = scmp.eq.s32.totalorder %s22, 1
    %p164 = por %p162, %p163
    %p166 = scmp.ne.s32.totalorder %s151, %s165
    %p167 = scmp.eq.s32.totalorder %s22, 0
    %p168 = por %p166, %p167
    %s170 = sadd.s32 %s169, 1
    %p173 = scmp.eq.s32.totalorder %s16, 1
    %p174 = scmp.ne.s32.totalorder %s169, %s171
    %p175 = scmp.eq.s32.totalorder %s16, 0
    %p176 = por %p174, %p175
    %p177 = scmp.ne.s32.totalorder %s169, %s171
    %p178 = scmp.eq.s32.totalorder %s21, 1
    %p179 = por %p177, %p178
    %p180 = scmp.ne.s32.totalorder %s171, %s172
    %p181 = scmp.eq.s32.totalorder %s21, 0
    %p182 = por %p180, %p181
    %p183 = scmp.ne.s32.totalorder %s171, %s172
    %p184 = scmp.eq.s32.totalorder %s22, 1
    %p185 = por %p183, %p184
    %p187 = scmp.ne.s32.totalorder %s172, %s186
    %p188 = scmp.eq.s32.totalorder %s22, 0
    %p189 = por %p187, %p188
    %s190 = ssub.s32 %s24, %s31
    %s191 = ssub.s32 %s23, %s35
    %s192 = sor.u32 %s190, %s191
    %p193 = scmp.eq.s32.totalorder %s192, 0
    %s195 = sadd.s32 %s194, 1
    %s196 = scalar_select %p193, %s194, %s195
    %p199 = pneg %p193
    %p200 = scmp.eq.s32.totalorder %s16, 1
    %p201 = por %p199, %p200
    %p202 = scmp.ne.s32.totalorder %s194, %s197
    %p203 = scmp.eq.s32.totalorder %s16, 0
    %p204 = por %p202, %p203
    %p205 = scmp.ne.s32.totalorder %s194, %s197
    %p206 = scmp.eq.s32.totalorder %s21, 1
    %p207 = por %p205, %p206
    %p208 = scmp.ne.s32.totalorder %s197, %s198
    %p209 = scmp.eq.s32.totalorder %s21, 0
    %p210 = por %p208, %p209
    %p211 = scmp.ne.s32.totalorder %s197, %s198
    %p212 = scmp.eq.s32.totalorder %s22, 1
    %p213 = por %p211, %p212
    %p215 = scmp.ne.s32.totalorder %s198, %s214
    %p216 = scmp.eq.s32.totalorder %s22, 0
    %p217 = por %p215, %p216
    %s218 = ssub.s32 %s23, %s35
    %p219 = scmp.eq.s32.totalorder %s218, 0
    %s221 = sadd.s32 %s220, 1
    %s222 = scalar_select %p219, %s220, %s221
    %p225 = pneg %p219
    %p226 = scmp.eq.s32.totalorder %s16, 1
    %p227 = por %p225, %p226
    %p228 = scmp.ne.s32.totalorder %s220, %s223
    %p229 = scmp.eq.s32.totalorder %s16, 0
    %p230 = por %p228, %p229
    %p231 = scmp.ne.s32.totalorder %s220, %s223
    %p232 = scmp.eq.s32.totalorder %s21, 1
    %p233 = por %p231, %p232
    %p234 = scmp.ne.s32.totalorder %s223, %s224
    %p235 = scmp.eq.s32.totalorder %s21, 0
    %p236 = por %p234, %p235
    %p237 = scmp.ne.s32.totalorder %s223, %s224
    %p238 = scmp.eq.s32.totalorder %s22, 1
    %p239 = por %p237, %p238
    %p241 = scmp.ne.s32.totalorder %s224, %s240
    %p242 = scmp.eq.s32.totalorder %s22, 0
    %p243 = por %p241, %p242
    %s244 = ssub.s32 %s23, %s35
    %p245 = scmp.eq.s32.totalorder %s244, 0
    %s247 = sadd.s32 %s246, 1
    %s248 = scalar_select %p245, %s246, %s247
    %p251 = pneg %p245
    %p252 = scmp.eq.s32.totalorder %s16, 1
    %p253 = por %p251, %p252
    %p254 = scmp.ne.s32.totalorder %s246, %s249
    %p255 = scmp.eq.s32.totalorder %s16, 0
    %p256 = por %p254, %p255
    %p257 = scmp.ne.s32.totalorder %s246, %s249
    %p258 = scmp.eq.s32.totalorder %s21, 1
    %p259 = por %p257, %p258
    %p260 = scmp.ne.s32.totalorder %s249, %s250
    %p261 = scmp.eq.s32.totalorder %s21, 0
    %p262 = por %p260, %p261
    %p263 = scmp.ne.s32.totalorder %s249, %s250
    %p264 = scmp.eq.s32.totalorder %s22, 1
    %p265 = por %p263, %p264
    %p267 = scmp.ne.s32.totalorder %s250, %s266
    %p268 = scmp.eq.s32.totalorder %s22, 0
    %p269 = por %p267, %p268
    %p270 = scmp.le.s32.totalorder 1, %s16
    %p271 = scmp.lt.s32.totalorder %s16, 3
    %p272 = pnand %p270, %p271
    %p273 = pneg %p272
    // Predicated region
    $region9: #{_lstm_lm_forward_impl.2} parent=5 // pred_check
      _
    $region10: #{_lstm_lm_forward_impl.2} parent=5 // pred_check_branch
      %275 = sbr.rel (%p272) target = $region12
    $region11: #{_lstm_lm_forward_impl.2} parent=5 // pred_region
      %s276 = ssub.s32 %s16, 1
      // Predicated region
      $region13: #{_lstm_lm_forward_impl.2} parent=11 // pred_check
        %p277 = pneg %p77
      $region14: #{_lstm_lm_forward_impl.2} parent=11 // pred_check_branch
        %279 = sbr.rel (%p277) target = $region16
      $region15: #{_lstm_lm_forward_impl.2} parent=11 // pred_region
        _
      $region16: #{_lstm_lm_forward_impl.2} parent=11 // pred_fallthru
        _
      // Predicated region
      $region17: #{_lstm_lm_forward_impl.2} parent=11 // pred_check
        %p280 = pneg %p98
      $region18: #{_lstm_lm_forward_impl.2} parent=11 // pred_check_branch
        %282 = sbr.rel (%p280) target = $region20
      $region19: #{_lstm_lm_forward_impl.2} parent=11 // pred_region
        _
      $region20: #{_lstm_lm_forward_impl.2} parent=11 // pred_fallthru
        _
      // Predicated region
      $region21: #{_lstm_lm_forward_impl.2} parent=11 // pred_check
        %p283 = pneg %p119
      $region22: #{_lstm_lm_forward_impl.2} parent=11 // pred_check_branch
        %285 = sbr.rel (%p283) target = $region24
      $region23: #{_lstm_lm_forward_impl.2} parent=11 // pred_region
        _
      $region24: #{_lstm_lm_forward_impl.2} parent=11 // pred_fallthru
        _
      // Predicated region
      $region25: #{_lstm_lm_forward_impl.2} parent=11 // pred_check
        %p286 = pneg %p140
      $region26: #{_lstm_lm_forward_impl.2} parent=11 // pred_check_branch
        %288 = sbr.rel (%p286) target = $region28
      $region27: #{_lstm_lm_forward_impl.2} parent=11 // pred_region
        _
      $region28: #{_lstm_lm_forward_impl.2} parent=11 // pred_fallthru
        _
      // Predicated region
      $region29: #{_lstm_lm_forward_impl.2} parent=11 // pred_check
        %p289 = pneg %p161
      $region30: #{_lstm_lm_forward_impl.2} parent=11 // pred_check_branch
        %291 = sbr.rel (%p289) target = $region32
      $region31: #{_lstm_lm_forward_impl.2} parent=11 // pred_region
        _
      $region32: #{_lstm_lm_forward_impl.2} parent=11 // pred_fallthru
        _
      // Predicated region
      $region33: #{_lstm_lm_forward_impl.2} parent=11 // pred_check
        %p292 = pneg %p182
      $region34: #{_lstm_lm_forward_impl.2} parent=11 // pred_check_branch
        %294 = sbr.rel (%p292) target = $region36
      $region35: #{_lstm_lm_forward_impl.2} parent=11 // pred_region
        _
      $region36: #{_lstm_lm_forward_impl.2} parent=11 // pred_fallthru
        _
    $region12: #{_lstm_lm_forward_impl.2} parent=5 // pred_fallthru
      _
    %p295 = scmp.lt.s32.totalorder %s16, 2
    // Predicated region
    $region37: #{_lstm_lm_forward_impl.2} parent=5 // pred_check
      %p296 = pneg %p295
    $region38: #{_lstm_lm_forward_impl.2} parent=5 // pred_check_branch
      %298 = sbr.rel (%p296) target = $region40
    $region39: #{_lstm_lm_forward_impl.2} parent=5 // pred_region
      // Predicated region
      $region41: #{_lstm_lm_forward_impl.2} parent=39 // pred_check
        %p299 = pneg %p50
      $region42: #{_lstm_lm_forward_impl.2} parent=39 // pred_check_branch
        %301 = sbr.rel (%p299) target = $region44
      $region43: #{_lstm_lm_forward_impl.2} parent=39 // pred_region
        %s302 = smul.u32 4, %s24
        %p303 = scmp.lt.s32.totalorder %s302, 7
        %s304 = scalar_select %p303, %s302, 7
        %p305 = scmp.lt.s32.totalorder %s23, 0
        %s306 = scalar_select %p305, %s23, 0
        %s307 = sadd.s32 %s306, %s304
        %s308 = smul.addr %s307, 8
        %s309 = scalar_lea.vmem %s0, %s308
        %s310 = smul.u32 4, %s24
      $region44: #{_lstm_lm_forward_impl.2} parent=39 // pred_fallthru
        _
    $region40: #{_lstm_lm_forward_impl.2} parent=5 // pred_fallthru
      _
    %p311 = scmp.le.s32.totalorder 1, %s16
    %p312 = scmp.lt.s32.totalorder %s16, 3
    %p313 = pnand %p311, %p312
    %p314 = pneg %p313
    // Predicated region
    $region45: #{_lstm_lm_forward_impl.2} parent=5 // pred_check
      _
    $region46: #{_lstm_lm_forward_impl.2} parent=5 // pred_check_branch
      %316 = sbr.rel (%p313) target = $region48
    $region47: #{_lstm_lm_forward_impl.2} parent=5 // pred_region
      %s317 = ssub.s32 %s16, 1
      %s318 = smul.u32 4, %s26
      %p319 = scmp.lt.s32.totalorder %s318, 7
      %s320 = scalar_select %p319, %s318, 7
      %p321 = scmp.lt.s32.totalorder %s25, 0
      %s322 = scalar_select %p321, %s25, 0
      %s323 = sadd.s32 %s322, %s320
      %s324 = smul.addr %s323, 8
      %s325 = scalar_lea.vmem %s0, %s324
      %p326 = pneg %p56
      %p327 = pneg %p53
      %p328 = pneg %p77
      %p329 = pneg %p74
      %p330 = pneg %p98
      %p331 = pneg %p95
      %p332 = pneg %p119
      %p333 = pneg %p116
      %p334 = pneg %p140
      %p335 = pneg %p137
      %p336 = pneg %p161
      %p337 = pneg %p158
      %p338 = pneg %p182
      %p339 = pneg %p179
      %p340 = pneg %p210
      %p341 = pneg %p207
      %s342 = smul.u32 4, %s26
      %p343 = scmp.lt.s32.totalorder %s342, 7
      %s344 = scalar_select %p343, %s342, 7
      %p345 = scmp.lt.s32.totalorder %s25, 0
      %s346 = scalar_select %p345, %s25, 0
      %s347 = sadd.s32 %s346, %s344
      %s348 = smul.addr %s347, 8
      %s349 = scalar_lea.vmem %s7, %s348
      %p350 = pneg %p236
      %p351 = pneg %p233
      %p352 = scmp.lt.s32.totalorder %s25, 0
      %s353 = scalar_select %p352, %s25, 0
      %s354 = smul.addr %s353, 8
      %s355 = scalar_lea.vmem %s8, %s354
      %p356 = pneg %p262
      %p357 = pneg %p259
      %p358 = scmp.lt.s32.totalorder %s25, 0
      %s359 = scalar_select %p358, %s25, 0
      %s360 = smul.addr %s359, 8
      %s361 = scalar_lea.vmem %s9, %s360
      %s362 = smul.u32 4, %s26
      %p363 = scmp.lt.s32.totalorder %s362, 7
      %s364 = scalar_select %p363, %s362, 7
      %p365 = scmp.lt.s32.totalorder %s25, 0
      %s366 = scalar_select %p365, %s25, 0
      %s367 = sadd.s32 %s366, %s364
      %s368 = smul.addr %s367, 8
      %s369 = scalar_lea.vmem %s0, %s368
      %s370 = smul.u32 4, %s26
      %s371 = smul.u32 4, %s26
      %p372 = scmp.lt.s32.totalorder %s371, 7
      %s373 = scalar_select %p372, %s371, 7
      %p374 = scmp.lt.s32.totalorder %s25, 0
      %s375 = scalar_select %p374, %s25, 0
      %s376 = sadd.s32 %s375, %s373
      %s377 = smul.addr %s376, 8
      %s378 = scalar_lea.vmem %s7, %s377
      %s379 = smul.u32 4, %s26
      %p380 = scmp.lt.s32.totalorder %s25, 0
      %s381 = scalar_select %p380, %s25, 0
      %s382 = smul.addr %s381, 8
      %s383 = scalar_lea.vmem %s8, %s382
      %p384 = scmp.lt.s32.totalorder %s25, 0
      %s385 = scalar_select %p384, %s25, 0
      %s386 = smul.addr %s385, 8
      %s387 = scalar_lea.vmem %s9, %s386
      %p388 = scmp.eq.s32.totalorder %s26, 0
      // Predicated region
      $region49: #{_lstm_lm_forward_impl.2} parent=47 // pred_check
        %p389 = pneg %p388
      $region50: #{_lstm_lm_forward_impl.2} parent=47 // pred_check_branch
        %391 = sbr.rel (%p389) target = $region52
      $region51: #{_lstm_lm_forward_impl.2} parent=47 // pred_region
        %vm392 = vcmask 261120
        %393 = vst.msk [vmem:[#allocation2] sm:$0xff] %vm392, 0.0
        %394 = vst.msk [vmem:[#allocation2 + $0x8] sm:$0xff] %vm392, 0.0
        %395 = vst.msk [vmem:[#allocation3] sm:$0xff] %vm392, 0.0
        %396 = vst.msk [vmem:[#allocation3 + $0x8] sm:$0xff] %vm392, 0.0
      $region52: #{_lstm_lm_forward_impl.2} parent=47 // pred_fallthru
        _
      %v397 = vld [vmem:[%s2] sm:$0xff]
      %v398 = vld [vmem:[%s2 + $0x8] sm:$0xff]
      %v399 = vld [vmem:[%s2 + $0x10] sm:$0xff]
      %v400 = vld [vmem:[%s2 + $0x18] sm:$0xff]
      %v401 = vld [vmem:[%s369] sm:$0xff]
      %v402 = vld [vmem:[%s369 + $0x8] sm:$0xff]
      %v403 = vld [vmem:[%s369 + $0x10] sm:$0xff]
      %v404 = vld [vmem:[%s369 + $0x18] sm:$0xff]
      %v405 = vld [vmem:[%s1] sm:$0xff]
      %v406 = vld [vmem:[%s1 + $0x8] sm:$0xff]
      %v407 = vld [vmem:[%s1 + $0x10] sm:$0xff]
      %v408 = vld [vmem:[%s1 + $0x18] sm:$0xff]
      %v409 = vld [vmem:[%s3] sm:$0x1]
      %v411 = vlaneseq
      %v412 = vshrl.u32 %v411, 7
      %v413 = vsub.s32 0, %v412
      %v414 = vrot.slane %v409, %v413
      %vm416 = vcmask 261120
      %v418 = vsel %vm416, %v401, 0
      %v421 = vsel %vm416, %v402, 0
      %v424 = vsel %vm416, %v403, 0
      %v427 = vsel %vm416, %v404, 0
      %429 = vmatprep.subr.mxu0 0.0
      %430 = vmatpush1.msra.mxu0 0.0
      %431 = vmatprep.subr.mxu0 0.0
      %432 = vmatpush1.msra.mxu0 0.0
      %433 = vmatprep.subr.mxu0 0.0
      %434 = vmatpush1.msra.mxu0 0.0
      %435 = vmatprep.subr.mxu0 0.0
      %436 = vmatpush1.msra.mxu0 0.0
      %437 = vmatprep.subr.mxu0 0.0
      %438 = vmatpush1.msra.mxu0 0.0
      %439 = vmatprep.subr.mxu0 0.0
      %440 = vmatpush1.msra.mxu0 0.0
      %441 = vmatprep.subr.mxu0 0.0
      %442 = vmatpush1.msra.mxu0 0.0
      %443 = vmatprep.subr.mxu0 0.0
      %444 = vmatpush1.msra.mxu0 0.0
      %445 = vmatprep.subr.mxu0 0.0
      %446 = vmatpush1.msra.mxu0 0.0
      %447 = vmatprep.subr.mxu0 0.0
      %448 = vmatpush1.msra.mxu0 0.0
      %449 = vmatprep.subr.mxu0 0.0
      %450 = vmatpush1.msra.mxu0 0.0
      %451 = vmatprep.subr.mxu0 0.0
      %452 = vmatpush1.msra.mxu0 0.0
      %453 = vmatprep.subr.mxu0 0.0
      %454 = vmatpush1.msra.mxu0 %v408
      %455 = vmatprep.subr.mxu0 0.0
      %456 = vmatpush1.msra.mxu0 %v407
      %457 = vmatprep.subr.mxu0 0.0
      %458 = vmatpush1.msra.mxu0 %v406
      %459 = vmatprep.subr.mxu0 0.0
      %460 = vmatpush1.msra.mxu0 %v405
      %461 = vmatprep.subr.mxu0 0.0
      %462 = vmatpush2.msra.mxu0 0.0
      %463 = vmatprep.subr.mxu0 0.0
      %464 = vmatpush2.msra.mxu0 0.0
      %465 = vmatprep.subr.mxu0 0.0
      %466 = vmatpush2.msra.mxu0 0.0
      %467 = vmatprep.subr.mxu0 0.0
      %468 = vmatpush2.msra.mxu0 0.0
      %469 = vmatprep.subr.mxu0 0.0
      %470 = vmatpush2.msra.mxu0 0.0
      %471 = vmatprep.subr.mxu0 0.0
      %472 = vmatpush2.msra.mxu0 0.0
      %473 = vmatprep.subr.mxu0 0.0
      %474 = vmatpush2.msra.mxu0 0.0
      %475 = vmatprep.subr.mxu0 0.0
      %476 = vmatpush2.msra.mxu0 0.0
      %477 = vmatprep.subr.mxu0 0.0
      %478 = vmatpush2.msra.mxu0 0.0
      %479 = vmatprep.subr.mxu0 0.0
      %480 = vmatpush2.msra.mxu0 0.0
      %481 = vmatprep.subr.mxu0 0.0
      %482 = vmatpush2.msra.mxu0 0.0
      %483 = vmatprep.subr.mxu0 0.0
      %484 = vmatpush2.msra.mxu0 0.0
      %485 = vmatprep.subr.mxu0 0.0
      %486 = vmatpush2.msra.mxu0 0.0
      %487 = vmatprep.subr.mxu0 0.0
      %488 = vmatpush2.msra.mxu0 0.0
      %489 = vmatprep.subr.mxu0 0.0
      %490 = vmatpush2.msra.mxu0 0.0
      %491 = vmatprep.subr.mxu0 0.0
      %492 = vmatpush2.msra.mxu0 0.0
      %493 = vmatprep.mubr.f32.mxu0 0.0
      %494 = vmatmul.mubr.f32.gmra.mxu0 %v418
      %v495 = vpop.f32.mrf.mxu0
      %v496 = vadd.f32 %v414, %v495
      %v497 = vpop.f32.mrf.mxu0
      %498 = vmatprep.mubr.f32.mxu0 0.0
      %499 = vmatmul.mubr.f32.gmra.mxu0 %v421
      %v500 = vpop.f32.mrf.mxu0
      %v501 = vadd.f32 %v414, %v500
      %v502 = vpop.f32.mrf.mxu0
      %503 = vmatprep.mubr.f32.mxu0 0.0
      %504 = vmatmul.mubr.f32.gmra.mxu0 %v424
      %v505 = vpop.f32.mrf.mxu0
      %v506 = vadd.f32 %v414, %v505
      %v507 = vpop.f32.mrf.mxu0
      %508 = vmatprep.mubr.f32.mxu0 0.0
      %509 = vmatmul.mubr.f32.gmra.mxu0 %v427
      %v510 = vpop.f32.mrf.mxu0
      %v511 = vadd.f32 %v414, %v510
      %v512 = vpop.f32.mrf.mxu0
      %513 = vdwg.mxu0
      %514 = vst [vmem:[#allocation4] sm:$0xff] %v496
      %515 = vst [vmem:[#allocation4 + $0x8] sm:$0xff] %v501
      %516 = vst [vmem:[#allocation4 + $0x10] sm:$0xff] %v506
      %517 = vst [vmem:[#allocation4 + $0x18] sm:$0xff] %v511
      %v518 = vld [vmem:[%s4] sm:$0xff]
      %v519 = vld [vmem:[%s4 + $0x8] sm:$0xff]
      %v520 = vld [vmem:[%s4 + $0x10] sm:$0xff]
      %v521 = vld [vmem:[%s4 + $0x18] sm:$0xff]
      %v522 = vld [vmem:[%s5] sm:$0xff]
      %v523 = vld [vmem:[%s5 + $0x8] sm:$0xff]
      %v524 = vld [vmem:[%s5 + $0x10] sm:$0xff]
      %v525 = vld [vmem:[%s5 + $0x18] sm:$0xff]
      %v526 = vld [vmem:[%s6] sm:$0x1]
      %v528 = vlaneseq
      %v529 = vshrl.u32 %v528, 7
      %v530 = vsub.s32 0, %v529
      %v531 = vrot.slane %v526, %v530
      %v533 = vld [vmem:[#allocation4] sm:$0xff]
      %v534 = vld [vmem:[#allocation2] sm:$0xff]
      %v536 = vsel %vm416, %v534, 0
      %538 = vmatprep.subr.mxu0 0.0
      %539 = vmatpush1.msra.mxu0 0.0
      %540 = vmatprep.subr.mxu0 0.0
      %541 = vmatpush1.msra.mxu0 0.0
      %542 = vmatprep.subr.mxu0 0.0
      %543 = vmatpush1.msra.mxu0 0.0
      %544 = vmatprep.subr.mxu0 0.0
      %545 = vmatpush1.msra.mxu0 0.0
      %546 = vmatprep.subr.mxu0 0.0
      %547 = vmatpush1.msra.mxu0 0.0
      %548 = vmatprep.subr.mxu0 0.0
      %549 = vmatpush1.msra.mxu0 0.0
      %550 = vmatprep.subr.mxu0 0.0
      %551 = vmatpush1.msra.mxu0 0.0
      %552 = vmatprep.subr.mxu0 0.0
      %553 = vmatpush1.msra.mxu0 0.0
      %554 = vmatprep.subr.mxu0 0.0
      %555 = vmatpush1.msra.mxu0 0.0
      %556 = vmatprep.subr.mxu0 0.0
      %557 = vmatpush1.msra.mxu0 0.0
      %558 = vmatprep.subr.mxu0 0.0
      %559 = vmatpush1.msra.mxu0 0.0
      %560 = vmatprep.subr.mxu0 0.0
      %561 = vmatpush1.msra.mxu0 0.0
      %562 = vmatprep.subr.mxu0 0.0
      %563 = vmatpush1.msra.mxu0 %v400
      %564 = vmatprep.subr.mxu0 0.0
      %565 = vmatpush1.msra.mxu0 %v399
      %566 = vmatprep.subr.mxu0 0.0
      %567 = vmatpush1.msra.mxu0 %v398
      %568 = vmatprep.subr.mxu0 0.0
      %569 = vmatpush1.msra.mxu0 %v397
      %570 = vmatprep.subr.mxu0 0.0
      %571 = vmatpush2.msra.mxu0 0.0
      %572 = vmatprep.subr.mxu0 0.0
      %573 = vmatpush2.msra.mxu0 0.0
      %574 = vmatprep.subr.mxu0 0.0
      %575 = vmatpush2.msra.mxu0 0.0
      %576 = vmatprep.subr.mxu0 0.0
      %577 = vmatpush2.msra.mxu0 0.0
      %578 = vmatprep.subr.mxu0 0.0
      %579 = vmatpush2.msra.mxu0 0.0
      %580 = vmatprep.subr.mxu0 0.0
      %581 = vmatpush2.msra.mxu0 0.0
      %582 = vmatprep.subr.mxu0 0.0
      %583 = vmatpush2.msra.mxu0 0.0
      %584 = vmatprep.subr.mxu0 0.0
      %585 = vmatpush2.msra.mxu0 0.0
      %586 = vmatprep.subr.mxu0 0.0
      %587 = vmatpush2.msra.mxu0 0.0
      %588 = vmatprep.subr.mxu0 0.0
      %589 = vmatpush2.msra.mxu0 0.0
      %590 = vmatprep.subr.mxu0 0.0
      %591 = vmatpush2.msra.mxu0 0.0
      %592 = vmatprep.subr.mxu0 0.0
      %593 = vmatpush2.msra.mxu0 0.0
      %594 = vmatprep.subr.mxu0 0.0
      %595 = vmatpush2.msra.mxu0 0.0
      %596 = vmatprep.subr.mxu0 0.0
      %597 = vmatpush2.msra.mxu0 0.0
      %598 = vmatprep.subr.mxu0 0.0
      %599 = vmatpush2.msra.mxu0 0.0
      %600 = vmatprep.subr.mxu0 0.0
      %601 = vmatpush2.msra.mxu0 0.0
      %602 = vmatprep.mubr.f32.mxu0 0.0
      %603 = vmatmul.mubr.f32.gmra.mxu0 %v536
      %v604 = vpop.f32.mrf.mxu0
      %v605 = vadd.f32 0.0, %v604
      %v606 = vpop.f32.mrf.mxu0
      %607 = vdwg.mxu0
      %v608 = vadd.f32 %v533, %v605
      %v609 = vld [vmem:[#allocation3] sm:$0xff]
      %v610 = vxor.u32 %v608, 2147483648
      %v611 = vmul.f32 %v610, 1.442695
      %v612 = vpow.pop %v611
      %v613 = vadd.f32 %v612, 1.0
      %v614 = vrcp.pop %v613
      %v615 = vmul.f32 1.0, %v614
      %v616 = vtanh.pop %v608
      %618 = vrot.lane.b32.xlu0 %v609, 32
      %v619 = vpop.permute.xlu0 %618
      %v621 = vmul.f32 %v615, %v619
      %623 = vrot.lane.b32.xlu0 %v616, 32
      %v624 = vpop.permute.xlu0 %623
      %v626 = vmul.f32 %v615, %v624
      %628 = vrot.lane.b32.xlu0 %v626, 32
      %v629 = vpop.permute.xlu0 %628
      %v631 = vadd.f32 %v621, %v629
      %v632 = vtanh.pop %v631
      %634 = vrot.lane.b32.xlu0 %v632, 32
      %v635 = vpop.permute.xlu0 %634
      %v637 = vmul.f32 %v615, %v635
      %639 = vrot.lane.b32.xlu0 %v637, 64
      %v640 = vpop.permute.xlu0 %639
      %642 = vst.msk [vmem:[#allocation2] sm:$0xff] %vm416, %v640
      %644 = vrot.lane.b32.xlu0 %v631, 96
      %v645 = vpop.permute.xlu0 %644
      %647 = vst.msk [vmem:[#allocation3] sm:$0xff] %vm416, %v645
      %s648 = scalar_lea.vmem [#allocation2], 8
      %v649 = vld [vmem:[%s648] sm:$0xff]
      %v651 = vsel %vm416, %v649, 0
      %653 = vmatprep.subr.mxu0 0.0
      %654 = vmatpush1.msra.mxu0 0.0
      %655 = vmatprep.subr.mxu0 0.0
      %656 = vmatpush1.msra.mxu0 0.0
      %657 = vmatprep.subr.mxu0 0.0
      %658 = vmatpush1.msra.mxu0 0.0
      %659 = vmatprep.subr.mxu0 0.0
      %660 = vmatpush1.msra.mxu0 0.0
      %661 = vmatprep.subr.mxu0 0.0
      %662 = vmatpush1.msra.mxu0 0.0
      %663 = vmatprep.subr.mxu0 0.0
      %664 = vmatpush1.msra.mxu0 0.0
      %665 = vmatprep.subr.mxu0 0.0
      %666 = vmatpush1.msra.mxu0 0.0
      %667 = vmatprep.subr.mxu0 0.0
      %668 = vmatpush1.msra.mxu0 0.0
      %669 = vmatprep.subr.mxu0 0.0
      %670 = vmatpush1.msra.mxu0 0.0
      %671 = vmatprep.subr.mxu0 0.0
      %672 = vmatpush1.msra.mxu0 0.0
      %673 = vmatprep.subr.mxu0 0.0
      %674 = vmatpush1.msra.mxu0 0.0
      %675 = vmatprep.subr.mxu0 0.0
      %676 = vmatpush1.msra.mxu0 0.0
      %677 = vmatprep.subr.mxu0 0.0
      %678 = vmatpush1.msra.mxu0 %v525
      %679 = vmatprep.subr.mxu0 0.0
      %680 = vmatpush1.msra.mxu0 %v524
      %681 = vmatprep.subr.mxu0 0.0
      %682 = vmatpush1.msra.mxu0 %v523
      %683 = vmatprep.subr.mxu0 0.0
      %684 = vmatpush1.msra.mxu0 %v522
      %685 = vmatprep.subr.mxu0 0.0
      %686 = vmatpush2.msra.mxu0 0.0
      %687 = vmatprep.subr.mxu0 0.0
      %688 = vmatpush2.msra.mxu0 0.0
      %689 = vmatprep.subr.mxu0 0.0
      %690 = vmatpush2.msra.mxu0 0.0
      %691 = vmatprep.subr.mxu0 0.0
      %692 = vmatpush2.msra.mxu0 0.0
      %693 = vmatprep.subr.mxu0 0.0
      %694 = vmatpush2.msra.mxu0 0.0
      %695 = vmatprep.subr.mxu0 0.0
      %696 = vmatpush2.msra.mxu0 0.0
      %697 = vmatprep.subr.mxu0 0.0
      %698 = vmatpush2.msra.mxu0 0.0
      %699 = vmatprep.subr.mxu0 0.0
      %700 = vmatpush2.msra.mxu0 0.0
      %701 = vmatprep.subr.mxu0 0.0
      %702 = vmatpush2.msra.mxu0 0.0
      %703 = vmatprep.subr.mxu0 0.0
      %704 = vmatpush2.msra.mxu0 0.0
      %705 = vmatprep.subr.mxu0 0.0
      %706 = vmatpush2.msra.mxu0 0.0
      %707 = vmatprep.subr.mxu0 0.0
      %708 = vmatpush2.msra.mxu0 0.0
      %709 = vmatprep.subr.mxu0 0.0
      %710 = vmatpush2.msra.mxu0 0.0
      %711 = vmatprep.subr.mxu0 0.0
      %712 = vmatpush2.msra.mxu0 0.0
      %713 = vmatprep.subr.mxu0 0.0
      %714 = vmatpush2.msra.mxu0 0.0
      %715 = vmatprep.subr.mxu0 0.0
      %716 = vmatpush2.msra.mxu0 0.0
      %717 = vmatprep.mubr.f32.mxu0 0.0
      %718 = vmatmul.mubr.f32.gmra.mxu0 %v651
      %v719 = vpop.f32.mrf.mxu0
      %v720 = vadd.f32 0.0, %v719
      %v721 = vpop.f32.mrf.mxu0
      %722 = vdwg.mxu0
      %v723 = vsel %vm416, %v640, 0
      %725 = vmatprep.subr.mxu0 0.0
      %726 = vmatpush1.msra.mxu0 0.0
      %727 = vmatprep.subr.mxu0 0.0
      %728 = vmatpush1.msra.mxu0 0.0
      %729 = vmatprep.subr.mxu0 0.0
      %730 = vmatpush1.msra.mxu0 0.0
      %731 = vmatprep.subr.mxu0 0.0
      %732 = vmatpush1.msra.mxu0 0.0
      %733 = vmatprep.subr.mxu0 0.0
      %734 = vmatpush1.msra.mxu0 0.0
      %735 = vmatprep.subr.mxu0 0.0
      %736 = vmatpush1.msra.mxu0 0.0
      %737 = vmatprep.subr.mxu0 0.0
      %738 = vmatpush1.msra.mxu0 0.0
      %739 = vmatprep.subr.mxu0 0.0
      %740 = vmatpush1.msra.mxu0 0.0
      %741 = vmatprep.subr.mxu0 0.0
      %742 = vmatpush1.msra.mxu0 0.0
      %743 = vmatprep.subr.mxu0 0.0
      %744 = vmatpush1.msra.mxu0 0.0
      %745 = vmatprep.subr.mxu0 0.0
      %746 = vmatpush1.msra.mxu0 0.0
      %747 = vmatprep.subr.mxu0 0.0
      %748 = vmatpush1.msra.mxu0 0.0
      %749 = vmatprep.subr.mxu0 0.0
      %750 = vmatpush1.msra.mxu0 %v521
      %751 = vmatprep.subr.mxu0 0.0
      %752 = vmatpush1.msra.mxu0 %v520
      %753 = vmatprep.subr.mxu0 0.0
      %754 = vmatpush1.msra.mxu0 %v519
      %755 = vmatprep.subr.mxu0 0.0
      %756 = vmatpush1.msra.mxu0 %v518
      %757 = vmatprep.subr.mxu0 0.0
      %758 = vmatpush2.msra.mxu0 0.0
      %759 = vmatprep.subr.mxu0 0.0
      %760 = vmatpush2.msra.mxu0 0.0
      %761 = vmatprep.subr.mxu0 0.0
      %762 = vmatpush2.msra.mxu0 0.0
      %763 = vmatprep.subr.mxu0 0.0
      %764 = vmatpush2.msra.mxu0 0.0
      %765 = vmatprep.subr.mxu0 0.0
      %766 = vmatpush2.msra.mxu0 0.0
      %767 = vmatprep.subr.mxu0 0.0
      %768 = vmatpush2.msra.mxu0 0.0
      %769 = vmatprep.subr.mxu0 0.0
      %770 = vmatpush2.msra.mxu0 0.0
      %771 = vmatprep.subr.mxu0 0.0
      %772 = vmatpush2.msra.mxu0 0.0
      %773 = vmatprep.subr.mxu0 0.0
      %774 = vmatpush2.msra.mxu0 0.0
      %775 = vmatprep.subr.mxu0 0.0
      %776 = vmatpush2.msra.mxu0 0.0
      %777 = vmatprep.subr.mxu0 0.0
      %778 = vmatpush2.msra.mxu0 0.0
      %779 = vmatprep.subr.mxu0 0.0
      %780 = vmatpush2.msra.mxu0 0.0
      %781 = vmatprep.subr.mxu0 0.0
      %782 = vmatpush2.msra.mxu0 0.0
      %783 = vmatprep.subr.mxu0 0.0
      %784 = vmatpush2.msra.mxu0 0.0
      %785 = vmatprep.subr.mxu0 0.0
      %786 = vmatpush2.msra.mxu0 0.0
      %787 = vmatprep.subr.mxu0 0.0
      %788 = vmatpush2.msra.mxu0 0.0
      %789 = vmatprep.mubr.f32.mxu0 0.0
      %790 = vmatmul.mubr.f32.gmra.mxu0 %v723
      %v791 = vpop.f32.mrf.mxu0
      %v792 = vadd.f32 %v720, %v791
      %v793 = vpop.f32.mrf.mxu0
      %794 = vdwg.mxu0
      %v795 = vadd.f32 %v792, %v531
      %s796 = scalar_lea.vmem [#allocation3], 8
      %v797 = vld [vmem:[%s796] sm:$0xff]
      %v798 = vxor.u32 %v795, 2147483648
      %v799 = vmul.f32 %v798, 1.442695
      %v800 = vpow.pop %v799
      %v801 = vadd.f32 %v800, 1.0
      %v802 = vrcp.pop %v801
      %v803 = vmul.f32 1.0, %v802
      %v804 = vtanh.pop %v795
      %806 = vrot.lane.b32.xlu0 %v797, 32
      %v807 = vpop.permute.xlu0 %806
      %v809 = vmul.f32 %v803, %v807
      %811 = vrot.lane.b32.xlu0 %v804, 32
      %v812 = vpop.permute.xlu0 %811
      %v814 = vmul.f32 %v803, %v812
      %816 = vrot.lane.b32.xlu0 %v814, 32
      %v817 = vpop.permute.xlu0 %816
      %v819 = vadd.f32 %v809, %v817
      %v820 = vtanh.pop %v819
      %822 = vrot.lane.b32.xlu0 %v820, 32
      %v823 = vpop.permute.xlu0 %822
      %v825 = vmul.f32 %v803, %v823
      %827 = vrot.lane.b32.xlu0 %v825, 64
      %v828 = vpop.permute.xlu0 %827
      %830 = vst.msk [vmem:[%s648] sm:$0xff] %vm416, %v828
      %832 = vrot.lane.b32.xlu0 %v819, 96
      %v833 = vpop.permute.xlu0 %832
      %835 = vst.msk [vmem:[%s796] sm:$0xff] %vm416, %v833
      %836 = vst.msk [vmem:[%s378] sm:$0xff] %vm416, %v828
      %s837 = scalar_lea.vmem [#allocation4], 8
      %v838 = vld [vmem:[%s837] sm:$0xff]
      %v839 = vld [vmem:[#allocation2] sm:$0xff]
      %v841 = vsel %vm416, %v839, 0
      %843 = vmatprep.subr.mxu0 0.0
      %844 = vmatpush1.msra.mxu0 0.0
      %845 = vmatprep.subr.mxu0 0.0
      %846 = vmatpush1.msra.mxu0 0.0
      %847 = vmatprep.subr.mxu0 0.0
      %848 = vmatpush1.msra.mxu0 0.0
      %849 = vmatprep.subr.mxu0 0.0
      %850 = vmatpush1.msra.mxu0 0.0
      %851 = vmatprep.subr.mxu0 0.0
      %852 = vmatpush1.msra.mxu0 0.0
      %853 = vmatprep.subr.mxu0 0.0
      %854 = vmatpush1.msra.mxu0 0.0
      %855 = vmatprep.subr.mxu0 0.0
      %856 = vmatpush1.msra.mxu0 0.0
      %857 = vmatprep.subr.mxu0 0.0
      %858 = vmatpush1.msra.mxu0 0.0
      %859 = vmatprep.subr.mxu0 0.0
      %860 = vmatpush1.msra.mxu0 0.0
      %861 = vmatprep.subr.mxu0 0.0
      %862 = vmatpush1.msra.mxu0 0.0
      %863 = vmatprep.subr.mxu0 0.0
      %864 = vmatpush1.msra.mxu0 0.0
      %865 = vmatprep.subr.mxu0 0.0
      %866 = vmatpush1.msra.mxu0 0.0
      %867 = vmatprep.subr.mxu0 0.0
      %868 = vmatpush1.msra.mxu0 %v400
      %869 = vmatprep.subr.mxu0 0.0
      %870 = vmatpush1.msra.mxu0 %v399
      %871 = vmatprep.subr.mxu0 0.0
      %872 = vmatpush1.msra.mxu0 %v398
      %873 = vmatprep.subr.mxu0 0.0
      %874 = vmatpush1.msra.mxu0 %v397
      %875 = vmatprep.subr.mxu0 0.0
      %876 = vmatpush2.msra.mxu0 0.0
      %877 = vmatprep.subr.mxu0 0.0
      %878 = vmatpush2.msra.mxu0 0.0
      %879 = vmatprep.subr.mxu0 0.0
      %880 = vmatpush2.msra.mxu0 0.0
      %881 = vmatprep.subr.mxu0 0.0
      %882 = vmatpush2.msra.mxu0 0.0
      %883 = vmatprep.subr.mxu0 0.0
      %884 = vmatpush2.msra.mxu0 0.0
      %885 = vmatprep.subr.mxu0 0.0
      %886 = vmatpush2.msra.mxu0 0.0
      %887 = vmatprep.subr.mxu0 0.0
      %888 = vmatpush2.msra.mxu0 0.0
      %889 = vmatprep.subr.mxu0 0.0
      %890 = vmatpush2.msra.mxu0 0.0
      %891 = vmatprep.subr.mxu0 0.0
      %892 = vmatpush2.msra.mxu0 0.0
      %893 = vmatprep.subr.mxu0 0.0
      %894 = vmatpush2.msra.mxu0 0.0
      %895 = vmatprep.subr.mxu0 0.0
      %896 = vmatpush2.msra.mxu0 0.0
      %897 = vmatprep.subr.mxu0 0.0
      %898 = vmatpush2.msra.mxu0 0.0
      %899 = vmatprep.subr.mxu0 0.0
      %900 = vmatpush2.msra.mxu0 0.0
      %901 = vmatprep.subr.mxu0 0.0
      %902 = vmatpush2.msra.mxu0 0.0
      %903 = vmatprep.subr.mxu0 0.0
      %904 = vmatpush2.msra.mxu0 0.0
      %905 = vmatprep.subr.mxu0 0.0
      %906 = vmatpush2.msra.mxu0 0.0
      %907 = vmatprep.mubr.f32.mxu0 0.0
      %908 = vmatmul.mubr.f32.gmra.mxu0 %v841
      %v909 = vpop.f32.mrf.mxu0
      %v910 = vadd.f32 0.0, %v909
      %v911 = vpop.f32.mrf.mxu0
      %912 = vdwg.mxu0
      %v913 = vadd.f32 %v838, %v910
      %v914 = vld [vmem:[#allocation3] sm:$0xff]
      %v915 = vxor.u32 %v913, 2147483648
      %v916 = vmul.f32 %v915, 1.442695
      %v917 = vpow.pop %v916
      %v918 = vadd.f32 %v917, 1.0
      %v919 = vrcp.pop %v918
      %v920 = vmul.f32 1.0, %v919
      %v921 = vtanh.pop %v913
      %923 = vrot.lane.b32.xlu0 %v914, 32
      %v924 = vpop.permute.xlu0 %923
      %v926 = vmul.f32 %v920, %v924
      %928 = vrot.lane.b32.xlu0 %v921, 32
      %v929 = vpop.permute.xlu0 %928
      %v931 = vmul.f32 %v920, %v929
      %933 = vrot.lane.b32.xlu0 %v931, 32
      %v934 = vpop.permute.xlu0 %933
      %v936 = vadd.f32 %v926, %v934
      %v937 = vtanh.pop %v936
      %939 = vrot.lane.b32.xlu0 %v937, 32
      %v940 = vpop.permute.xlu0 %939
      %v942 = vmul.f32 %v920, %v940
      %944 = vrot.lane.b32.xlu0 %v942, 64
      %v945 = vpop.permute.xlu0 %944
      %947 = vst.msk [vmem:[#allocation2] sm:$0xff] %vm416, %v945
      %949 = vrot.lane.b32.xlu0 %v936, 96
      %v950 = vpop.permute.xlu0 %949
      %952 = vst.msk [vmem:[#allocation3] sm:$0xff] %vm416, %v950
      %v953 = vld [vmem:[%s648] sm:$0xff]
      %v955 = vsel %vm416, %v953, 0
      %957 = vmatprep.subr.mxu0 0.0
      %958 = vmatpush1.msra.mxu0 0.0
      %959 = vmatprep.subr.mxu0 0.0
      %960 = vmatpush1.msra.mxu0 0.0
      %961 = vmatprep.subr.mxu0 0.0
      %962 = vmatpush1.msra.mxu0 0.0
      %963 = vmatprep.subr.mxu0 0.0
      %964 = vmatpush1.msra.mxu0 0.0
      %965 = vmatprep.subr.mxu0 0.0
      %966 = vmatpush1.msra.mxu0 0.0
      %967 = vmatprep.subr.mxu0 0.0
      %968 = vmatpush1.msra.mxu0 0.0
      %969 = vmatprep.subr.mxu0 0.0
      %970 = vmatpush1.msra.mxu0 0.0
      %971 = vmatprep.subr.mxu0 0.0
      %972 = vmatpush1.msra.mxu0 0.0
      %973 = vmatprep.subr.mxu0 0.0
      %974 = vmatpush1.msra.mxu0 0.0
      %975 = vmatprep.subr.mxu0 0.0
      %976 = vmatpush1.msra.mxu0 0.0
      %977 = vmatprep.subr.mxu0 0.0
      %978 = vmatpush1.msra.mxu0 0.0
      %979 = vmatprep.subr.mxu0 0.0
      %980 = vmatpush1.msra.mxu0 0.0
      %981 = vmatprep.subr.mxu0 0.0
      %982 = vmatpush1.msra.mxu0 %v525
      %983 = vmatprep.subr.mxu0 0.0
      %984 = vmatpush1.msra.mxu0 %v524
      %985 = vmatprep.subr.mxu0 0.0
      %986 = vmatpush1.msra.mxu0 %v523
      %987 = vmatprep.subr.mxu0 0.0
      %988 = vmatpush1.msra.mxu0 %v522
      %989 = vmatprep.subr.mxu0 0.0
      %990 = vmatpush2.msra.mxu0 0.0
      %991 = vmatprep.subr.mxu0 0.0
      %992 = vmatpush2.msra.mxu0 0.0
      %993 = vmatprep.subr.mxu0 0.0
      %994 = vmatpush2.msra.mxu0 0.0
      %995 = vmatprep.subr.mxu0 0.0
      %996 = vmatpush2.msra.mxu0 0.0
      %997 = vmatprep.subr.mxu0 0.0
      %998 = vmatpush2.msra.mxu0 0.0
      %999 = vmatprep.subr.mxu0 0.0
      %1000 = vmatpush2.msra.mxu0 0.0
      %1001 = vmatprep.subr.mxu0 0.0
      %1002 = vmatpush2.msra.mxu0 0.0
      %1003 = vmatprep.subr.mxu0 0.0
      %1004 = vmatpush2.msra.mxu0 0.0
      %1005 = vmatprep.subr.mxu0 0.0
      %1006 = vmatpush2.msra.mxu0 0.0
      %1007 = vmatprep.subr.mxu0 0.0
      %1008 = vmatpush2.msra.mxu0 0.0
      %1009 = vmatprep.subr.mxu0 0.0
      %1010 = vmatpush2.msra.mxu0 0.0
      %1011 = vmatprep.subr.mxu0 0.0
      %1012 = vmatpush2.msra.mxu0 0.0
      %1013 = vmatprep.subr.mxu0 0.0
      %1014 = vmatpush2.msra.mxu0 0.0
      %1015 = vmatprep.subr.mxu0 0.0
      %1016 = vmatpush2.msra.mxu0 0.0
      %1017 = vmatprep.subr.mxu0 0.0
      %1018 = vmatpush2.msra.mxu0 0.0
      %1019 = vmatprep.subr.mxu0 0.0
      %1020 = vmatpush2.msra.mxu0 0.0
      %1021 = vmatprep.mubr.f32.mxu0 0.0
      %1022 = vmatmul.mubr.f32.gmra.mxu0 %v955
      %v1023 = vpop.f32.mrf.mxu0
      %v1024 = vadd.f32 0.0, %v1023
      %v1025 = vpop.f32.mrf.mxu0
      %1026 = vdwg.mxu0
      %v1027 = vsel %vm416, %v945, 0
      %1029 = vmatprep.subr.mxu0 0.0
      %1030 = vmatpush1.msra.mxu0 0.0
      %1031 = vmatprep.subr.mxu0 0.0
      %1032 = vmatpush1.msra.mxu0 0.0
      %1033 = vmatprep.subr.mxu0 0.0
      %1034 = vmatpush1.msra.mxu0 0.0
      %1035 = vmatprep.subr.mxu0 0.0
      %1036 = vmatpush1.msra.mxu0 0.0
      %1037 = vmatprep.subr.mxu0 0.0
      %1038 = vmatpush1.msra.mxu0 0.0
      %1039 = vmatprep.subr.mxu0 0.0
      %1040 = vmatpush1.msra.mxu0 0.0
      %1041 = vmatprep.subr.mxu0 0.0
      %1042 = vmatpush1.msra.mxu0 0.0
      %1043 = vmatprep.subr.mxu0 0.0
      %1044 = vmatpush1.msra.mxu0 0.0
      %1045 = vmatprep.subr.mxu0 0.0
      %1046 = vmatpush1.msra.mxu0 0.0
      %1047 = vmatprep.subr.mxu0 0.0
      %1048 = vmatpush1.msra.mxu0 0.0
      %1049 = vmatprep.subr.mxu0 0.0
      %1050 = vmatpush1.msra.mxu0 0.0
      %1051 = vmatprep.subr.mxu0 0.0
      %1052 = vmatpush1.msra.mxu0 0.0
      %1053 = vmatprep.subr.mxu0 0.0
      %1054 = vmatpush1.msra.mxu0 %v521
      %1055 = vmatprep.subr.mxu0 0.0
      %1056 = vmatpush1.msra.mxu0 %v520
      %1057 = vmatprep.subr.mxu0 0.0
      %1058 = vmatpush1.msra.mxu0 %v519
      %1059 = vmatprep.subr.mxu0 0.0
      %1060 = vmatpush1.msra.mxu0 %v518
      %1061 = vmatprep.subr.mxu0 0.0
      %1062 = vmatpush2.msra.mxu0 0.0
      %1063 = vmatprep.subr.mxu0 0.0
      %1064 = vmatpush2.msra.mxu0 0.0
      %1065 = vmatprep.subr.mxu0 0.0
      %1066 = vmatpush2.msra.mxu0 0.0
      %1067 = vmatprep.subr.mxu0 0.0
      %1068 = vmatpush2.msra.mxu0 0.0
      %1069 = vmatprep.subr.mxu0 0.0
      %1070 = vmatpush2.msra.mxu0 0.0
      %1071 = vmatprep.subr.mxu0 0.0
      %1072 = vmatpush2.msra.mxu0 0.0
      %1073 = vmatprep.subr.mxu0 0.0
      %1074 = vmatpush2.msra.mxu0 0.0
      %1075 = vmatprep.subr.mxu0 0.0
      %1076 = vmatpush2.msra.mxu0 0.0
      %1077 = vmatprep.subr.mxu0 0.0
      %1078 = vmatpush2.msra.mxu0 0.0
      %1079 = vmatprep.subr.mxu0 0.0
      %1080 = vmatpush2.msra.mxu0 0.0
      %1081 = vmatprep.subr.mxu0 0.0
      %1082 = vmatpush2.msra.mxu0 0.0
      %1083 = vmatprep.subr.mxu0 0.0
      %1084 = vmatpush2.msra.mxu0 0.0
      %1085 = vmatprep.subr.mxu0 0.0
      %1086 = vmatpush2.msra.mxu0 0.0
      %1087 = vmatprep.subr.mxu0 0.0
      %1088 = vmatpush2.msra.mxu0 0.0
      %1089 = vmatprep.subr.mxu0 0.0
      %1090 = vmatpush2.msra.mxu0 0.0
      %1091 = vmatprep.subr.mxu0 0.0
      %1092 = vmatpush2.msra.mxu0 0.0
      %1093 = vmatprep.mubr.f32.mxu0 0.0
      %1094 = vmatmul.mubr.f32.gmra.mxu0 %v1027
      %v1095 = vpop.f32.mrf.mxu0
      %v1096 = vadd.f32 %v1024, %v1095
      %v1097 = vpop.f32.mrf.mxu0
      %1098 = vdwg.mxu0
      %v1099 = vadd.f32 %v1096, %v531
      %v1100 = vld [vmem:[%s796] sm:$0xff]
      %v1101 = vxor.u32 %v1099, 2147483648
      %v1102 = vmul.f32 %v1101, 1.442695
      %v1103 = vpow.pop %v1102
      %v1104 = vadd.f32 %v1103, 1.0
      %v1105 = vrcp.pop %v1104
      %v1106 = vmul.f32 1.0, %v1105
      %v1107 = vtanh.pop %v1099
      %1109 = vrot.lane.b32.xlu0 %v1100, 32
      %v1110 = vpop.permute.xlu0 %1109
      %v1112 = vmul.f32 %v1106, %v1110
      %1114 = vrot.lane.b32.xlu0 %v1107, 32
      %v1115 = vpop.permute.xlu0 %1114
      %v1117 = vmul.f32 %v1106, %v1115
      %1119 = vrot.lane.b32.xlu0 %v1117, 32
      %v1120 = vpop.permute.xlu0 %1119
      %v1122 = vadd.f32 %v1112, %v1120
      %v1123 = vtanh.pop %v1122
      %1125 = vrot.lane.b32.xlu0 %v1123, 32
      %v1126 = vpop.permute.xlu0 %1125
      %v1128 = vmul.f32 %v1106, %v1126
      %1130 = vrot.lane.b32.xlu0 %v1128, 64
      %v1131 = vpop.permute.xlu0 %1130
      %1133 = vst.msk [vmem:[%s648] sm:$0xff] %vm416, %v1131
      %1135 = vrot.lane.b32.xlu0 %v1122, 96
      %v1136 = vpop.permute.xlu0 %1135
      %1138 = vst.msk [vmem:[%s796] sm:$0xff] %vm416, %v1136
      %s1139 = scalar_lea.vmem %s378, 8
      %1140 = vst.msk [vmem:[%s1139] sm:$0xff] %vm416, %v1131
      %s1141 = scalar_lea.vmem [#allocation4], 16
      %v1142 = vld [vmem:[%s1141] sm:$0xff]
      %v1143 = vld [vmem:[#allocation2] sm:$0xff]
      %v1145 = vsel %vm416, %v1143, 0
      %1147 = vmatprep.subr.mxu0 0.0
      %1148 = vmatpush1.msra.mxu0 0.0
      %1149 = vmatprep.subr.mxu0 0.0
      %1150 = vmatpush1.msra.mxu0 0.0
      %1151 = vmatprep.subr.mxu0 0.0
      %1152 = vmatpush1.msra.mxu0 0.0
      %1153 = vmatprep.subr.mxu0 0.0
      %1154 = vmatpush1.msra.mxu0 0.0
      %1155 = vmatprep.subr.mxu0 0.0
      %1156 = vmatpush1.msra.mxu0 0.0
      %1157 = vmatprep.subr.mxu0 0.0
      %1158 = vmatpush1.msra.mxu0 0.0
      %1159 = vmatprep.subr.mxu0 0.0
      %1160 = vmatpush1.msra.mxu0 0.0
      %1161 = vmatprep.subr.mxu0 0.0
      %1162 = vmatpush1.msra.mxu0 0.0
      %1163 = vmatprep.subr.mxu0 0.0
      %1164 = vmatpush1.msra.mxu0 0.0
      %1165 = vmatprep.subr.mxu0 0.0
      %1166 = vmatpush1.msra.mxu0 0.0
      %1167 = vmatprep.subr.mxu0 0.0
      %1168 = vmatpush1.msra.mxu0 0.0
      %1169 = vmatprep.subr.mxu0 0.0
      %1170 = vmatpush1.msra.mxu0 0.0
      %1171 = vmatprep.subr.mxu0 0.0
      %1172 = vmatpush1.msra.mxu0 %v400
      %1173 = vmatprep.subr.mxu0 0.0
      %1174 = vmatpush1.msra.mxu0 %v399
      %1175 = vmatprep.subr.mxu0 0.0
      %1176 = vmatpush1.msra.mxu0 %v398
      %1177 = vmatprep.subr.mxu0 0.0
      %1178 = vmatpush1.msra.mxu0 %v397
      %1179 = vmatprep.subr.mxu0 0.0
      %1180 = vmatpush2.msra.mxu0 0.0
      %1181 = vmatprep.subr.mxu0 0.0
      %1182 = vmatpush2.msra.mxu0 0.0
      %1183 = vmatprep.subr.mxu0 0.0
      %1184 = vmatpush2.msra.mxu0 0.0
      %1185 = vmatprep.subr.mxu0 0.0
      %1186 = vmatpush2.msra.mxu0 0.0
      %1187 = vmatprep.subr.mxu0 0.0
      %1188 = vmatpush2.msra.mxu0 0.0
      %1189 = vmatprep.subr.mxu0 0.0
      %1190 = vmatpush2.msra.mxu0 0.0
      %1191 = vmatprep.subr.mxu0 0.0
      %1192 = vmatpush2.msra.mxu0 0.0
      %1193 = vmatprep.subr.mxu0 0.0
      %1194 = vmatpush2.msra.mxu0 0.0
      %1195 = vmatprep.subr.mxu0 0.0
      %1196 = vmatpush2.msra.mxu0 0.0
      %1197 = vmatprep.subr.mxu0 0.0
      %1198 = vmatpush2.msra.mxu0 0.0
      %1199 = vmatprep.subr.mxu0 0.0
      %1200 = vmatpush2.msra.mxu0 0.0
      %1201 = vmatprep.subr.mxu0 0.0
      %1202 = vmatpush2.msra.mxu0 0.0
      %1203 = vmatprep.subr.mxu0 0.0
      %1204 = vmatpush2.msra.mxu0 0.0
      %1205 = vmatprep.subr.mxu0 0.0
      %1206 = vmatpush2.msra.mxu0 0.0
      %1207 = vmatprep.subr.mxu0 0.0
      %1208 = vmatpush2.msra.mxu0 0.0
      %1209 = vmatprep.subr.mxu0 0.0
      %1210 = vmatpush2.msra.mxu0 0.0
      %1211 = vmatprep.mubr.f32.mxu0 0.0
      %1212 = vmatmul.mubr.f32.gmra.mxu0 %v1145
      %v1213 = vpop.f32.mrf.mxu0
      %v1214 = vadd.f32 0.0, %v1213
      %v1215 = vpop.f32.mrf.mxu0
      %1216 = vdwg.mxu0
      %v1217 = vadd.f32 %v1142, %v1214
      %v1218 = vld [vmem:[#allocation3] sm:$0xff]
      %v1219 = vxor.u32 %v1217, 2147483648
      %v1220 = vmul.f32 %v1219, 1.442695
      %v1221 = vpow.pop %v1220
      %v1222 = vadd.f32 %v1221, 1.0
      %v1223 = vrcp.pop %v1222
      %v1224 = vmul.f32 1.0, %v1223
      %v1225 = vtanh.pop %v1217
      %1227 = vrot.lane.b32.xlu0 %v1218, 32
      %v1228 = vpop.permute.xlu0 %1227
      %v1230 = vmul.f32 %v1224, %v1228
      %1232 = vrot.lane.b32.xlu0 %v1225, 32
      %v1233 = vpop.permute.xlu0 %1232
      %v1235 = vmul.f32 %v1224, %v1233
      %1237 = vrot.lane.b32.xlu0 %v1235, 32
      %v1238 = vpop.permute.xlu0 %1237
      %v1240 = vadd.f32 %v1230, %v1238
      %v1241 = vtanh.pop %v1240
      %1243 = vrot.lane.b32.xlu0 %v1241, 32
      %v1244 = vpop.permute.xlu0 %1243
      %v1246 = vmul.f32 %v1224, %v1244
      %1248 = vrot.lane.b32.xlu0 %v1246, 64
      %v1249 = vpop.permute.xlu0 %1248
      %1251 = vst.msk [vmem:[#allocation2] sm:$0xff] %vm416, %v1249
      %1253 = vrot.lane.b32.xlu0 %v1240, 96
      %v1254 = vpop.permute.xlu0 %1253
      %1256 = vst.msk [vmem:[#allocation3] sm:$0xff] %vm416, %v1254
      %v1257 = vld [vmem:[%s648] sm:$0xff]
      %v1259 = vsel %vm416, %v1257, 0
      %1261 = vmatprep.subr.mxu0 0.0
      %1262 = vmatpush1.msra.mxu0 0.0
      %1263 = vmatprep.subr.mxu0 0.0
      %1264 = vmatpush1.msra.mxu0 0.0
      %1265 = vmatprep.subr.mxu0 0.0
      %1266 = vmatpush1.msra.mxu0 0.0
      %1267 = vmatprep.subr.mxu0 0.0
      %1268 = vmatpush1.msra.mxu0 0.0
      %1269 = vmatprep.subr.mxu0 0.0
      %1270 = vmatpush1.msra.mxu0 0.0
      %1271 = vmatprep.subr.mxu0 0.0
      %1272 = vmatpush1.msra.mxu0 0.0
      %1273 = vmatprep.subr.mxu0 0.0
      %1274 = vmatpush1.msra.mxu0 0.0
      %1275 = vmatprep.subr.mxu0 0.0
      %1276 = vmatpush1.msra.mxu0 0.0
      %1277 = vmatprep.subr.mxu0 0.0
      %1278 = vmatpush1.msra.mxu0 0.0
      %1279 = vmatprep.subr.mxu0 0.0
      %1280 = vmatpush1.msra.mxu0 0.0
      %1281 = vmatprep.subr.mxu0 0.0
      %1282 = vmatpush1.msra.mxu0 0.0
      %1283 = vmatprep.subr.mxu0 0.0
      %1284 = vmatpush1.msra.mxu0 0.0
      %1285 = vmatprep.subr.mxu0 0.0
      %1286 = vmatpush1.msra.mxu0 %v525
      %1287 = vmatprep.subr.mxu0 0.0
      %1288 = vmatpush1.msra.mxu0 %v524
      %1289 = vmatprep.subr.mxu0 0.0
      %1290 = vmatpush1.msra.mxu0 %v523
      %1291 = vmatprep.subr.mxu0 0.0
      %1292 = vmatpush1.msra.mxu0 %v522
      %1293 = vmatprep.subr.mxu0 0.0
      %1294 = vmatpush2.msra.mxu0 0.0
      %1295 = vmatprep.subr.mxu0 0.0
      %1296 = vmatpush2.msra.mxu0 0.0
      %1297 = vmatprep.subr.mxu0 0.0
      %1298 = vmatpush2.msra.mxu0 0.0
      %1299 = vmatprep.subr.mxu0 0.0
      %1300 = vmatpush2.msra.mxu0 0.0
      %1301 = vmatprep.subr.mxu0 0.0
      %1302 = vmatpush2.msra.mxu0 0.0
      %1303 = vmatprep.subr.mxu0 0.0
      %1304 = vmatpush2.msra.mxu0 0.0
      %1305 = vmatprep.subr.mxu0 0.0
      %1306 = vmatpush2.msra.mxu0 0.0
      %1307 = vmatprep.subr.mxu0 0.0
      %1308 = vmatpush2.msra.mxu0 0.0
      %1309 = vmatprep.subr.mxu0 0.0
      %1310 = vmatpush2.msra.mxu0 0.0
      %1311 = vmatprep.subr.mxu0 0.0
      %1312 = vmatpush2.msra.mxu0 0.0
      %1313 = vmatprep.subr.mxu0 0.0
      %1314 = vmatpush2.msra.mxu0 0.0
      %1315 = vmatprep.subr.mxu0 0.0
      %1316 = vmatpush2.msra.mxu0 0.0
      %1317 = vmatprep.subr.mxu0 0.0
      %1318 = vmatpush2.msra.mxu0 0.0
      %1319 = vmatprep.subr.mxu0 0.0
      %1320 = vmatpush2.msra.mxu0 0.0
      %1321 = vmatprep.subr.mxu0 0.0
      %1322 = vmatpush2.msra.mxu0 0.0
      %1323 = vmatprep.subr.mxu0 0.0
      %1324 = vmatpush2.msra.mxu0 0.0
      %1325 = vmatprep.mubr.f32.mxu0 0.0
      %1326 = vmatmul.mubr.f32.gmra.mxu0 %v1259
      %v1327 = vpop.f32.mrf.mxu0
      %v1328 = vadd.f32 0.0, %v1327
      %v1329 = vpop.f32.mrf.mxu0
      %1330 = vdwg.mxu0
      %v1331 = vsel %vm416, %v1249, 0
      %1333 = vmatprep.subr.mxu0 0.0
      %1334 = vmatpush1.msra.mxu0 0.0
      %1335 = vmatprep.subr.mxu0 0.0
      %1336 = vmatpush1.msra.mxu0 0.0
      %1337 = vmatprep.subr.mxu0 0.0
      %1338 = vmatpush1.msra.mxu0 0.0
      %1339 = vmatprep.subr.mxu0 0.0
      %1340 = vmatpush1.msra.mxu0 0.0
      %1341 = vmatprep.subr.mxu0 0.0
      %1342 = vmatpush1.msra.mxu0 0.0
      %1343 = vmatprep.subr.mxu0 0.0
      %1344 = vmatpush1.msra.mxu0 0.0
      %1345 = vmatprep.subr.mxu0 0.0
      %1346 = vmatpush1.msra.mxu0 0.0
      %1347 = vmatprep.subr.mxu0 0.0
      %1348 = vmatpush1.msra.mxu0 0.0
      %1349 = vmatprep.subr.mxu0 0.0
      %1350 = vmatpush1.msra.mxu0 0.0
      %1351 = vmatprep.subr.mxu0 0.0
      %1352 = vmatpush1.msra.mxu0 0.0
      %1353 = vmatprep.subr.mxu0 0.0
      %1354 = vmatpush1.msra.mxu0 0.0
      %1355 = vmatprep.subr.mxu0 0.0
      %1356 = vmatpush1.msra.mxu0 0.0
      %1357 = vmatprep.subr.mxu0 0.0
      %1358 = vmatpush1.msra.mxu0 %v521
      %1359 = vmatprep.subr.mxu0 0.0
      %1360 = vmatpush1.msra.mxu0 %v520
      %1361 = vmatprep.subr.mxu0 0.0
      %1362 = vmatpush1.msra.mxu0 %v519
      %1363 = vmatprep.subr.mxu0 0.0
      %1364 = vmatpush1.msra.mxu0 %v518
      %1365 = vmatprep.subr.mxu0 0.0
      %1366 = vmatpush2.msra.mxu0 0.0
      %1367 = vmatprep.subr.mxu0 0.0
      %1368 = vmatpush2.msra.mxu0 0.0
      %1369 = vmatprep.subr.mxu0 0.0
      %1370 = vmatpush2.msra.mxu0 0.0
      %1371 = vmatprep.subr.mxu0 0.0
      %1372 = vmatpush2.msra.mxu0 0.0
      %1373 = vmatprep.subr.mxu0 0.0
      %1374 = vmatpush2.msra.mxu0 0.0
      %1375 = vmatprep.subr.mxu0 0.0
      %1376 = vmatpush2.msra.mxu0 0.0
      %1377 = vmatprep.subr.mxu0 0.0
      %1378 = vmatpush2.msra.mxu0 0.0
      %1379 = vmatprep.subr.mxu0 0.0
      %1380 = vmatpush2.msra.mxu0 0.0
      %1381 = vmatprep.subr.mxu0 0.0
      %1382 = vmatpush2.msra.mxu0 0.0
      %1383 = vmatprep.subr.mxu0 0.0
      %1384 = vmatpush2.msra.mxu0 0.0
      %1385 = vmatprep.subr.mxu0 0.0
      %1386 = vmatpush2.msra.mxu0 0.0
      %1387 = vmatprep.subr.mxu0 0.0
      %1388 = vmatpush2.msra.mxu0 0.0
      %1389 = vmatprep.subr.mxu0 0.0
      %1390 = vmatpush2.msra.mxu0 0.0
      %1391 = vmatprep.subr.mxu0 0.0
      %1392 = vmatpush2.msra.mxu0 0.0
      %1393 = vmatprep.subr.mxu0 0.0
      %1394 = vmatpush2.msra.mxu0 0.0
      %1395 = vmatprep.subr.mxu0 0.0
      %1396 = vmatpush2.msra.mxu0 0.0
      %1397 = vmatprep.mubr.f32.mxu0 0.0
      %1398 = vmatmul.mubr.f32.gmra.mxu0 %v1331
      %v1399 = vpop.f32.mrf.mxu0
      %v1400 = vadd.f32 %v1328, %v1399
      %v1401 = vpop.f32.mrf.mxu0
      %1402 = vdwg.mxu0
      %v1403 = vadd.f32 %v1400, %v531
      %v1404 = vld [vmem:[%s796] sm:$0xff]
      %v1405 = vxor.u32 %v1403, 2147483648
      %v1406 = vmul.f32 %v1405, 1.442695
      %v1407 = vpow.pop %v1406
      %v1408 = vadd.f32 %v1407, 1.0
      %v1409 = vrcp.pop %v1408
      %v1410 = vmul.f32 1.0, %v1409
      %v1411 = vtanh.pop %v1403
      %1413 = vrot.lane.b32.xlu0 %v1404, 32
      %v1414 = vpop.permute.xlu0 %1413
      %v1416 = vmul.f32 %v1410, %v1414
      %1418 = vrot.lane.b32.xlu0 %v1411, 32
      %v1419 = vpop.permute.xlu0 %1418
      %v1421 = vmul.f32 %v1410, %v1419
      %1423 = vrot.lane.b32.xlu0 %v1421, 32
      %v1424 = vpop.permute.xlu0 %1423
      %v1426 = vadd.f32 %v1416, %v1424
      %v1427 = vtanh.pop %v1426
      %1429 = vrot.lane.b32.xlu0 %v1427, 32
      %v1430 = vpop.permute.xlu0 %1429
      %v1432 = vmul.f32 %v1410, %v1430
      %1434 = vrot.lane.b32.xlu0 %v1432, 64
      %v1435 = vpop.permute.xlu0 %1434
      %1437 = vst.msk [vmem:[%s648] sm:$0xff] %vm416, %v1435
      %1439 = vrot.lane.b32.xlu0 %v1426, 96
      %v1440 = vpop.permute.xlu0 %1439
      %1442 = vst.msk [vmem:[%s796] sm:$0xff] %vm416, %v1440
      %s1443 = scalar_lea.vmem %s378, 16
      %1444 = vst.msk [vmem:[%s1443] sm:$0xff] %vm416, %v1435
      %s1445 = scalar_lea.vmem [#allocation4], 24
      %v1446 = vld [vmem:[%s1445] sm:$0xff]
      %v1447 = vld [vmem:[#allocation2] sm:$0xff]
      %v1449 = vsel %vm416, %v1447, 0
      %1451 = vmatprep.subr.mxu0 0.0
      %1452 = vmatpush1.msra.mxu0 0.0
      %1453 = vmatprep.subr.mxu0 0.0
      %1454 = vmatpush1.msra.mxu0 0.0
      %1455 = vmatprep.subr.mxu0 0.0
      %1456 = vmatpush1.msra.mxu0 0.0
      %1457 = vmatprep.subr.mxu0 0.0
      %1458 = vmatpush1.msra.mxu0 0.0
      %1459 = vmatprep.subr.mxu0 0.0
      %1460 = vmatpush1.msra.mxu0 0.0
      %1461 = vmatprep.subr.mxu0 0.0
      %1462 = vmatpush1.msra.mxu0 0.0
      %1463 = vmatprep.subr.mxu0 0.0
      %1464 = vmatpush1.msra.mxu0 0.0
      %1465 = vmatprep.subr.mxu0 0.0
      %1466 = vmatpush1.msra.mxu0 0.0
      %1467 = vmatprep.subr.mxu0 0.0
      %1468 = vmatpush1.msra.mxu0 0.0
      %1469 = vmatprep.subr.mxu0 0.0
      %1470 = vmatpush1.msra.mxu0 0.0
      %1471 = vmatprep.subr.mxu0 0.0
      %1472 = vmatpush1.msra.mxu0 0.0
      %1473 = vmatprep.subr.mxu0 0.0
      %1474 = vmatpush1.msra.mxu0 0.0
      %1475 = vmatprep.subr.mxu0 0.0
      %1476 = vmatpush1.msra.mxu0 %v400
      %1477 = vmatprep.subr.mxu0 0.0
      %1478 = vmatpush1.msra.mxu0 %v399
      %1479 = vmatprep.subr.mxu0 0.0
      %1480 = vmatpush1.msra.mxu0 %v398
      %1481 = vmatprep.subr.mxu0 0.0
      %1482 = vmatpush1.msra.mxu0 %v397
      %1483 = vmatprep.subr.mxu0 0.0
      %1484 = vmatpush2.msra.mxu0 0.0
      %1485 = vmatprep.subr.mxu0 0.0
      %1486 = vmatpush2.msra.mxu0 0.0
      %1487 = vmatprep.subr.mxu0 0.0
      %1488 = vmatpush2.msra.mxu0 0.0
      %1489 = vmatprep.subr.mxu0 0.0
      %1490 = vmatpush2.msra.mxu0 0.0
      %1491 = vmatprep.subr.mxu0 0.0
      %1492 = vmatpush2.msra.mxu0 0.0
      %1493 = vmatprep.subr.mxu0 0.0
      %1494 = vmatpush2.msra.mxu0 0.0
      %1495 = vmatprep.subr.mxu0 0.0
      %1496 = vmatpush2.msra.mxu0 0.0
      %1497 = vmatprep.subr.mxu0 0.0
      %1498 = vmatpush2.msra.mxu0 0.0
      %1499 = vmatprep.subr.mxu0 0.0
      %1500 = vmatpush2.msra.mxu0 0.0
      %1501 = vmatprep.subr.mxu0 0.0
      %1502 = vmatpush2.msra.mxu0 0.0
      %1503 = vmatprep.subr.mxu0 0.0
      %1504 = vmatpush2.msra.mxu0 0.0
      %1505 = vmatprep.subr.mxu0 0.0
      %1506 = vmatpush2.msra.mxu0 0.0
      %1507 = vmatprep.subr.mxu0 0.0
      %1508 = vmatpush2.msra.mxu0 0.0
      %1509 = vmatprep.subr.mxu0 0.0
      %1510 = vmatpush2.msra.mxu0 0.0
      %1511 = vmatprep.subr.mxu0 0.0
      %1512 = vmatpush2.msra.mxu0 0.0
      %1513 = vmatprep.subr.mxu0 0.0
      %1514 = vmatpush2.msra.mxu0 0.0
      %1515 = vmatprep.mubr.f32.mxu0 0.0
      %1516 = vmatmul.mubr.f32.gmra.mxu0 %v1449
      %v1517 = vpop.f32.mrf.mxu0
      %v1518 = vadd.f32 0.0, %v1517
      %v1519 = vpop.f32.mrf.mxu0
      %1520 = vdwg.mxu0
      %v1521 = vadd.f32 %v1446, %v1518
      %v1522 = vld [vmem:[#allocation3] sm:$0xff]
      %v1523 = vxor.u32 %v1521, 2147483648
      %v1524 = vmul.f32 %v1523, 1.442695
      %v1525 = vpow.pop %v1524
      %v1526 = vadd.f32 %v1525, 1.0
      %v1527 = vrcp.pop %v1526
      %v1528 = vmul.f32 1.0, %v1527
      %v1529 = vtanh.pop %v1521
      %1531 = vrot.lane.b32.xlu0 %v1522, 32
      %v1532 = vpop.permute.xlu0 %1531
      %v1534 = vmul.f32 %v1528, %v1532
      %1536 = vrot.lane.b32.xlu0 %v1529, 32
      %v1537 = vpop.permute.xlu0 %1536
      %v1539 = vmul.f32 %v1528, %v1537
      %1541 = vrot.lane.b32.xlu0 %v1539, 32
      %v1542 = vpop.permute.xlu0 %1541
      %v1544 = vadd.f32 %v1534, %v1542
      %v1545 = vtanh.pop %v1544
      %1547 = vrot.lane.b32.xlu0 %v1545, 32
      %v1548 = vpop.permute.xlu0 %1547
      %v1550 = vmul.f32 %v1528, %v1548
      %1552 = vrot.lane.b32.xlu0 %v1550, 64
      %v1553 = vpop.permute.xlu0 %1552
      %1555 = vst.msk [vmem:[#allocation2] sm:$0xff] %vm416, %v1553
      %1557 = vrot.lane.b32.xlu0 %v1544, 96
      %v1558 = vpop.permute.xlu0 %1557
      %1560 = vst.msk [vmem:[#allocation3] sm:$0xff] %vm416, %v1558
      %v1561 = vld [vmem:[%s648] sm:$0xff]
      %v1563 = vsel %vm416, %v1561, 0
      %1565 = vmatprep.subr.mxu0 0.0
      %1566 = vmatpush1.msra.mxu0 0.0
      %1567 = vmatprep.subr.mxu0 0.0
      %1568 = vmatpush1.msra.mxu0 0.0
      %1569 = vmatprep.subr.mxu0 0.0
      %1570 = vmatpush1.msra.mxu0 0.0
      %1571 = vmatprep.subr.mxu0 0.0
      %1572 = vmatpush1.msra.mxu0 0.0
      %1573 = vmatprep.subr.mxu0 0.0
      %1574 = vmatpush1.msra.mxu0 0.0
      %1575 = vmatprep.subr.mxu0 0.0
      %1576 = vmatpush1.msra.mxu0 0.0
      %1577 = vmatprep.subr.mxu0 0.0
      %1578 = vmatpush1.msra.mxu0 0.0
      %1579 = vmatprep.subr.mxu0 0.0
      %1580 = vmatpush1.msra.mxu0 0.0
      %1581 = vmatprep.subr.mxu0 0.0
      %1582 = vmatpush1.msra.mxu0 0.0
      %1583 = vmatprep.subr.mxu0 0.0
      %1584 = vmatpush1.msra.mxu0 0.0
      %1585 = vmatprep.subr.mxu0 0.0
      %1586 = vmatpush1.msra.mxu0 0.0
      %1587 = vmatprep.subr.mxu0 0.0
      %1588 = vmatpush1.msra.mxu0 0.0
      %1589 = vmatprep.subr.mxu0 0.0
      %1590 = vmatpush1.msra.mxu0 %v525
      %1591 = vmatprep.subr.mxu0 0.0
      %1592 = vmatpush1.msra.mxu0 %v524
      %1593 = vmatprep.subr.mxu0 0.0
      %1594 = vmatpush1.msra.mxu0 %v523
      %1595 = vmatprep.subr.mxu0 0.0
      %1596 = vmatpush1.msra.mxu0 %v522
      %1597 = vmatprep.subr.mxu0 0.0
      %1598 = vmatpush2.msra.mxu0 0.0
      %1599 = vmatprep.subr.mxu0 0.0
      %1600 = vmatpush2.msra.mxu0 0.0
      %1601 = vmatprep.subr.mxu0 0.0
      %1602 = vmatpush2.msra.mxu0 0.0
      %1603 = vmatprep.subr.mxu0 0.0
      %1604 = vmatpush2.msra.mxu0 0.0
      %1605 = vmatprep.subr.mxu0 0.0
      %1606 = vmatpush2.msra.mxu0 0.0
      %1607 = vmatprep.subr.mxu0 0.0
      %1608 = vmatpush2.msra.mxu0 0.0
      %1609 = vmatprep.subr.mxu0 0.0
      %1610 = vmatpush2.msra.mxu0 0.0
      %1611 = vmatprep.subr.mxu0 0.0
      %1612 = vmatpush2.msra.mxu0 0.0
      %1613 = vmatprep.subr.mxu0 0.0
      %1614 = vmatpush2.msra.mxu0 0.0
      %1615 = vmatprep.subr.mxu0 0.0
      %1616 = vmatpush2.msra.mxu0 0.0
      %1617 = vmatprep.subr.mxu0 0.0
      %1618 = vmatpush2.msra.mxu0 0.0
      %1619 = vmatprep.subr.mxu0 0.0
      %1620 = vmatpush2.msra.mxu0 0.0
      %1621 = vmatprep.subr.mxu0 0.0
      %1622 = vmatpush2.msra.mxu0 0.0
      %1623 = vmatprep.subr.mxu0 0.0
      %1624 = vmatpush2.msra.mxu0 0.0
      %1625 = vmatprep.subr.mxu0 0.0
      %1626 = vmatpush2.msra.mxu0 0.0
      %1627 = vmatprep.subr.mxu0 0.0
      %1628 = vmatpush2.msra.mxu0 0.0
      %1629 = vmatprep.mubr.f32.mxu0 0.0
      %1630 = vmatmul.mubr.f32.gmra.mxu0 %v1563
      %v1631 = vpop.f32.mrf.mxu0
      %v1632 = vadd.f32 0.0, %v1631
      %v1633 = vpop.f32.mrf.mxu0
      %1634 = vdwg.mxu0
      %v1635 = vsel %vm416, %v1553, 0
      %1637 = vmatprep.subr.mxu0 0.0
      %1638 = vmatpush1.msra.mxu0 0.0
      %1639 = vmatprep.subr.mxu0 0.0
      %1640 = vmatpush1.msra.mxu0 0.0
      %1641 = vmatprep.subr.mxu0 0.0
      %1642 = vmatpush1.msra.mxu0 0.0
      %1643 = vmatprep.subr.mxu0 0.0
      %1644 = vmatpush1.msra.mxu0 0.0
      %1645 = vmatprep.subr.mxu0 0.0
      %1646 = vmatpush1.msra.mxu0 0.0
      %1647 = vmatprep.subr.mxu0 0.0
      %1648 = vmatpush1.msra.mxu0 0.0
      %1649 = vmatprep.subr.mxu0 0.0
      %1650 = vmatpush1.msra.mxu0 0.0
      %1651 = vmatprep.subr.mxu0 0.0
      %1652 = vmatpush1.msra.mxu0 0.0
      %1653 = vmatprep.subr.mxu0 0.0
      %1654 = vmatpush1.msra.mxu0 0.0
      %1655 = vmatprep.subr.mxu0 0.0
      %1656 = vmatpush1.msra.mxu0 0.0
      %1657 = vmatprep.subr.mxu0 0.0
      %1658 = vmatpush1.msra.mxu0 0.0
      %1659 = vmatprep.subr.mxu0 0.0
      %1660 = vmatpush1.msra.mxu0 0.0
      %1661 = vmatprep.subr.mxu0 0.0
      %1662 = vmatpush1.msra.mxu0 %v521
      %1663 = vmatprep.subr.mxu0 0.0
      %1664 = vmatpush1.msra.mxu0 %v520
      %1665 = vmatprep.subr.mxu0 0.0
      %1666 = vmatpush1.msra.mxu0 %v519
      %1667 = vmatprep.subr.mxu0 0.0
      %1668 = vmatpush1.msra.mxu0 %v518
      %1669 = vmatprep.subr.mxu0 0.0
      %1670 = vmatpush2.msra.mxu0 0.0
      %1671 = vmatprep.subr.mxu0 0.0
      %1672 = vmatpush2.msra.mxu0 0.0
      %1673 = vmatprep.subr.mxu0 0.0
      %1674 = vmatpush2.msra.mxu0 0.0
      %1675 = vmatprep.subr.mxu0 0.0
      %1676 = vmatpush2.msra.mxu0 0.0
      %1677 = vmatprep.subr.mxu0 0.0
      %1678 = vmatpush2.msra.mxu0 0.0
      %1679 = vmatprep.subr.mxu0 0.0
      %1680 = vmatpush2.msra.mxu0 0.0
      %1681 = vmatprep.subr.mxu0 0.0
      %1682 = vmatpush2.msra.mxu0 0.0
      %1683 = vmatprep.subr.mxu0 0.0
      %1684 = vmatpush2.msra.mxu0 0.0
      %1685 = vmatprep.subr.mxu0 0.0
      %1686 = vmatpush2.msra.mxu0 0.0
      %1687 = vmatprep.subr.mxu0 0.0
      %1688 = vmatpush2.msra.mxu0 0.0
      %1689 = vmatprep.subr.mxu0 0.0
      %1690 = vmatpush2.msra.mxu0 0.0
      %1691 = vmatprep.subr.mxu0 0.0
      %1692 = vmatpush2.msra.mxu0 0.0
      %1693 = vmatprep.subr.mxu0 0.0
      %1694 = vmatpush2.msra.mxu0 0.0
      %1695 = vmatprep.subr.mxu0 0.0
      %1696 = vmatpush2.msra.mxu0 0.0
      %1697 = vmatprep.subr.mxu0 0.0
      %1698 = vmatpush2.msra.mxu0 0.0
      %1699 = vmatprep.subr.mxu0 0.0
      %1700 = vmatpush2.msra.mxu0 0.0
      %1701 = vmatprep.mubr.f32.mxu0 0.0
      %1702 = vmatmul.mubr.f32.gmra.mxu0 %v1635
      %v1703 = vpop.f32.mrf.mxu0
      %v1704 = vadd.f32 %v1632, %v1703
      %v1705 = vpop.f32.mrf.mxu0
      %1706 = vdwg.mxu0
      %v1707 = vadd.f32 %v1704, %v531
      %v1708 = vld [vmem:[%s796] sm:$0xff]
      %v1709 = vxor.u32 %v1707, 2147483648
      %v1710 = vmul.f32 %v1709, 1.442695
      %v1711 = vpow.pop %v1710
      %v1712 = vadd.f32 %v1711, 1.0
      %v1713 = vrcp.pop %v1712
      %v1714 = vmul.f32 1.0, %v1713
      %v1715 = vtanh.pop %v1707
      %1717 = vrot.lane.b32.xlu0 %v1708, 32
      %v1718 = vpop.permute.xlu0 %1717
      %v1720 = vmul.f32 %v1714, %v1718
      %1722 = vrot.lane.b32.xlu0 %v1715, 32
      %v1723 = vpop.permute.xlu0 %1722
      %v1725 = vmul.f32 %v1714, %v1723
      %1727 = vrot.lane.b32.xlu0 %v1725, 32
      %v1728 = vpop.permute.xlu0 %1727
      %v1730 = vadd.f32 %v1720, %v1728
      %v1731 = vtanh.pop %v1730
      %1733 = vrot.lane.b32.xlu0 %v1731, 32
      %v1734 = vpop.permute.xlu0 %1733
      %v1736 = vmul.f32 %v1714, %v1734
      %1738 = vrot.lane.b32.xlu0 %v1736, 64
      %v1739 = vpop.permute.xlu0 %1738
      %1741 = vst.msk [vmem:[%s648] sm:$0xff] %vm416, %v1739
      %1743 = vrot.lane.b32.xlu0 %v1730, 96
      %v1744 = vpop.permute.xlu0 %1743
      %1746 = vst.msk [vmem:[%s796] sm:$0xff] %vm416, %v1744
      %s1747 = scalar_lea.vmem %s378, 24
      %1748 = vst.msk [vmem:[%s1747] sm:$0xff] %vm416, %v1739
      %p1749 = scmp.eq.s32.totalorder %s26, 1
      // Predicated region
      $region53: #{_lstm_lm_forward_impl.2} parent=47 // pred_check
        %p1750 = pneg %p1749
      $region54: #{_lstm_lm_forward_impl.2} parent=47 // pred_check_branch
        %1752 = sbr.rel (%p1750) target = $region56
      $region55: #{_lstm_lm_forward_impl.2} parent=47 // pred_region
        %v1753 = vld [vmem:[#allocation2] sm:$0xff]
        %v1754 = vld [vmem:[#allocation2 + $0x8] sm:$0xff]
        %1755 = vst.msk [vmem:[%s383] sm:$0xff] %vm416, %v1753
        %1756 = vst.msk [vmem:[%s383 + $0x8] sm:$0xff] %vm416, %v1754
        %v1757 = vld [vmem:[#allocation3] sm:$0xff]
        %v1758 = vld [vmem:[#allocation3 + $0x8] sm:$0xff]
        %1759 = vst.msk [vmem:[%s387] sm:$0xff] %vm416, %v1757
        %1760 = vst.msk [vmem:[%s387 + $0x8] sm:$0xff] %vm416, %v1758
      $region56: #{_lstm_lm_forward_impl.2} parent=47 // pred_fallthru
        _
      %s1761 = smul.u32 4, %s26
      %p1762 = scmp.lt.s32.totalorder %s1761, 7
      %s1763 = scalar_select %p1762, %s1761, 7
      %p1764 = scmp.lt.s32.totalorder %s25, 0
      %s1765 = scalar_select %p1764, %s25, 0
      %s1766 = sadd.s32 %s1765, %s1763
      %s1767 = smul.addr %s1766, 8
      %s1768 = scalar_lea.vmem %s7, %s1767
      %p1769 = scmp.lt.s32.totalorder %s25, 0
      %s1770 = scalar_select %p1769, %s25, 0
      %s1771 = smul.addr %s1770, 8
      %s1772 = scalar_lea.vmem %s8, %s1771
      %p1773 = scmp.lt.s32.totalorder %s25, 0
      %s1774 = scalar_select %p1773, %s25, 0
      %s1775 = smul.addr %s1774, 8
      %s1776 = scalar_lea.vmem %s9, %s1775
      // Predicated region
      $region57: #{_lstm_lm_forward_impl.2} parent=47 // pred_check
        %p1777 = pneg %p207
      $region58: #{_lstm_lm_forward_impl.2} parent=47 // pred_check_branch
        %1779 = sbr.rel (%p1777) target = $region60
      $region59: #{_lstm_lm_forward_impl.2} parent=47 // pred_region
        %s1780 = smul.u32 4, %s26
      $region60: #{_lstm_lm_forward_impl.2} parent=47 // pred_fallthru
        _
      // Predicated region
      $region61: #{_lstm_lm_forward_impl.2} parent=47 // pred_check
        %p1781 = pneg %p233
      $region62: #{_lstm_lm_forward_impl.2} parent=47 // pred_check_branch
        %1783 = sbr.rel (%p1781) target = $region64
      $region63: #{_lstm_lm_forward_impl.2} parent=47 // pred_region
        _
      $region64: #{_lstm_lm_forward_impl.2} parent=47 // pred_fallthru
        _
      // Predicated region
      $region65: #{_lstm_lm_forward_impl.2} parent=47 // pred_check
        %p1784 = pneg %p259
      $region66: #{_lstm_lm_forward_impl.2} parent=47 // pred_check_branch
        %1786 = sbr.rel (%p1784) target = $region68
      $region67: #{_lstm_lm_forward_impl.2} parent=47 // pred_region
        _
      $region68: #{_lstm_lm_forward_impl.2} parent=47 // pred_fallthru
        _
      // Predicated region
      $region69: #{_lstm_lm_forward_impl.2} parent=47 // pred_check
        %p1787 = pneg %p233
      $region70: #{_lstm_lm_forward_impl.2} parent=47 // pred_check_branch
        %1789 = sbr.rel (%p1787) target = $region72
      $region71: #{_lstm_lm_forward_impl.2} parent=47 // pred_region
        %p1790 = scmp.lt.s32.totalorder %s25, 0
        %s1791 = scalar_select %p1790, %s25, 0
        %s1792 = smul.addr %s1791, 8
        %s1793 = scalar_lea.vmem %s8, %s1792
      $region72: #{_lstm_lm_forward_impl.2} parent=47 // pred_fallthru
        _
      // Predicated region
      $region73: #{_lstm_lm_forward_impl.2} parent=47 // pred_check
        %p1794 = pneg %p259
      $region74: #{_lstm_lm_forward_impl.2} parent=47 // pred_check_branch
        %1796 = sbr.rel (%p1794) target = $region76
      $region75: #{_lstm_lm_forward_impl.2} parent=47 // pred_region
        %p1797 = scmp.lt.s32.totalorder %s25, 0
        %s1798 = scalar_select %p1797, %s25, 0
        %s1799 = smul.addr %s1798, 8
        %s1800 = scalar_lea.vmem %s9, %s1799
      $region76: #{_lstm_lm_forward_impl.2} parent=47 // pred_fallthru
        _
    $region48: #{_lstm_lm_forward_impl.2} parent=5 // pred_fallthru
      _
    %p1801 = scmp.le.s32.totalorder 2, %s16
    // Predicated region
    $region77: #{_lstm_lm_forward_impl.2} parent=5 // pred_check
      %p1802 = pneg %p1801
    $region78: #{_lstm_lm_forward_impl.2} parent=5 // pred_check_branch
      %1804 = sbr.rel (%p1802) target = $region80
    $region79: #{_lstm_lm_forward_impl.2} parent=5 // pred_region
      %s1805 = ssub.s32 %s16, 2
      // Predicated region
      $region81: #{_lstm_lm_forward_impl.2} parent=79 // pred_check
        %p1806 = pneg %p213
      $region82: #{_lstm_lm_forward_impl.2} parent=79 // pred_check_branch
        %1808 = sbr.rel (%p1806) target = $region84
      $region83: #{_lstm_lm_forward_impl.2} parent=79 // pred_region
        %s1809 = smul.u32 4, %s28
        %p1810 = scmp.lt.s32.totalorder %s1809, 7
        %s1811 = scalar_select %p1810, %s1809, 7
        %p1812 = scmp.lt.s32.totalorder %s27, 0
        %s1813 = scalar_select %p1812, %s27, 0
        %s1814 = sadd.s32 %s1813, %s1811
        %s1815 = smul.addr %s1814, 8
        %s1816 = scalar_lea.vmem %s7, %s1815
      $region84: #{_lstm_lm_forward_impl.2} parent=79 // pred_fallthru
        _
    $region80: #{_lstm_lm_forward_impl.2} parent=5 // pred_fallthru
      _
  $region6: #{_lstm_lm_forward_impl.2} parent=0 // loop_footer
    %s20 = sadd.s32 1, %s16
  $region7: #{_lstm_lm_forward_impl.2} parent=0 // loop_footer_branch
    %15 = sbr.rel target = $region3
  $region8: #{_lstm_lm_forward_impl.2} parent=0 // loop_exit
    _

</llo_original>
